<compile_context>
chip_gen: v7x
topology: tpu7x:2x2x1
jax: 0.10.0
libtpu: 0.0.40
codegen_flags: <defaults>
</compile_context>

<pallas_src>
import math
from functools import partial

import jax
import jax.numpy as jnp
from jax import lax
from jax.experimental import pallas as pl
from jax.experimental.pallas import tpu as pltpu

BF16 = jnp.bfloat16
F32 = jnp.float32


# ----------------------------- in-kernel helpers -----------------------------

def _layer_norm(x, g, b, eps=1e-5):
    # f32 math; eps matches nn.LayerNorm default. g/b are pre-broadcast to (S, D).
    mu = jnp.mean(x, axis=-1, keepdims=True)
    var = jnp.mean((x - mu) ** 2, axis=-1, keepdims=True)
    return (x - mu) * lax.rsqrt(var + eps) * g + b


def _bcast_heads(x, num_heads):
    # One bf16 head-batched copy of the activations per attention block (reused by Q, K, V).
    return jnp.broadcast_to(x.astype(BF16), (num_heads,) + x.shape)


def _project(xb, w_h, b_h):
    # xb: (H, S, D) bf16, w_h: (H, D, dk) bf16 -> (H, S, dk) f32 (head-batched MXU contraction)
    return jnp.einsum('hsd,hde->hse', xb, w_h, preferred_element_type=F32) + b_h


def _attention_core(q_h, k_h, v_h, wo_h, bo, mask):
    """Head-batched scaled-dot-product attention + output projection.

    1/sqrt(dk) is already folded into the Q weights.  mask: bool (1, Sq, Sk), True = attend.
    Output projection = batched per-head dot + leading-axis sum == concat(ctx_h) @ Wo.
    """
    s = jnp.einsum('hqd,hkd->hqk', q_h.astype(BF16), k_h.astype(BF16),
                   preferred_element_type=F32)
    if mask is not None:
        s = jnp.where(mask, s, -1e9)              # masked_fill(mask == 0, -1e9) semantics
    m = jnp.max(s, axis=-1, keepdims=True)        # softmax in f32
    e = jnp.exp(s - m)
    p = e * pl.reciprocal(jnp.sum(e, axis=-1, keepdims=True), approx=True)
    ctx = jnp.einsum('hqk,hkd->hqd', p.astype(BF16), v_h.astype(BF16),
                     preferred_element_type=F32)
    out_h = jnp.einsum('hqd,hdm->hqm', ctx.astype(BF16), wo_h,
                       preferred_element_type=F32)
    # TODO(synk): for large H use the concat form (Sq,H*dk)@(H*dk,D) so the head reduction runs
    # on the MXU instead of the VALU; neutral for tiny H.
    return jnp.sum(out_h, axis=0) + bo


def _self_attention(xn, wq, wk, wv, bq, bk, bv, wo, bo, mask, num_heads):
    xb = _bcast_heads(xn, num_heads)
    q = _project(xb, wq, bq)
    k = _project(xb, wk, bk)
    v = _project(xb, wv, bv)
    return _attention_core(q, k, v, wo, bo, mask)


def _ffn(x, w1, b1, w2, b2):
    # PositionwiseFeedForward assumed Linear->ReLU->Linear (dropout = identity in eval).
    h = jnp.maximum(jnp.dot(x.astype(BF16), w1, preferred_element_type=F32) + b1, 0.0)
    return jnp.dot(h.astype(BF16), w2, preferred_element_type=F32) + b2


# ------------------------------- Pallas kernels --------------------------------

def encoder_stack_kernel(x_ref,
                         wq_ref, wk_ref, wv_ref, bq_ref, bk_ref, bv_ref, wo_ref, bo_ref,
                         g1_ref, b1_ref, g2_ref, b2_ref,
                         wff1_ref, bff1_ref, wff2_ref, bff2_ref,
                         out_ref, *, num_layers, num_heads):
    x = x_ref[0]                                   # (S, D) f32
    s_len, d_model = x.shape
    dk = d_model // num_heads
    d_ff = wff1_ref.shape[-1]

    wq = wq_ref[...]; wk = wk_ref[...]; wv = wv_ref[...]; wo = wo_ref[...]
    wff1 = wff1_ref[...]; wff2 = wff2_ref[...]

    # Hoisted broadcasts (JAX does not CSE broadcast_in_dim; fori_loop body re-runs each iter).
    g1 = jnp.broadcast_to(g1_ref[...], (s_len, d_model))
    b1 = jnp.broadcast_to(b1_ref[...], (s_len, d_model))
    g2 = jnp.broadcast_to(g2_ref[...], (s_len, d_model))
    b2 = jnp.broadcast_to(b2_ref[...], (s_len, d_model))
    bq = jnp.broadcast_to(bq_ref[...], (num_heads, s_len, dk))
    bk = jnp.broadcast_to(bk_ref[...], (num_heads, s_len, dk))
    bv = jnp.broadcast_to(bv_ref[...], (num_heads, s_len, dk))
    bo = jnp.broadcast_to(bo_ref[...], (s_len, d_model))
    bff1 = jnp.broadcast_to(bff1_ref[...], (s_len, d_ff))
    bff2 = jnp.broadcast_to(bff2_ref[...], (s_len, d_model))

    def layer(_, x):
        # src/padding mask is all-ones for this configuration -> unmasked self-attention.
        xn1 = _layer_norm(x, g1, b1)
        x = x + _self_attention(xn1, wq, wk, wv, bq, bk, bv, wo, bo, None, num_heads)
        xn2 = _layer_norm(x, g2, b2)
        x = x + _ffn(xn2, wff1, bff1, wff2, bff2)
        return x

    x = lax.fori_loop(0, num_layers, layer, x)     # single shared EncoderLayer (per module)
    # Encoder output only feeds the bf16 cross-attn K/V projection -> write back in bf16.
    out_ref[0] = x.astype(BF16)


def decoder_stack_kernel(x_ref, enc_ref,
                         wq1_ref, wk1_ref, wv1_ref, bq1_ref, bk1_ref, bv1_ref, wo1_ref, bo1_ref,
                         wq2_ref, wk2_ref, wv2_ref, bq2_ref, bk2_ref, bv2_ref, wo2_ref, bo2_ref,
                         g1_ref, be1_ref, g2_ref, be2_ref, g3_ref, be3_ref,
                         wff1_ref, bff1_ref, wff2_ref, bff2_ref,
                         wout_ref, bout_ref,
                         out_ref, x_scratch, *, num_layers, num_heads):
    # The layer stack runs once per batch element (vocab-tile index 0) into x_scratch; every
    # vocab grid step then streams one lane-dense (D, TN) tile of the output Linear.
    @pl.when(pl.program_id(1) == 0)
    def _():
        x = x_ref[0]                               # (S, D)  f32
        enc = enc_ref[0]                           # (Se, D) bf16
        s_len, d_model = x.shape
        se_len = enc.shape[0]
        dk = d_model // num_heads
        d_ff = wff1_ref.shape[-1]

        wq1 = wq1_ref[...]; wk1 = wk1_ref[...]; wv1 = wv1_ref[...]; wo1 = wo1_ref[...]
        wq2 = wq2_ref[...]; wo2 = wo2_ref[...]
        wff1 = wff1_ref[...]; wff2 = wff2_ref[...]

        # Hoisted broadcasts (out of the layer loop).
        g1 = jnp.broadcast_to(g1_ref[...], (s_len, d_model))
        be1 = jnp.broadcast_to(be1_ref[...], (s_len, d_model))
        g2 = jnp.broadcast_to(g2_ref[...], (s_len, d_model))
        be2 = jnp.broadcast_to(be2_ref[...], (s_len, d_model))
        g3 = jnp.broadcast_to(g3_ref[...], (s_len, d_model))
        be3 = jnp.broadcast_to(be3_ref[...], (s_len, d_model))
        bq1 = jnp.broadcast_to(bq1_ref[...], (num_heads, s_len, dk))
        bk1 = jnp.broadcast_to(bk1_ref[...], (num_heads, s_len, dk))
        bv1 = jnp.broadcast_to(bv1_ref[...], (num_heads, s_len, dk))
        bo1 = jnp.broadcast_to(bo1_ref[...], (s_len, d_model))
        bq2 = jnp.broadcast_to(bq2_ref[...], (num_heads, s_len, dk))
        bo2 = jnp.broadcast_to(bo2_ref[...], (s_len, d_model))
        bff1 = jnp.broadcast_to(bff1_ref[...], (s_len, d_ff))
        bff2 = jnp.broadcast_to(bff2_ref[...], (s_len, d_model))

        # Causal target mask built in-kernel (no HBM mask traffic); True = attend.
        row = lax.broadcasted_iota(jnp.int32, (s_len, s_len), 0)
        col = lax.broadcasted_iota(jnp.int32, (s_len, s_len), 1)
        causal = (row >= col)[None, :, :]
        # TODO(synk): non-trivial src/padding masks would arrive as per-row valid lengths via
        # num_scalar_prefetch and be rebuilt in-kernel; all-ones here, so elided.

        # Cross-attention K/V depend only on enc + shared weights -> computed once, hoisted.
        encb = jnp.broadcast_to(enc, (num_heads, se_len, d_model))     # bf16 already
        k2 = (jnp.einsum('hsd,hde->hse', encb, wk2_ref[...],
                         preferred_element_type=F32) + bk2_ref[...]).astype(BF16)
        v2 = (jnp.einsum('hsd,hde->hse', encb, wv2_ref[...],
                         preferred_element_type=F32) + bv2_ref[...]).astype(BF16)

        def layer(_, x):
            # self-attention (pre_norm, causal)
            xn1 = _layer_norm(x, g1, be1)
            x = x + _self_attention(xn1, wq1, wk1, wv1, bq1, bk1, bv1, wo1, bo1,
                                    causal, num_heads)
            # cross-attention to the encoder output (src_mask all-ones -> unmasked)
            xn2 = _layer_norm(x, g2, be2)
            q2 = _project(_bcast_heads(xn2, num_heads), wq2, bq2)
            x = x + _attention_core(q2, k2, v2, wo2, bo2, None)
            # position-wise feed-forward
            xn3 = _layer_norm(x, g3, be3)
            x = x + _ffn(xn3, wff1, bff1, wff2, bff2)
            return x

        x = lax.fori_loop(0, num_layers, layer, x)  # single shared DecodeLayer (per module)
        x_scratch[...] = x.astype(BF16)

    # Fused output Linear: one lane-dense 128-multiple vocab tile per grid step (unmasked vst).
    out_ref[0] = (jnp.dot(x_scratch[...], wout_ref[...],
                          preferred_element_type=F32) + bout_ref[...])


# ------------------------------ wrappers / glue --------------------------------

def _const_index_map(ndim):
    zeros = (0,) * ndim
    return lambda *_: zeros


def _weight_spec(arr, buffered):
    # Constant block index across the whole grid -> single resident buffer (no double-buffer
    # VMEM waste).  Fallback path keeps default buffering if Buffered(1) is unsupported.
    imap = _const_index_map(arr.ndim)
    if buffered:
        return pl.BlockSpec(arr.shape, imap, pipeline_mode=pl.Buffered(1))
    return pl.BlockSpec(arr.shape, imap)


def _vmem_limit_bytes(arrays, out_bytes):
    # Explicit VMEM budget: double-buffered operands + output + slack, clamped to 75% of the
    # physical VMEM of the current generation (64 MiB v7x, 128 MiB v5e/v6e).
    need = 2 * sum(int(a.size) * a.dtype.itemsize for a in arrays) + 2 * int(out_bytes)
    need += 8 << 20
    try:
        cap = int(pltpu.get_tpu_info().vmem_capacity_bytes)
    except Exception:
        cap = 64 << 20
    return int(min(max(need, 32 << 20), (cap * 3) // 4))


def run_encoder(x, enc_ops, num_layers, num_heads, buffered):
    B, S, D = x.shape
    in_specs = ([pl.BlockSpec((1, S, D), lambda b: (b, 0, 0))]
                + [_weight_spec(w, buffered) for w in enc_ops])
    return pl.pallas_call(
        partial(encoder_stack_kernel, num_layers=num_layers, num_heads=num_heads),
        out_shape=jax.ShapeDtypeStruct((B, S, D), BF16),
        grid_spec=pltpu.PrefetchScalarGridSpec(
            num_scalar_prefetch=0, grid=(B,),
            in_specs=in_specs,
            out_specs=pl.BlockSpec((1, S, D), lambda b: (b, 0, 0))),
        compiler_params=pltpu.CompilerParams(
            dimension_semantics=("parallel",),
            vmem_limit_bytes=_vmem_limit_bytes([x] + list(enc_ops), B * S * D * 2)),
    )(x, *enc_ops)


def run_decoder(x, enc_out, dec_ops, num_layers, num_heads, buffered):
    B, S, D = x.shape
    Se = enc_out.shape[1]
    layer_ops, wout, bout = dec_ops[:-2], dec_ops[-2], dec_ops[-1]
    Vp = wout.shape[-1]                            # padded vocab (multiple of 128)
    tn = 128                                       # largest 128-multiple tile (<=512) dividing Vp
    for cand in (512, 384, 256, 128):
        if Vp % cand == 0:
            tn = cand
            break
    n_vt = Vp // tn

    in_specs = ([pl.BlockSpec((1, S, D), lambda b, v: (b, 0, 0)),
                 pl.BlockSpec((1, Se, D), lambda b, v: (b, 0, 0))]
                + [_weight_spec(w, buffered) for w in layer_ops]
                + [pl.BlockSpec((D, tn), lambda b, v: (0, v)),    # wout: streamed per vocab tile
                   pl.BlockSpec((1, tn), lambda b, v: (0, v))])   # bout

    return pl.pallas_call(
        partial(decoder_stack_kernel, num_layers=num_layers, num_heads=num_heads),
        out_shape=jax.ShapeDtypeStruct((B, S, Vp), F32),
        grid_spec=pltpu.PrefetchScalarGridSpec(
            num_scalar_prefetch=0, grid=(B, n_vt),
            in_specs=in_specs,
            out_specs=pl.BlockSpec((1, S, tn), lambda b, v: (b, 0, v)),
            scratch_shapes=[pltpu.VMEM((S, D), BF16)]),
        compiler_params=pltpu.CompilerParams(
            dimension_semantics=("parallel", "arbitrary"),
            vmem_limit_bytes=_vmem_limit_bytes([x, enc_out] + list(dec_ops), B * S * Vp * 4)),
    )(x, enc_out, *dec_ops)


def sinusoidal_pe(max_seq_len, d_model):
    pos = jnp.arange(max_seq_len, dtype=F32)[:, None]
    i = jnp.arange(d_model, dtype=F32)[None, :]
    angle = pos / jnp.power(10000.0, (2.0 * jnp.floor(i / 2.0)) / d_model)
    return jnp.where((jnp.arange(d_model) % 2)[None, :] == 0,
                     jnp.sin(angle), jnp.cos(angle)).astype(F32)


def embed_and_pe(tokens, table, pe):
    # TODO(synk): SinusoidalPositionalEmbedding source not given; assumed x_emb + pe
    # without sqrt(d_model) scaling.
    S = tokens.shape[1]
    return table[tokens] + pe[:S][None]


# wrapper-side head-layout plumbing (the kernel never reshapes / transposes weights)
def _head_w(w, num_heads):                 # (D, E) -> (H, D, E//H)
    d, e = w.shape
    return jnp.transpose(w.reshape(d, num_heads, e // num_heads), (1, 0, 2))


def _head_b(b, num_heads):                 # (1, E) -> (H, 1, E//H)
    return b.reshape(num_heads, -1)[:, None, :]


def init_transformer_params(key, src_vocab, tgt_vocab, max_seq_len, d_model,
                            d_ff, num_heads, padding_idx=0):
    ks = iter(jax.random.split(key, 64))

    def lin(din, dout):
        return jax.random.normal(next(ks), (din, dout), F32) * 0.02

    def bias(d):
        return jnp.zeros((1, d), F32)

    def mha_ops():
        wq, wk, wv, wo = (lin(d_model, d_model) for _ in range(4))
        bq, bk, bv, bo = (bias(d_model) for _ in range(4))
        scale = 1.0 / math.sqrt(d_model // num_heads)
        wq = wq * scale                            # fold 1/sqrt(dk) into the Q projection
        bq = bq * scale
        return [_head_w(wq, num_heads).astype(BF16),
                _head_w(wk, num_heads).astype(BF16),
                _head_w(wv, num_heads).astype(BF16),
                _head_b(bq, num_heads), _head_b(bk, num_heads), _head_b(bv, num_heads),
                wo.reshape(num_heads, d_model // num_heads, d_model).astype(BF16),
                bo]

    def ln_ops():
        return [jnp.ones((1, d_model), F32), jnp.zeros((1, d_model), F32)]

    def ffn_ops():
        return [lin(d_model, d_ff).astype(BF16), bias(d_ff),
                lin(d_ff, d_model).astype(BF16), bias(d_model)]

    params = {}
    src_emb = jax.random.normal(next(ks), (src_vocab, d_model), F32) * 0.02
    tgt_emb = jax.random.normal(next(ks), (tgt_vocab, d_model), F32) * 0.02
    params['src_embed'] = src_emb.at[padding_idx].set(0.0)   # nn.Embedding(padding_idx=...)
    params['tgt_embed'] = tgt_emb.at[padding_idx].set(0.0)
    params['pe'] = sinusoidal_pe(max_seq_len, d_model)

    # Encoder stack (single shared EncoderLayer, as in the module)
    params['enc_ops'] = mha_ops() + ln_ops() + ln_ops() + ffn_ops()

    # Decoder stack (single shared DecodeLayer) + output Linear, vocab padded to 128 lanes
    vp = ((tgt_vocab + 127) // 128) * 128
    w_out = lin(d_model, tgt_vocab)
    b_out = bias(tgt_vocab)
    w_out_p = jnp.zeros((d_model, vp), F32).at[:, :tgt_vocab].set(w_out).astype(BF16)
    b_out_p = jnp.zeros((1, vp), F32).at[:, :tgt_vocab].set(b_out)
    params['dec_ops'] = (mha_ops() + mha_ops()
                         + ln_ops() + ln_ops() + ln_ops()
                         + ffn_ops() + [w_out_p, b_out_p])
    return params


def transformer_forward(src_tokens, tgt_tokens, params, num_layers, num_heads, tgt_vocab,
                        buffered_weights=True):
    # Encoder: embedding + positional encoding (glue), then fused layer-stack kernel (bf16 out).
    src_x = embed_and_pe(src_tokens, params['src_embed'], params['pe'])
    enc_out = run_encoder(src_x, params['enc_ops'], num_layers, num_heads, buffered_weights)
    # Decoder + output Linear (fused; vocab streamed in lane-dense tiles).
    # TODO(synk): the reference Transformer.forward passes src_x to the decoder and tgt_x as
    # encode_x (shape-incompatible as written); we implement the standard flow
    # (tgt tokens -> decoder, encoder output -> cross attention).
    tgt_x = embed_and_pe(tgt_tokens, params['tgt_embed'], params['pe'])
    logits_p = run_decoder(tgt_x, enc_out, params['dec_ops'], num_layers, num_heads,
                           buffered_weights)
    return logits_p[..., :tgt_vocab]


# ----------------------------------- main --------------------------------------

if __name__ == "__main__":
    B, S = 2, 8
    D, F, H = 32, 64, 4
    SRC_VOCAB = TGT_VOCAB = 100
    MAX_SEQ, NUM_LAYERS, PAD = 16, 2, 0

    key = jax.random.PRNGKey(0)
    k_par, k_src, k_tgt = jax.random.split(key, 3)
    params = init_transformer_params(k_par, SRC_VOCAB, TGT_VOCAB, MAX_SEQ, D, F, H, PAD)

    # token ids in [1, vocab): no padded positions, so the src/padding masks are all-ones and
    # the decoder self-attention mask is the causal mask built in-kernel (no mask arrays DMA'd).
    src_tokens = jax.random.randint(k_src, (B, S), 1, SRC_VOCAB, dtype=jnp.int32)
    tgt_tokens = jax.random.randint(k_tgt, (B, S), 1, TGT_VOCAB, dtype=jnp.int32)

    try:
        out = transformer_forward(src_tokens, tgt_tokens, params, NUM_LAYERS, H, TGT_VOCAB,
                                  buffered_weights=True)
        out = jax.block_until_ready(out)
    except Exception:
        # pipeline_mode=pl.Buffered(1) unavailable on this jax build -> default double-buffering
        out = transformer_forward(src_tokens, tgt_tokens, params, NUM_LAYERS, H, TGT_VOCAB,
                                  buffered_weights=False)
        out = jax.block_until_ready(out)

    assert out.shape == (B, S, TGT_VOCAB) and bool(jnp.all(jnp.isfinite(out)))
    print("KERNEL_OK")
</pallas_src>

<mosaic_0001>
module attributes {stable_mosaic.version = 11 : i64} {
  func.func @encoder_stack_kernel(%arg0: i32, %arg1: memref<1x8x32xf32, #tpu.memory_space<vmem>>, %arg2: memref<4x32x8xbf16, #tpu.memory_space<vmem>>, %arg3: memref<4x32x8xbf16, #tpu.memory_space<vmem>>, %arg4: memref<4x32x8xbf16, #tpu.memory_space<vmem>>, %arg5: memref<4x1x8xf32, #tpu.memory_space<vmem>>, %arg6: memref<4x1x8xf32, #tpu.memory_space<vmem>>, %arg7: memref<4x1x8xf32, #tpu.memory_space<vmem>>, %arg8: memref<4x8x32xbf16, #tpu.memory_space<vmem>>, %arg9: memref<1x32xf32, #tpu.memory_space<vmem>>, %arg10: memref<1x32xf32, #tpu.memory_space<vmem>>, %arg11: memref<1x32xf32, #tpu.memory_space<vmem>>, %arg12: memref<1x32xf32, #tpu.memory_space<vmem>>, %arg13: memref<1x32xf32, #tpu.memory_space<vmem>>, %arg14: memref<32x64xbf16, #tpu.memory_space<vmem>>, %arg15: memref<1x64xf32, #tpu.memory_space<vmem>>, %arg16: memref<64x32xbf16, #tpu.memory_space<vmem>>, %arg17: memref<1x32xf32, #tpu.memory_space<vmem>>, %arg18: memref<1x8x32xbf16, #tpu.memory_space<vmem>>) attributes {dimension_semantics = [#tpu.dimension_semantics<parallel>], iteration_bounds = array<i64: 2>, scalar_prefetch = 0 : i64, scratch_operands = 0 : i64, tpu.core_type = #tpu.core_type<tc>, window_params = [{transform_indices = @transform_0, window_bounds = array<i64: 1, 8, 32>}, {pipeline_mode = #tpu.pipeline_mode<synchronous>, transform_indices = @transform_1, window_bounds = array<i64: 4, 32, 8>}, {pipeline_mode = #tpu.pipeline_mode<synchronous>, transform_indices = @transform_2, window_bounds = array<i64: 4, 32, 8>}, {pipeline_mode = #tpu.pipeline_mode<synchronous>, transform_indices = @transform_3, window_bounds = array<i64: 4, 32, 8>}, {pipeline_mode = #tpu.pipeline_mode<synchronous>, transform_indices = @transform_4, window_bounds = array<i64: 4, 1, 8>}, {pipeline_mode = #tpu.pipeline_mode<synchronous>, transform_indices = @transform_5, window_bounds = array<i64: 4, 1, 8>}, {pipeline_mode = #tpu.pipeline_mode<synchronous>, transform_indices = @transform_6, window_bounds = array<i64: 4, 1, 8>}, {pipeline_mode = #tpu.pipeline_mode<synchronous>, transform_indices = @transform_7, window_bounds = array<i64: 4, 8, 32>}, {pipeline_mode = #tpu.pipeline_mode<synchronous>, transform_indices = @transform_8, window_bounds = array<i64: 1, 32>}, {pipeline_mode = #tpu.pipeline_mode<synchronous>, transform_indices = @transform_9, window_bounds = array<i64: 1, 32>}, {pipeline_mode = #tpu.pipeline_mode<synchronous>, transform_indices = @transform_10, window_bounds = array<i64: 1, 32>}, {pipeline_mode = #tpu.pipeline_mode<synchronous>, transform_indices = @transform_11, window_bounds = array<i64: 1, 32>}, {pipeline_mode = #tpu.pipeline_mode<synchronous>, transform_indices = @transform_12, window_bounds = array<i64: 1, 32>}, {pipeline_mode = #tpu.pipeline_mode<synchronous>, transform_indices = @transform_13, window_bounds = array<i64: 32, 64>}, {pipeline_mode = #tpu.pipeline_mode<synchronous>, transform_indices = @transform_14, window_bounds = array<i64: 1, 64>}, {pipeline_mode = #tpu.pipeline_mode<synchronous>, transform_indices = @transform_15, window_bounds = array<i64: 64, 32>}, {pipeline_mode = #tpu.pipeline_mode<synchronous>, transform_indices = @transform_16, window_bounds = array<i64: 1, 32>}, {transform_indices = @transform_17, window_bounds = array<i64: 1, 8, 32>}]} {
    %c0 = arith.constant 0 : index
    %c0_0 = arith.constant 0 : index
    %c0_1 = arith.constant 0 : index
    %0 = vector.load %arg1[%c0, %c0_0, %c0_1] : memref<1x8x32xf32, #tpu.memory_space<vmem>>, vector<1x8x32xf32>
    %1 = vector.shape_cast %0 : vector<1x8x32xf32> to vector<8x32xf32>
    %c0_2 = arith.constant 0 : index
    %c0_3 = arith.constant 0 : index
    %c0_4 = arith.constant 0 : index
    %2 = vector.load %arg2[%c0_2, %c0_3, %c0_4] : memref<4x32x8xbf16, #tpu.memory_space<vmem>>, vector<4x32x8xbf16>
    %c0_5 = arith.constant 0 : index
    %c0_6 = arith.constant 0 : index
    %c0_7 = arith.constant 0 : index
    %3 = vector.load %arg3[%c0_5, %c0_6, %c0_7] : memref<4x32x8xbf16, #tpu.memory_space<vmem>>, vector<4x32x8xbf16>
    %c0_8 = arith.constant 0 : index
    %c0_9 = arith.constant 0 : index
    %c0_10 = arith.constant 0 : index
    %4 = vector.load %arg4[%c0_8, %c0_9, %c0_10] : memref<4x32x8xbf16, #tpu.memory_space<vmem>>, vector<4x32x8xbf16>
    %c0_11 = arith.constant 0 : index
    %c0_12 = arith.constant 0 : index
    %c0_13 = arith.constant 0 : index
    %5 = vector.load %arg8[%c0_11, %c0_12, %c0_13] : memref<4x8x32xbf16, #tpu.memory_space<vmem>>, vector<4x8x32xbf16>
    %c0_14 = arith.constant 0 : index
    %c0_15 = arith.constant 0 : index
    %6 = vector.load %arg14[%c0_14, %c0_15] : memref<32x64xbf16, #tpu.memory_space<vmem>>, vector<32x64xbf16>
    %c0_16 = arith.constant 0 : index
    %c0_17 = arith.constant 0 : index
    %7 = vector.load %arg16[%c0_16, %c0_17] : memref<64x32xbf16, #tpu.memory_space<vmem>>, vector<64x32xbf16>
    %c0_18 = arith.constant 0 : index
    %c0_19 = arith.constant 0 : index
    %8 = vector.load %arg10[%c0_18, %c0_19] : memref<1x32xf32, #tpu.memory_space<vmem>>, vector<1x32xf32>
    %9 = vector.shape_cast %8 : vector<1x32xf32> to vector<1x32xf32>
    %10 = vector.broadcast %9 : vector<1x32xf32> to vector<8x32xf32>
    %c0_20 = arith.constant 0 : index
    %c0_21 = arith.constant 0 : index
    %11 = vector.load %arg11[%c0_20, %c0_21] : memref<1x32xf32, #tpu.memory_space<vmem>>, vector<1x32xf32>
    %12 = vector.shape_cast %11 : vector<1x32xf32> to vector<1x32xf32>
    %13 = vector.broadcast %12 : vector<1x32xf32> to vector<8x32xf32>
    %c0_22 = arith.constant 0 : index
    %c0_23 = arith.constant 0 : index
    %14 = vector.load %arg12[%c0_22, %c0_23] : memref<1x32xf32, #tpu.memory_space<vmem>>, vector<1x32xf32>
    %15 = vector.shape_cast %14 : vector<1x32xf32> to vector<1x32xf32>
    %16 = vector.broadcast %15 : vector<1x32xf32> to vector<8x32xf32>
    %c0_24 = arith.constant 0 : index
    %c0_25 = arith.constant 0 : index
    %17 = vector.load %arg13[%c0_24, %c0_25] : memref<1x32xf32, #tpu.memory_space<vmem>>, vector<1x32xf32>
    %18 = vector.shape_cast %17 : vector<1x32xf32> to vector<1x32xf32>
    %19 = vector.broadcast %18 : vector<1x32xf32> to vector<8x32xf32>
    %c0_26 = arith.constant 0 : index
    %c0_27 = arith.constant 0 : index
    %c0_28 = arith.constant 0 : index
    %20 = vector.load %arg5[%c0_26, %c0_27, %c0_28] : memref<4x1x8xf32, #tpu.memory_space<vmem>>, vector<4x1x8xf32>
    %21 = vector.shape_cast %20 : vector<4x1x8xf32> to vector<4x1x8xf32>
    %22 = vector.broadcast %21 : vector<4x1x8xf32> to vector<4x8x8xf32>
    %c0_29 = arith.constant 0 : index
    %c0_30 = arith.constant 0 : index
    %c0_31 = arith.constant 0 : index
    %23 = vector.load %arg6[%c0_29, %c0_30, %c0_31] : memref<4x1x8xf32, #tpu.memory_space<vmem>>, vector<4x1x8xf32>
    %24 = vector.shape_cast %23 : vector<4x1x8xf32> to vector<4x1x8xf32>
    %25 = vector.broadcast %24 : vector<4x1x8xf32> to vector<4x8x8xf32>
    %c0_32 = arith.constant 0 : index
    %c0_33 = arith.constant 0 : index
    %c0_34 = arith.constant 0 : index
    %26 = vector.load %arg7[%c0_32, %c0_33, %c0_34] : memref<4x1x8xf32, #tpu.memory_space<vmem>>, vector<4x1x8xf32>
    %27 = vector.shape_cast %26 : vector<4x1x8xf32> to vector<4x1x8xf32>
    %28 = vector.broadcast %27 : vector<4x1x8xf32> to vector<4x8x8xf32>
    %c0_35 = arith.constant 0 : index
    %c0_36 = arith.constant 0 : index
    %29 = vector.load %arg9[%c0_35, %c0_36] : memref<1x32xf32, #tpu.memory_space<vmem>>, vector<1x32xf32>
    %30 = vector.shape_cast %29 : vector<1x32xf32> to vector<1x32xf32>
    %31 = vector.broadcast %30 : vector<1x32xf32> to vector<8x32xf32>
    %c0_37 = arith.constant 0 : index
    %c0_38 = arith.constant 0 : index
    %32 = vector.load %arg15[%c0_37, %c0_38] : memref<1x64xf32, #tpu.memory_space<vmem>>, vector<1x64xf32>
    %33 = vector.shape_cast %32 : vector<1x64xf32> to vector<1x64xf32>
    %34 = vector.broadcast %33 : vector<1x64xf32> to vector<8x64xf32>
    %c0_39 = arith.constant 0 : index
    %c0_40 = arith.constant 0 : index
    %35 = vector.load %arg17[%c0_39, %c0_40] : memref<1x32xf32, #tpu.memory_space<vmem>>, vector<1x32xf32>
    %36 = vector.shape_cast %35 : vector<1x32xf32> to vector<1x32xf32>
    %37 = vector.broadcast %36 : vector<1x32xf32> to vector<8x32xf32>
    %c0_i32 = arith.constant 0 : i32
    %c2_i32 = arith.constant 2 : i32
    %38 = arith.addi %c0_i32, %c2_i32 : i32
    %c1_i32 = arith.constant 1 : i32
    %39 = scf.for %arg19 = %c0_i32 to %38 step %c1_i32 iter_args(%arg20 = %1) -> (vector<8x32xf32>)  : i32 {
      %cst = arith.constant dense<0.000000e+00> : vector<8xf32>
      %44 = vector.multi_reduction <add>, %arg20, %cst [1] : vector<8x32xf32> to vector<8xf32>
      %45 = vector.shape_cast %44 : vector<8xf32> to vector<8x1xf32>
      %cst_44 = arith.constant 3.200000e+01 : f32
      %46 = vector.broadcast %cst_44 : f32 to vector<8x1xf32>
      %47 = arith.divf %45, %46 : vector<8x1xf32>
      %48 = vector.broadcast %47 : vector<8x1xf32> to vector<8x32xf32>
      %49 = arith.subf %arg20, %48 : vector<8x32xf32>
      %50 = arith.mulf %49, %49 : vector<8x32xf32>
      %cst_45 = arith.constant dense<0.000000e+00> : vector<8xf32>
      %51 = vector.multi_reduction <add>, %50, %cst_45 [1] : vector<8x32xf32> to vector<8xf32>
      %52 = vector.shape_cast %51 : vector<8xf32> to vector<8x1xf32>
      %cst_46 = arith.constant 3.200000e+01 : f32
      %53 = vector.broadcast %cst_46 : f32 to vector<8x1xf32>
      %54 = arith.divf %52, %53 : vector<8x1xf32>
      %55 = vector.broadcast %47 : vector<8x1xf32> to vector<8x32xf32>
      %56 = arith.subf %arg20, %55 : vector<8x32xf32>
      %cst_47 = arith.constant 9.99999974E-6 : f32
      %57 = vector.broadcast %cst_47 : f32 to vector<8x1xf32>
      %58 = arith.addf %54, %57 : vector<8x1xf32>
      %59 = math.rsqrt %58 : vector<8x1xf32>
      %60 = vector.broadcast %59 : vector<8x1xf32> to vector<8x32xf32>
      %61 = arith.mulf %56, %60 : vector<8x32xf32>
      %62 = arith.mulf %61, %10 : vector<8x32xf32>
      %63 = arith.addf %62, %13 : vector<8x32xf32>
      %64 = arith.truncf %63 : vector<8x32xf32> to vector<8x32xbf16>
      %65 = vector.shape_cast %64 : vector<8x32xbf16> to vector<1x8x32xbf16>
      %66 = vector.broadcast %65 : vector<1x8x32xbf16> to vector<4x8x32xbf16>
      "tpu.trace_start"() <{level = 10 : i32, message = "hsd,hde->hse"}> : () -> ()
      %cst_48 = arith.constant dense<0.000000e+00> : vector<4x8x8xf32>
      %67 = tpu.matmul %66, %2, %cst_48 {dimension_numbers = #tpu.dot_dimension_numbers<[2], [1], [1], [2], [0, 0, 0, 1, 1, 2], [0], [0]>} : vector<4x8x32xbf16>, vector<4x32x8xbf16>, vector<4x8x8xf32> -> vector<4x8x8xf32>
      "tpu.trace_stop"() : () -> ()
      %68 = arith.addf %67, %22 : vector<4x8x8xf32>
      "tpu.trace_start"() <{level = 10 : i32, message = "hsd,hde->hse"}> : () -> ()
      %cst_49 = arith.constant dense<0.000000e+00> : vector<4x8x8xf32>
      %69 = tpu.matmul %66, %3, %cst_49 {dimension_numbers = #tpu.dot_dimension_numbers<[2], [1], [1], [2], [0, 0, 0, 1, 1, 2], [0], [0]>} : vector<4x8x32xbf16>, vector<4x32x8xbf16>, vector<4x8x8xf32> -> vector<4x8x8xf32>
      "tpu.trace_stop"() : () -> ()
      %70 = arith.addf %69, %25 : vector<4x8x8xf32>
      "tpu.trace_start"() <{level = 10 : i32, message = "hsd,hde->hse"}> : () -> ()
      %cst_50 = arith.constant dense<0.000000e+00> : vector<4x8x8xf32>
      %71 = tpu.matmul %66, %4, %cst_50 {dimension_numbers = #tpu.dot_dimension_numbers<[2], [1], [1], [2], [0, 0, 0, 1, 1, 2], [0], [0]>} : vector<4x8x32xbf16>, vector<4x32x8xbf16>, vector<4x8x8xf32> -> vector<4x8x8xf32>
      "tpu.trace_stop"() : () -> ()
      %72 = arith.addf %71, %28 : vector<4x8x8xf32>
      %73 = arith.truncf %68 : vector<4x8x8xf32> to vector<4x8x8xbf16>
      %74 = arith.truncf %70 : vector<4x8x8xf32> to vector<4x8x8xbf16>
      "tpu.trace_start"() <{level = 10 : i32, message = "hqd,hkd->hqk"}> : () -> ()
      %cst_51 = arith.constant dense<0.000000e+00> : vector<4x8x8xf32>
      %75 = tpu.matmul %73, %74, %cst_51 {dimension_numbers = #tpu.dot_dimension_numbers<[2], [2], [1], [1], [0, 0, 0, 1, 1, 1], [0], [0]>} : vector<4x8x8xbf16>, vector<4x8x8xbf16>, vector<4x8x8xf32> -> vector<4x8x8xf32>
      "tpu.trace_stop"() : () -> ()
      %cst_52 = arith.constant dense<0xFF800000> : vector<4x8xf32>
      %76 = vector.multi_reduction <maximumf>, %75, %cst_52 [2] : vector<4x8x8xf32> to vector<4x8xf32>
      %77 = vector.shape_cast %76 : vector<4x8xf32> to vector<4x8x1xf32>
      %78 = vector.broadcast %77 : vector<4x8x1xf32> to vector<4x8x8xf32>
      %79 = arith.subf %75, %78 : vector<4x8x8xf32>
      %80 = math.exp %79 : vector<4x8x8xf32>
      %cst_53 = arith.constant dense<0.000000e+00> : vector<4x8xf32>
      %81 = vector.multi_reduction <add>, %80, %cst_53 [2] : vector<4x8x8xf32> to vector<4x8xf32>
      %82 = vector.shape_cast %81 : vector<4x8xf32> to vector<4x8x1xf32>
      %83 = tpu.reciprocal %82 {approx = true} : vector<4x8x1xf32> -> vector<4x8x1xf32>
      %84 = vector.broadcast %83 : vector<4x8x1xf32> to vector<4x8x8xf32>
      %85 = arith.mulf %80, %84 : vector<4x8x8xf32>
      %86 = arith.truncf %85 : vector<4x8x8xf32> to vector<4x8x8xbf16>
      %87 = arith.truncf %72 : vector<4x8x8xf32> to vector<4x8x8xbf16>
      "tpu.trace_start"() <{level = 10 : i32, message = "hqk,hkd->hqd"}> : () -> ()
      %cst_54 = arith.constant dense<0.000000e+00> : vector<4x8x8xf32>
      %88 = tpu.matmul %86, %87, %cst_54 {dimension_numbers = #tpu.dot_dimension_numbers<[2], [1], [1], [2], [0, 0, 0, 1, 1, 2], [0], [0]>} : vector<4x8x8xbf16>, vector<4x8x8xbf16>, vector<4x8x8xf32> -> vector<4x8x8xf32>
      "tpu.trace_stop"() : () -> ()
      %89 = arith.truncf %88 : vector<4x8x8xf32> to vector<4x8x8xbf16>
      "tpu.trace_start"() <{level = 10 : i32, message = "hqd,hdm->hqm"}> : () -> ()
      %cst_55 = arith.constant dense<0.000000e+00> : vector<4x8x32xf32>
      %90 = tpu.matmul %89, %5, %cst_55 {dimension_numbers = #tpu.dot_dimension_numbers<[2], [1], [1], [2], [0, 0, 0, 1, 1, 2], [0], [0]>} : vector<4x8x8xbf16>, vector<4x8x32xbf16>, vector<4x8x32xf32> -> vector<4x8x32xf32>
      "tpu.trace_stop"() : () -> ()
      %cst_56 = arith.constant dense<0.000000e+00> : vector<8x32xf32>
      %91 = vector.multi_reduction <add>, %90, %cst_56 [0] : vector<4x8x32xf32> to vector<8x32xf32>
      %92 = arith.addf %91, %31 : vector<8x32xf32>
      %93 = arith.addf %arg20, %92 : vector<8x32xf32>
      %cst_57 = arith.constant dense<0.000000e+00> : vector<8xf32>
      %94 = vector.multi_reduction <add>, %93, %cst_57 [1] : vector<8x32xf32> to vector<8xf32>
      %95 = vector.shape_cast %94 : vector<8xf32> to vector<8x1xf32>
      %cst_58 = arith.constant 3.200000e+01 : f32
      %96 = vector.broadcast %cst_58 : f32 to vector<8x1xf32>
      %97 = arith.divf %95, %96 : vector<8x1xf32>
      %98 = vector.broadcast %97 : vector<8x1xf32> to vector<8x32xf32>
      %99 = arith.subf %93, %98 : vector<8x32xf32>
      %100 = arith.mulf %99, %99 : vector<8x32xf32>
      %cst_59 = arith.constant dense<0.000000e+00> : vector<8xf32>
      %101 = vector.multi_reduction <add>, %100, %cst_59 [1] : vector<8x32xf32> to vector<8xf32>
      %102 = vector.shape_cast %101 : vector<8xf32> to vector<8x1xf32>
      %cst_60 = arith.constant 3.200000e+01 : f32
      %103 = vector.broadcast %cst_60 : f32 to vector<8x1xf32>
      %104 = arith.divf %102, %103 : vector<8x1xf32>
      %105 = vector.broadcast %97 : vector<8x1xf32> to vector<8x32xf32>
      %106 = arith.subf %93, %105 : vector<8x32xf32>
      %cst_61 = arith.constant 9.99999974E-6 : f32
      %107 = vector.broadcast %cst_61 : f32 to vector<8x1xf32>
      %108 = arith.addf %104, %107 : vector<8x1xf32>
      %109 = math.rsqrt %108 : vector<8x1xf32>
      %110 = vector.broadcast %109 : vector<8x1xf32> to vector<8x32xf32>
      %111 = arith.mulf %106, %110 : vector<8x32xf32>
      %112 = arith.mulf %111, %16 : vector<8x32xf32>
      %113 = arith.addf %112, %19 : vector<8x32xf32>
      %114 = arith.truncf %113 : vector<8x32xf32> to vector<8x32xbf16>
      %cst_62 = arith.constant dense<0.000000e+00> : vector<8x64xf32>
      %115 = tpu.matmul %114, %6, %cst_62 {dimension_numbers = #tpu.dot_dimension_numbers<[1], [0], [0], [1], [0, 0, 1, 1], [], []>} : vector<8x32xbf16>, vector<32x64xbf16>, vector<8x64xf32> -> vector<8x64xf32>
      %116 = arith.addf %115, %34 : vector<8x64xf32>
      %cst_63 = arith.constant 0.000000e+00 : f32
      %117 = vector.broadcast %cst_63 : f32 to vector<8x64xf32>
      %118 = arith.maximumf %116, %117 : vector<8x64xf32>
      %119 = arith.truncf %118 : vector<8x64xf32> to vector<8x64xbf16>
      %cst_64 = arith.constant dense<0.000000e+00> : vector<8x32xf32>
      %120 = tpu.matmul %119, %7, %cst_64 {dimension_numbers = #tpu.dot_dimension_numbers<[1], [0], [0], [1], [0, 0, 1, 1], [], []>} : vector<8x64xbf16>, vector<64x32xbf16>, vector<8x32xf32> -> vector<8x32xf32>
      %121 = arith.addf %120, %37 : vector<8x32xf32>
      %122 = arith.addf %93, %121 : vector<8x32xf32>
      scf.yield %122 : vector<8x32xf32>
    }
    %40 = arith.truncf %39 : vector<8x32xf32> to vector<8x32xbf16>
    %c0_41 = arith.constant 0 : index
    %c0_42 = arith.constant 0 : index
    %c0_43 = arith.constant 0 : index
    %41 = vector.load %arg18[%c0_41, %c0_42, %c0_43] : memref<1x8x32xbf16, #tpu.memory_space<vmem>>, vector<1x8x32xbf16>
    %42 = vector.shape_cast %41 : vector<1x8x32xbf16> to vector<8x32xbf16>
    %43 = vector.shape_cast %40 : vector<8x32xbf16> to vector<1x8x32xbf16>
    tpu.vector_store %arg18[%c0_41, %c0_42, %c0_43], %43 {strides = array<i32>} : memref<1x8x32xbf16, #tpu.memory_space<vmem>>, vector<1x8x32xbf16>,
    return
  }
  func.func @transform_0(%arg0: i32) -> (i32, i32, i32) {
    %c0_i32 = arith.constant 0 : i32
    %c0_i32_0 = arith.constant 0 : i32
    %c0_i32_1 = arith.constant 0 : i32
    return %arg0, %c0_i32, %c0_i32_0 : i32, i32, i32
  }
  func.func @transform_1(%arg0: i32) -> (i32, i32, i32) {
    %c0_i32 = arith.constant 0 : i32
    %c0_i32_0 = arith.constant 0 : i32
    %c0_i32_1 = arith.constant 0 : i32
    %c0_i32_2 = arith.constant 0 : i32
    return %c0_i32, %c0_i32_0, %c0_i32_1 : i32, i32, i32
  }
  func.func @transform_2(%arg0: i32) -> (i32, i32, i32) {
    %c0_i32 = arith.constant 0 : i32
    %c0_i32_0 = arith.constant 0 : i32
    %c0_i32_1 = arith.constant 0 : i32
    %c0_i32_2 = arith.constant 0 : i32
    return %c0_i32, %c0_i32_0, %c0_i32_1 : i32, i32, i32
  }
  func.func @transform_3(%arg0: i32) -> (i32, i32, i32) {
    %c0_i32 = arith.constant 0 : i32
    %c0_i32_0 = arith.constant 0 : i32
    %c0_i32_1 = arith.constant 0 : i32
    %c0_i32_2 = arith.constant 0 : i32
    return %c0_i32, %c0_i32_0, %c0_i32_1 : i32, i32, i32
  }
  func.func @transform_4(%arg0: i32) -> (i32, i32, i32) {
    %c0_i32 = arith.constant 0 : i32
    %c0_i32_0 = arith.constant 0 : i32
    %c0_i32_1 = arith.constant 0 : i32
    %c0_i32_2 = arith.constant 0 : i32
    return %c0_i32, %c0_i32_0, %c0_i32_1 : i32, i32, i32
  }
  func.func @transform_5(%arg0: i32) -> (i32, i32, i32) {
    %c0_i32 = arith.constant 0 : i32
    %c0_i32_0 = arith.constant 0 : i32
    %c0_i32_1 = arith.constant 0 : i32
    %c0_i32_2 = arith.constant 0 : i32
    return %c0_i32, %c0_i32_0, %c0_i32_1 : i32, i32, i32
  }
  func.func @transform_6(%arg0: i32) -> (i32, i32, i32) {
    %c0_i32 = arith.constant 0 : i32
    %c0_i32_0 = arith.constant 0 : i32
    %c0_i32_1 = arith.constant 0 : i32
    %c0_i32_2 = arith.constant 0 : i32
    return %c0_i32, %c0_i32_0, %c0_i32_1 : i32, i32, i32
  }
  func.func @transform_7(%arg0: i32) -> (i32, i32, i32) {
    %c0_i32 = arith.constant 0 : i32
    %c0_i32_0 = arith.constant 0 : i32
    %c0_i32_1 = arith.constant 0 : i32
    %c0_i32_2 = arith.constant 0 : i32
    return %c0_i32, %c0_i32_0, %c0_i32_1 : i32, i32, i32
  }
  func.func @transform_8(%arg0: i32) -> (i32, i32) {
    %c0_i32 = arith.constant 0 : i32
    %c0_i32_0 = arith.constant 0 : i32
    %c0_i32_1 = arith.constant 0 : i32
    return %c0_i32, %c0_i32_0 : i32, i32
  }
  func.func @transform_9(%arg0: i32) -> (i32, i32) {
    %c0_i32 = arith.constant 0 : i32
    %c0_i32_0 = arith.constant 0 : i32
    %c0_i32_1 = arith.constant 0 : i32
    return %c0_i32, %c0_i32_0 : i32, i32
  }
  func.func @transform_10(%arg0: i32) -> (i32, i32) {
    %c0_i32 = arith.constant 0 : i32
    %c0_i32_0 = arith.constant 0 : i32
    %c0_i32_1 = arith.constant 0 : i32
    return %c0_i32, %c0_i32_0 : i32, i32
  }
  func.func @transform_11(%arg0: i32) -> (i32, i32) {
    %c0_i32 = arith.constant 0 : i32
    %c0_i32_0 = arith.constant 0 : i32
    %c0_i32_1 = arith.constant 0 : i32
    return %c0_i32, %c0_i32_0 : i32, i32
  }
  func.func @transform_12(%arg0: i32) -> (i32, i32) {
    %c0_i32 = arith.constant 0 : i32
    %c0_i32_0 = arith.constant 0 : i32
    %c0_i32_1 = arith.constant 0 : i32
    return %c0_i32, %c0_i32_0 : i32, i32
  }
  func.func @transform_13(%arg0: i32) -> (i32, i32) {
    %c0_i32 = arith.constant 0 : i32
    %c0_i32_0 = arith.constant 0 : i32
    %c0_i32_1 = arith.constant 0 : i32
    return %c0_i32, %c0_i32_0 : i32, i32
  }
  func.func @transform_14(%arg0: i32) -> (i32, i32) {
    %c0_i32 = arith.constant 0 : i32
    %c0_i32_0 = arith.constant 0 : i32
    %c0_i32_1 = arith.constant 0 : i32
    return %c0_i32, %c0_i32_0 : i32, i32
  }
  func.func @transform_15(%arg0: i32) -> (i32, i32) {
    %c0_i32 = arith.constant 0 : i32
    %c0_i32_0 = arith.constant 0 : i32
    %c0_i32_1 = arith.constant 0 : i32
    return %c0_i32, %c0_i32_0 : i32, i32
  }
  func.func @transform_16(%arg0: i32) -> (i32, i32) {
    %c0_i32 = arith.constant 0 : i32
    %c0_i32_0 = arith.constant 0 : i32
    %c0_i32_1 = arith.constant 0 : i32
    return %c0_i32, %c0_i32_0 : i32, i32
  }
  func.func @transform_17(%arg0: i32) -> (i32, i32, i32) {
    %c0_i32 = arith.constant 0 : i32
    %c0_i32_0 = arith.constant 0 : i32
    %c0_i32_1 = arith.constant 0 : i32
    return %arg0, %c0_i32, %c0_i32_0 : i32, i32, i32
  }
}

module attributes {stable_mosaic.version = 11 : i64} {
  func.func @encoder_stack_kernel(%arg0: i32, %arg1: memref<1x8x32xf32, #tpu.memory_space<vmem>>, %arg2: memref<4x32x8xbf16, #tpu.memory_space<vmem>>, %arg3: memref<4x32x8xbf16, #tpu.memory_space<vmem>>, %arg4: memref<4x32x8xbf16, #tpu.memory_space<vmem>>, %arg5: memref<4x1x8xf32, #tpu.memory_space<vmem>>, %arg6: memref<4x1x8xf32, #tpu.memory_space<vmem>>, %arg7: memref<4x1x8xf32, #tpu.memory_space<vmem>>, %arg8: memref<4x8x32xbf16, #tpu.memory_space<vmem>>, %arg9: memref<1x32xf32, #tpu.memory_space<vmem>>, %arg10: memref<1x32xf32, #tpu.memory_space<vmem>>, %arg11: memref<1x32xf32, #tpu.memory_space<vmem>>, %arg12: memref<1x32xf32, #tpu.memory_space<vmem>>, %arg13: memref<1x32xf32, #tpu.memory_space<vmem>>, %arg14: memref<32x64xbf16, #tpu.memory_space<vmem>>, %arg15: memref<1x64xf32, #tpu.memory_space<vmem>>, %arg16: memref<64x32xbf16, #tpu.memory_space<vmem>>, %arg17: memref<1x32xf32, #tpu.memory_space<vmem>>, %arg18: memref<1x8x32xbf16, #tpu.memory_space<vmem>>) attributes {dimension_semantics = [#tpu.dimension_semantics<parallel>], iteration_bounds = array<i64: 2>, scalar_prefetch = 0 : i64, scratch_operands = 0 : i64, tpu.core_type = #tpu.core_type<tc>, window_params = [{transform_indices = @transform_0, window_bounds = array<i64: 1, 8, 32>}, {pipeline_mode = #tpu.pipeline_mode<synchronous>, transform_indices = @transform_1, window_bounds = array<i64: 4, 32, 8>}, {pipeline_mode = #tpu.pipeline_mode<synchronous>, transform_indices = @transform_2, window_bounds = array<i64: 4, 32, 8>}, {pipeline_mode = #tpu.pipeline_mode<synchronous>, transform_indices = @transform_3, window_bounds = array<i64: 4, 32, 8>}, {pipeline_mode = #tpu.pipeline_mode<synchronous>, transform_indices = @transform_4, window_bounds = array<i64: 4, 1, 8>}, {pipeline_mode = #tpu.pipeline_mode<synchronous>, transform_indices = @transform_5, window_bounds = array<i64: 4, 1, 8>}, {pipeline_mode = #tpu.pipeline_mode<synchronous>, transform_indices = @transform_6, window_bounds = array<i64: 4, 1, 8>}, {pipeline_mode = #tpu.pipeline_mode<synchronous>, transform_indices = @transform_7, window_bounds = array<i64: 4, 8, 32>}, {pipeline_mode = #tpu.pipeline_mode<synchronous>, transform_indices = @transform_8, window_bounds = array<i64: 1, 32>}, {pipeline_mode = #tpu.pipeline_mode<synchronous>, transform_indices = @transform_9, window_bounds = array<i64: 1, 32>}, {pipeline_mode = #tpu.pipeline_mode<synchronous>, transform_indices = @transform_10, window_bounds = array<i64: 1, 32>}, {pipeline_mode = #tpu.pipeline_mode<synchronous>, transform_indices = @transform_11, window_bounds = array<i64: 1, 32>}, {pipeline_mode = #tpu.pipeline_mode<synchronous>, transform_indices = @transform_12, window_bounds = array<i64: 1, 32>}, {pipeline_mode = #tpu.pipeline_mode<synchronous>, transform_indices = @transform_13, window_bounds = array<i64: 32, 64>}, {pipeline_mode = #tpu.pipeline_mode<synchronous>, transform_indices = @transform_14, window_bounds = array<i64: 1, 64>}, {pipeline_mode = #tpu.pipeline_mode<synchronous>, transform_indices = @transform_15, window_bounds = array<i64: 64, 32>}, {pipeline_mode = #tpu.pipeline_mode<synchronous>, transform_indices = @transform_16, window_bounds = array<i64: 1, 32>}, {transform_indices = @transform_17, window_bounds = array<i64: 1, 8, 32>}]} {
    %c0 = arith.constant 0 : index
    %c0_0 = arith.constant 0 : index
    %c0_1 = arith.constant 0 : index
    %0 = vector.load %arg1[%c0, %c0_0, %c0_1] : memref<1x8x32xf32, #tpu.memory_space<vmem>>, vector<1x8x32xf32>
    %1 = vector.shape_cast %0 : vector<1x8x32xf32> to vector<8x32xf32>
    %c0_2 = arith.constant 0 : index
    %c0_3 = arith.constant 0 : index
    %c0_4 = arith.constant 0 : index
    %2 = vector.load %arg2[%c0_2, %c0_3, %c0_4] : memref<4x32x8xbf16, #tpu.memory_space<vmem>>, vector<4x32x8xbf16>
    %c0_5 = arith.constant 0 : index
    %c0_6 = arith.constant 0 : index
    %c0_7 = arith.constant 0 : index
    %3 = vector.load %arg3[%c0_5, %c0_6, %c0_7] : memref<4x32x8xbf16, #tpu.memory_space<vmem>>, vector<4x32x8xbf16>
    %c0_8 = arith.constant 0 : index
    %c0_9 = arith.constant 0 : index
    %c0_10 = arith.constant 0 : index
    %4 = vector.load %arg4[%c0_8, %c0_9, %c0_10] : memref<4x32x8xbf16, #tpu.memory_space<vmem>>, vector<4x32x8xbf16>
    %c0_11 = arith.constant 0 : index
    %c0_12 = arith.constant 0 : index
    %c0_13 = arith.constant 0 : index
    %5 = vector.load %arg8[%c0_11, %c0_12, %c0_13] : memref<4x8x32xbf16, #tpu.memory_space<vmem>>, vector<4x8x32xbf16>
    %c0_14 = arith.constant 0 : index
    %c0_15 = arith.constant 0 : index
    %6 = vector.load %arg14[%c0_14, %c0_15] : memref<32x64xbf16, #tpu.memory_space<vmem>>, vector<32x64xbf16>
    %c0_16 = arith.constant 0 : index
    %c0_17 = arith.constant 0 : index
    %7 = vector.load %arg16[%c0_16, %c0_17] : memref<64x32xbf16, #tpu.memory_space<vmem>>, vector<64x32xbf16>
    %c0_18 = arith.constant 0 : index
    %c0_19 = arith.constant 0 : index
    %8 = vector.load %arg10[%c0_18, %c0_19] : memref<1x32xf32, #tpu.memory_space<vmem>>, vector<1x32xf32>
    %9 = vector.shape_cast %8 : vector<1x32xf32> to vector<1x32xf32>
    %10 = vector.broadcast %9 : vector<1x32xf32> to vector<8x32xf32>
    %c0_20 = arith.constant 0 : index
    %c0_21 = arith.constant 0 : index
    %11 = vector.load %arg11[%c0_20, %c0_21] : memref<1x32xf32, #tpu.memory_space<vmem>>, vector<1x32xf32>
    %12 = vector.shape_cast %11 : vector<1x32xf32> to vector<1x32xf32>
    %13 = vector.broadcast %12 : vector<1x32xf32> to vector<8x32xf32>
    %c0_22 = arith.constant 0 : index
    %c0_23 = arith.constant 0 : index
    %14 = vector.load %arg12[%c0_22, %c0_23] : memref<1x32xf32, #tpu.memory_space<vmem>>, vector<1x32xf32>
    %15 = vector.shape_cast %14 : vector<1x32xf32> to vector<1x32xf32>
    %16 = vector.broadcast %15 : vector<1x32xf32> to vector<8x32xf32>
    %c0_24 = arith.constant 0 : index
    %c0_25 = arith.constant 0 : index
    %17 = vector.load %arg13[%c0_24, %c0_25] : memref<1x32xf32, #tpu.memory_space<vmem>>, vector<1x32xf32>
    %18 = vector.shape_cast %17 : vector<1x32xf32> to vector<1x32xf32>
    %19 = vector.broadcast %18 : vector<1x32xf32> to vector<8x32xf32>
    %c0_26 = arith.constant 0 : index
    %c0_27 = arith.constant 0 : index
    %c0_28 = arith.constant 0 : index
    %20 = vector.load %arg5[%c0_26, %c0_27, %c0_28] : memref<4x1x8xf32, #tpu.memory_space<vmem>>, vector<4x1x8xf32>
    %21 = vector.shape_cast %20 : vector<4x1x8xf32> to vector<4x1x8xf32>
    %22 = vector.broadcast %21 : vector<4x1x8xf32> to vector<4x8x8xf32>
    %c0_29 = arith.constant 0 : index
    %c0_30 = arith.constant 0 : index
    %c0_31 = arith.constant 0 : index
    %23 = vector.load %arg6[%c0_29, %c0_30, %c0_31] : memref<4x1x8xf32, #tpu.memory_space<vmem>>, vector<4x1x8xf32>
    %24 = vector.shape_cast %23 : vector<4x1x8xf32> to vector<4x1x8xf32>
    %25 = vector.broadcast %24 : vector<4x1x8xf32> to vector<4x8x8xf32>
    %c0_32 = arith.constant 0 : index
    %c0_33 = arith.constant 0 : index
    %c0_34 = arith.constant 0 : index
    %26 = vector.load %arg7[%c0_32, %c0_33, %c0_34] : memref<4x1x8xf32, #tpu.memory_space<vmem>>, vector<4x1x8xf32>
    %27 = vector.shape_cast %26 : vector<4x1x8xf32> to vector<4x1x8xf32>
    %28 = vector.broadcast %27 : vector<4x1x8xf32> to vector<4x8x8xf32>
    %c0_35 = arith.constant 0 : index
    %c0_36 = arith.constant 0 : index
    %29 = vector.load %arg9[%c0_35, %c0_36] : memref<1x32xf32, #tpu.memory_space<vmem>>, vector<1x32xf32>
    %30 = vector.shape_cast %29 : vector<1x32xf32> to vector<1x32xf32>
    %31 = vector.broadcast %30 : vector<1x32xf32> to vector<8x32xf32>
    %c0_37 = arith.constant 0 : index
    %c0_38 = arith.constant 0 : index
    %32 = vector.load %arg15[%c0_37, %c0_38] : memref<1x64xf32, #tpu.memory_space<vmem>>, vector<1x64xf32>
    %33 = vector.shape_cast %32 : vector<1x64xf32> to vector<1x64xf32>
    %34 = vector.broadcast %33 : vector<1x64xf32> to vector<8x64xf32>
    %c0_39 = arith.constant 0 : index
    %c0_40 = arith.constant 0 : index
    %35 = vector.load %arg17[%c0_39, %c0_40] : memref<1x32xf32, #tpu.memory_space<vmem>>, vector<1x32xf32>
    %36 = vector.shape_cast %35 : vector<1x32xf32> to vector<1x32xf32>
    %37 = vector.broadcast %36 : vector<1x32xf32> to vector<8x32xf32>
    %c0_i32 = arith.constant 0 : i32
    %c2_i32 = arith.constant 2 : i32
    %38 = arith.addi %c0_i32, %c2_i32 : i32
    %c1_i32 = arith.constant 1 : i32
    %39 = scf.for %arg19 = %c0_i32 to %38 step %c1_i32 iter_args(%arg20 = %1) -> (vector<8x32xf32>)  : i32 {
      %cst = arith.constant dense<0.000000e+00> : vector<8xf32>
      %44 = vector.multi_reduction <add>, %arg20, %cst [1] : vector<8x32xf32> to vector<8xf32>
      %45 = vector.shape_cast %44 : vector<8xf32> to vector<8x1xf32>
      %cst_44 = arith.constant 3.200000e+01 : f32
      %46 = vector.broadcast %cst_44 : f32 to vector<8x1xf32>
      %47 = arith.divf %45, %46 : vector<8x1xf32>
      %48 = vector.broadcast %47 : vector<8x1xf32> to vector<8x32xf32>
      %49 = arith.subf %arg20, %48 : vector<8x32xf32>
      %50 = arith.mulf %49, %49 : vector<8x32xf32>
      %cst_45 = arith.constant dense<0.000000e+00> : vector<8xf32>
      %51 = vector.multi_reduction <add>, %50, %cst_45 [1] : vector<8x32xf32> to vector<8xf32>
      %52 = vector.shape_cast %51 : vector<8xf32> to vector<8x1xf32>
      %cst_46 = arith.constant 3.200000e+01 : f32
      %53 = vector.broadcast %cst_46 : f32 to vector<8x1xf32>
      %54 = arith.divf %52, %53 : vector<8x1xf32>
      %55 = vector.broadcast %47 : vector<8x1xf32> to vector<8x32xf32>
      %56 = arith.subf %arg20, %55 : vector<8x32xf32>
      %cst_47 = arith.constant 9.99999974E-6 : f32
      %57 = vector.broadcast %cst_47 : f32 to vector<8x1xf32>
      %58 = arith.addf %54, %57 : vector<8x1xf32>
      %59 = math.rsqrt %58 : vector<8x1xf32>
      %60 = vector.broadcast %59 : vector<8x1xf32> to vector<8x32xf32>
      %61 = arith.mulf %56, %60 : vector<8x32xf32>
      %62 = arith.mulf %61, %10 : vector<8x32xf32>
      %63 = arith.addf %62, %13 : vector<8x32xf32>
      %64 = arith.truncf %63 : vector<8x32xf32> to vector<8x32xbf16>
      %65 = vector.shape_cast %64 : vector<8x32xbf16> to vector<1x8x32xbf16>
      %66 = vector.broadcast %65 : vector<1x8x32xbf16> to vector<4x8x32xbf16>
      "tpu.trace_start"() <{level = 10 : i32, message = "hsd,hde->hse"}> : () -> ()
      %cst_48 = arith.constant dense<0.000000e+00> : vector<4x8x8xf32>
      %67 = tpu.matmul %66, %2, %cst_48 {dimension_numbers = #tpu.dot_dimension_numbers<[2], [1], [1], [2], [0, 0, 0, 1, 1, 2], [0], [0]>} : vector<4x8x32xbf16>, vector<4x32x8xbf16>, vector<4x8x8xf32> -> vector<4x8x8xf32>
      "tpu.trace_stop"() : () -> ()
      %68 = arith.addf %67, %22 : vector<4x8x8xf32>
      "tpu.trace_start"() <{level = 10 : i32, message = "hsd,hde->hse"}> : () -> ()
      %cst_49 = arith.constant dense<0.000000e+00> : vector<4x8x8xf32>
      %69 = tpu.matmul %66, %3, %cst_49 {dimension_numbers = #tpu.dot_dimension_numbers<[2], [1], [1], [2], [0, 0, 0, 1, 1, 2], [0], [0]>} : vector<4x8x32xbf16>, vector<4x32x8xbf16>, vector<4x8x8xf32> -> vector<4x8x8xf32>
      "tpu.trace_stop"() : () -> ()
      %70 = arith.addf %69, %25 : vector<4x8x8xf32>
      "tpu.trace_start"() <{level = 10 : i32, message = "hsd,hde->hse"}> : () -> ()
      %cst_50 = arith.constant dense<0.000000e+00> : vector<4x8x8xf32>
      %71 = tpu.matmul %66, %4, %cst_50 {dimension_numbers = #tpu.dot_dimension_numbers<[2], [1], [1], [2], [0, 0, 0, 1, 1, 2], [0], [0]>} : vector<4x8x32xbf16>, vector<4x32x8xbf16>, vector<4x8x8xf32> -> vector<4x8x8xf32>
      "tpu.trace_stop"() : () -> ()
      %72 = arith.addf %71, %28 : vector<4x8x8xf32>
      %73 = arith.truncf %68 : vector<4x8x8xf32> to vector<4x8x8xbf16>
      %74 = arith.truncf %70 : vector<4x8x8xf32> to vector<4x8x8xbf16>
      "tpu.trace_start"() <{level = 10 : i32, message = "hqd,hkd->hqk"}> : () -> ()
      %cst_51 = arith.constant dense<0.000000e+00> : vector<4x8x8xf32>
      %75 = tpu.matmul %73, %74, %cst_51 {dimension_numbers = #tpu.dot_dimension_numbers<[2], [2], [1], [1], [0, 0, 0, 1, 1, 1], [0], [0]>} : vector<4x8x8xbf16>, vector<4x8x8xbf16>, vector<4x8x8xf32> -> vector<4x8x8xf32>
      "tpu.trace_stop"() : () -> ()
      %cst_52 = arith.constant dense<0xFF800000> : vector<4x8xf32>
      %76 = vector.multi_reduction <maximumf>, %75, %cst_52 [2] : vector<4x8x8xf32> to vector<4x8xf32>
      %77 = vector.shape_cast %76 : vector<4x8xf32> to vector<4x8x1xf32>
      %78 = vector.broadcast %77 : vector<4x8x1xf32> to vector<4x8x8xf32>
      %79 = arith.subf %75, %78 : vector<4x8x8xf32>
      %80 = math.exp %79 : vector<4x8x8xf32>
      %cst_53 = arith.constant dense<0.000000e+00> : vector<4x8xf32>
      %81 = vector.multi_reduction <add>, %80, %cst_53 [2] : vector<4x8x8xf32> to vector<4x8xf32>
      %82 = vector.shape_cast %81 : vector<4x8xf32> to vector<4x8x1xf32>
      %83 = tpu.reciprocal %82 {approx = true} : vector<4x8x1xf32> -> vector<4x8x1xf32>
      %84 = vector.broadcast %83 : vector<4x8x1xf32> to vector<4x8x8xf32>
      %85 = arith.mulf %80, %84 : vector<4x8x8xf32>
      %86 = arith.truncf %85 : vector<4x8x8xf32> to vector<4x8x8xbf16>
      %87 = arith.truncf %72 : vector<4x8x8xf32> to vector<4x8x8xbf16>
      "tpu.trace_start"() <{level = 10 : i32, message = "hqk,hkd->hqd"}> : () -> ()
      %cst_54 = arith.constant dense<0.000000e+00> : vector<4x8x8xf32>
      %88 = tpu.matmul %86, %87, %cst_54 {dimension_numbers = #tpu.dot_dimension_numbers<[2], [1], [1], [2], [0, 0, 0, 1, 1, 2], [0], [0]>} : vector<4x8x8xbf16>, vector<4x8x8xbf16>, vector<4x8x8xf32> -> vector<4x8x8xf32>
      "tpu.trace_stop"() : () -> ()
      %89 = arith.truncf %88 : vector<4x8x8xf32> to vector<4x8x8xbf16>
      "tpu.trace_start"() <{level = 10 : i32, message = "hqd,hdm->hqm"}> : () -> ()
      %cst_55 = arith.constant dense<0.000000e+00> : vector<4x8x32xf32>
      %90 = tpu.matmul %89, %5, %cst_55 {dimension_numbers = #tpu.dot_dimension_numbers<[2], [1], [1], [2], [0, 0, 0, 1, 1, 2], [0], [0]>} : vector<4x8x8xbf16>, vector<4x8x32xbf16>, vector<4x8x32xf32> -> vector<4x8x32xf32>
      "tpu.trace_stop"() : () -> ()
      %cst_56 = arith.constant dense<0.000000e+00> : vector<8x32xf32>
      %91 = vector.multi_reduction <add>, %90, %cst_56 [0] : vector<4x8x32xf32> to vector<8x32xf32>
      %92 = arith.addf %91, %31 : vector<8x32xf32>
      %93 = arith.addf %arg20, %92 : vector<8x32xf32>
      %cst_57 = arith.constant dense<0.000000e+00> : vector<8xf32>
      %94 = vector.multi_reduction <add>, %93, %cst_57 [1] : vector<8x32xf32> to vector<8xf32>
      %95 = vector.shape_cast %94 : vector<8xf32> to vector<8x1xf32>
      %cst_58 = arith.constant 3.200000e+01 : f32
      %96 = vector.broadcast %cst_58 : f32 to vector<8x1xf32>
      %97 = arith.divf %95, %96 : vector<8x1xf32>
      %98 = vector.broadcast %97 : vector<8x1xf32> to vector<8x32xf32>
      %99 = arith.subf %93, %98 : vector<8x32xf32>
      %100 = arith.mulf %99, %99 : vector<8x32xf32>
      %cst_59 = arith.constant dense<0.000000e+00> : vector<8xf32>
      %101 = vector.multi_reduction <add>, %100, %cst_59 [1] : vector<8x32xf32> to vector<8xf32>
      %102 = vector.shape_cast %101 : vector<8xf32> to vector<8x1xf32>
      %cst_60 = arith.constant 3.200000e+01 : f32
      %103 = vector.broadcast %cst_60 : f32 to vector<8x1xf32>
      %104 = arith.divf %102, %103 : vector<8x1xf32>
      %105 = vector.broadcast %97 : vector<8x1xf32> to vector<8x32xf32>
      %106 = arith.subf %93, %105 : vector<8x32xf32>
      %cst_61 = arith.constant 9.99999974E-6 : f32
      %107 = vector.broadcast %cst_61 : f32 to vector<8x1xf32>
      %108 = arith.addf %104, %107 : vector<8x1xf32>
      %109 = math.rsqrt %108 : vector<8x1xf32>
      %110 = vector.broadcast %109 : vector<8x1xf32> to vector<8x32xf32>
      %111 = arith.mulf %106, %110 : vector<8x32xf32>
      %112 = arith.mulf %111, %16 : vector<8x32xf32>
      %113 = arith.addf %112, %19 : vector<8x32xf32>
      %114 = arith.truncf %113 : vector<8x32xf32> to vector<8x32xbf16>
      %cst_62 = arith.constant dense<0.000000e+00> : vector<8x64xf32>
      %115 = tpu.matmul %114, %6, %cst_62 {dimension_numbers = #tpu.dot_dimension_numbers<[1], [0], [0], [1], [0, 0, 1, 1], [], []>} : vector<8x32xbf16>, vector<32x64xbf16>, vector<8x64xf32> -> vector<8x64xf32>
      %116 = arith.addf %115, %34 : vector<8x64xf32>
      %cst_63 = arith.constant 0.000000e+00 : f32
      %117 = vector.broadcast %cst_63 : f32 to vector<8x64xf32>
      %118 = arith.maximumf %116, %117 : vector<8x64xf32>
      %119 = arith.truncf %118 : vector<8x64xf32> to vector<8x64xbf16>
      %cst_64 = arith.constant dense<0.000000e+00> : vector<8x32xf32>
      %120 = tpu.matmul %119, %7, %cst_64 {dimension_numbers = #tpu.dot_dimension_numbers<[1], [0], [0], [1], [0, 0, 1, 1], [], []>} : vector<8x64xbf16>, vector<64x32xbf16>, vector<8x32xf32> -> vector<8x32xf32>
      %121 = arith.addf %120, %37 : vector<8x32xf32>
      %122 = arith.addf %93, %121 : vector<8x32xf32>
      scf.yield %122 : vector<8x32xf32>
    }
    %40 = arith.truncf %39 : vector<8x32xf32> to vector<8x32xbf16>
    %c0_41 = arith.constant 0 : index
    %c0_42 = arith.constant 0 : index
    %c0_43 = arith.constant 0 : index
    %41 = vector.load %arg18[%c0_41, %c0_42, %c0_43] : memref<1x8x32xbf16, #tpu.memory_space<vmem>>, vector<1x8x32xbf16>
    %42 = vector.shape_cast %41 : vector<1x8x32xbf16> to vector<8x32xbf16>
    %43 = vector.shape_cast %40 : vector<8x32xbf16> to vector<1x8x32xbf16>
    tpu.vector_store %arg18[%c0_41, %c0_42, %c0_43], %43 {strides = array<i32>} : memref<1x8x32xbf16, #tpu.memory_space<vmem>>, vector<1x8x32xbf16>,
    return
  }
  func.func @transform_0(%arg0: i32) -> (i32, i32, i32) {
    %c0_i32 = arith.constant 0 : i32
    %c0_i32_0 = arith.constant 0 : i32
    %c0_i32_1 = arith.constant 0 : i32
    return %arg0, %c0_i32, %c0_i32_0 : i32, i32, i32
  }
  func.func @transform_1(%arg0: i32) -> (i32, i32, i32) {
    %c0_i32 = arith.constant 0 : i32
    %c0_i32_0 = arith.constant 0 : i32
    %c0_i32_1 = arith.constant 0 : i32
    %c0_i32_2 = arith.constant 0 : i32
    return %c0_i32, %c0_i32_0, %c0_i32_1 : i32, i32, i32
  }
  func.func @transform_2(%arg0: i32) -> (i32, i32, i32) {
    %c0_i32 = arith.constant 0 : i32
    %c0_i32_0 = arith.constant 0 : i32
    %c0_i32_1 = arith.constant 0 : i32
    %c0_i32_2 = arith.constant 0 : i32
    return %c0_i32, %c0_i32_0, %c0_i32_1 : i32, i32, i32
  }
  func.func @transform_3(%arg0: i32) -> (i32, i32, i32) {
    %c0_i32 = arith.constant 0 : i32
    %c0_i32_0 = arith.constant 0 : i32
    %c0_i32_1 = arith.constant 0 : i32
    %c0_i32_2 = arith.constant 0 : i32
    return %c0_i32, %c0_i32_0, %c0_i32_1 : i32, i32, i32
  }
  func.func @transform_4(%arg0: i32) -> (i32, i32, i32) {
    %c0_i32 = arith.constant 0 : i32
    %c0_i32_0 = arith.constant 0 : i32
    %c0_i32_1 = arith.constant 0 : i32
    %c0_i32_2 = arith.constant 0 : i32
    return %c0_i32, %c0_i32_0, %c0_i32_1 : i32, i32, i32
  }
  func.func @transform_5(%arg0: i32) -> (i32, i32, i32) {
    %c0_i32 = arith.constant 0 : i32
    %c0_i32_0 = arith.constant 0 : i32
    %c0_i32_1 = arith.constant 0 : i32
    %c0_i32_2 = arith.constant 0 : i32
    return %c0_i32, %c0_i32_0, %c0_i32_1 : i32, i32, i32
  }
  func.func @transform_6(%arg0: i32) -> (i32, i32, i32) {
    %c0_i32 = arith.constant 0 : i32
    %c0_i32_0 = arith.constant 0 : i32
    %c0_i32_1 = arith.constant 0 : i32
    %c0_i32_2 = arith.constant 0 : i32
    return %c0_i32, %c0_i32_0, %c0_i32_1 : i32, i32, i32
  }
  func.func @transform_7(%arg0: i32) -> (i32, i32, i32) {
    %c0_i32 = arith.constant 0 : i32
    %c0_i32_0 = arith.constant 0 : i32
    %c0_i32_1 = arith.constant 0 : i32
    %c0_i32_2 = arith.constant 0 : i32
    return %c0_i32, %c0_i32_0, %c0_i32_1 : i32, i32, i32
  }
  func.func @transform_8(%arg0: i32) -> (i32, i32) {
    %c0_i32 = arith.constant 0 : i32
    %c0_i32_0 = arith.constant 0 : i32
    %c0_i32_1 = arith.constant 0 : i32
    return %c0_i32, %c0_i32_0 : i32, i32
  }
  func.func @transform_9(%arg0: i32) -> (i32, i32) {
    %c0_i32 = arith.constant 0 : i32
    %c0_i32_0 = arith.constant 0 : i32
    %c0_i32_1 = arith.constant 0 : i32
    return %c0_i32, %c0_i32_0 : i32, i32
  }
  func.func @transform_10(%arg0: i32) -> (i32, i32) {
    %c0_i32 = arith.constant 0 : i32
    %c0_i32_0 = arith.constant 0 : i32
    %c0_i32_1 = arith.constant 0 : i32
    return %c0_i32, %c0_i32_0 : i32, i32
  }
  func.func @transform_11(%arg0: i32) -> (i32, i32) {
    %c0_i32 = arith.constant 0 : i32
    %c0_i32_0 = arith.constant 0 : i32
    %c0_i32_1 = arith.constant 0 : i32
    return %c0_i32, %c0_i32_0 : i32, i32
  }
  func.func @transform_12(%arg0: i32) -> (i32, i32) {
    %c0_i32 = arith.constant 0 : i32
    %c0_i32_0 = arith.constant 0 : i32
    %c0_i32_1 = arith.constant 0 : i32
    return %c0_i32, %c0_i32_0 : i32, i32
  }
  func.func @transform_13(%arg0: i32) -> (i32, i32) {
    %c0_i32 = arith.constant 0 : i32
    %c0_i32_0 = arith.constant 0 : i32
    %c0_i32_1 = arith.constant 0 : i32
    return %c0_i32, %c0_i32_0 : i32, i32
  }
  func.func @transform_14(%arg0: i32) -> (i32, i32) {
    %c0_i32 = arith.constant 0 : i32
    %c0_i32_0 = arith.constant 0 : i32
    %c0_i32_1 = arith.constant 0 : i32
    return %c0_i32, %c0_i32_0 : i32, i32
  }
  func.func @transform_15(%arg0: i32) -> (i32, i32) {
    %c0_i32 = arith.constant 0 : i32
    %c0_i32_0 = arith.constant 0 : i32
    %c0_i32_1 = arith.constant 0 : i32
    return %c0_i32, %c0_i32_0 : i32, i32
  }
  func.func @transform_16(%arg0: i32) -> (i32, i32) {
    %c0_i32 = arith.constant 0 : i32
    %c0_i32_0 = arith.constant 0 : i32
    %c0_i32_1 = arith.constant 0 : i32
    return %c0_i32, %c0_i32_0 : i32, i32
  }
  func.func @transform_17(%arg0: i32) -> (i32, i32, i32) {
    %c0_i32 = arith.constant 0 : i32
    %c0_i32_0 = arith.constant 0 : i32
    %c0_i32_1 = arith.constant 0 : i32
    return %arg0, %c0_i32, %c0_i32_0 : i32, i32, i32
  }
}

</mosaic_0001>

<llo_original>
// kernel: tpu_custom_call.1
$region0: #{tpu_custom_call.1}
  #allocation0 [shape = 'u32[]', space=smem, size = 0x4, offset = 0x4, fixed_abs, tag = 'smem constant byte address 0x4 - core index']
  #allocation1 [shape = 'u32[144,128]{1,0:T(1,128)}', space=vmem, size = 0x12000, scoped, tag = 'internal scratch']
  %s0 = inlined_call_operand.vmem [shape: f32[2,8,32], index: 0, kind: input, shape index: {}]
  %s1 = inlined_call_operand.vmem [shape: bf16[4,32,8], index: 1, kind: input, shape index: {}]
  %s2 = inlined_call_operand.vmem [shape: bf16[4,32,8], index: 2, kind: input, shape index: {}]
  %s3 = inlined_call_operand.vmem [shape: bf16[4,32,8], index: 3, kind: input, shape index: {}]
  %s4 = inlined_call_operand.vmem [shape: f32[4,1,8], index: 4, kind: input, shape index: {}]
  %s5 = inlined_call_operand.vmem [shape: f32[4,1,8], index: 5, kind: input, shape index: {}]
  %s6 = inlined_call_operand.vmem [shape: f32[4,1,8], index: 6, kind: input, shape index: {}]
  %s7 = inlined_call_operand.vmem [shape: bf16[4,8,32], index: 7, kind: input, shape index: {}]
  %s8 = inlined_call_operand.vmem [shape: f32[1,32], index: 8, kind: input, shape index: {}]
  %s9 = inlined_call_operand.vmem [shape: f32[1,32], index: 9, kind: input, shape index: {}]
  %s10 = inlined_call_operand.vmem [shape: f32[1,32], index: 10, kind: input, shape index: {}]
  %s11 = inlined_call_operand.vmem [shape: f32[1,32], index: 11, kind: input, shape index: {}]
  %s12 = inlined_call_operand.vmem [shape: f32[1,32], index: 12, kind: input, shape index: {}]
  %s13 = inlined_call_operand.vmem [shape: bf16[32,64], index: 13, kind: input, shape index: {}]
  %s14 = inlined_call_operand.vmem [shape: f32[1,64], index: 14, kind: input, shape index: {}]
  %s15 = inlined_call_operand.vmem [shape: bf16[64,32], index: 15, kind: input, shape index: {}]
  %s16 = inlined_call_operand.vmem [shape: f32[1,32], index: 16, kind: input, shape index: {}]
  %s17 = inlined_call_operand.hbm [shape: bf16[2,8,32], index: 17, kind: output, shape index: {}]
  %s18 = sld [smem:[#allocation0]]
  $region108: #{tpu_custom_call.1} parent=0
    _
  %s20 = ssub.s32 1, %s18
  %s21 = scalar_select 0, %s20, %s18
  $region1: #{tpu_custom_call.1} parent=0
    #allocation2 [shape = 'u8[4096]{0}', space=vmem, size = 0x1000, scoped, tag = 'output window, operand 0']
    #allocation3 [shape = 's32[2]{0}', space=sflag, size = 0x8, scoped, tag = 'scoped memory for tpu_custom_call.1']
    %22 = vsyncpa [#allocation3], 0
    %s23 = scalar_lea.sflag [#allocation3], 1
    %24 = vsyncpa %s23, 0
    loop: start=0, step=1, limit=4
    $region2: #{tpu_custom_call.1} parent=1 // loop_pre_header
      _
    $region3: #{tpu_custom_call.1} parent=1 // loop_header
      %s26 = sphi 0, %s30
      %p27 = scmp.ge.s32.totalorder %s26, 4
      %s36 = sphi 0, %s38
      %s39 = sphi 0, %s36
      %s40 = sphi 0, %s39
      %s56 = sphi 0, %s40
      %s60 = sphi 0, %s60
      %s62 = sphi 0, %s60
      %s63 = sphi 0, %s62
      %s77 = sphi 0, %s63
      %s81 = sphi 0, %s81
      %s83 = sphi 0, %s81
      %s84 = sphi 0, %s83
      %s98 = sphi 0, %s84
      %s102 = sphi 0, %s102
      %s104 = sphi 0, %s102
      %s105 = sphi 0, %s104
      %s119 = sphi 0, %s105
      %s123 = sphi 0, %s123
      %s125 = sphi 0, %s123
      %s126 = sphi 0, %s125
      %s140 = sphi 0, %s126
      %s144 = sphi 0, %s144
      %s146 = sphi 0, %s144
      %s147 = sphi 0, %s146
      %s161 = sphi 0, %s147
      %s165 = sphi 0, %s165
      %s167 = sphi 0, %s165
      %s168 = sphi 0, %s167
      %s182 = sphi 0, %s168
      %s186 = sphi 0, %s186
      %s188 = sphi 0, %s186
      %s189 = sphi 0, %s188
      %s203 = sphi 0, %s189
      %s207 = sphi 0, %s207
      %s209 = sphi 0, %s207
      %s210 = sphi 0, %s209
      %s224 = sphi 0, %s210
      %s228 = sphi 0, %s228
      %s230 = sphi 0, %s228
      %s231 = sphi 0, %s230
      %s245 = sphi 0, %s231
      %s249 = sphi 0, %s249
      %s251 = sphi 0, %s249
      %s252 = sphi 0, %s251
      %s266 = sphi 0, %s252
      %s270 = sphi 0, %s270
      %s272 = sphi 0, %s270
      %s273 = sphi 0, %s272
      %s287 = sphi 0, %s273
      %s291 = sphi 0, %s291
      %s293 = sphi 0, %s291
      %s294 = sphi 0, %s293
      %s308 = sphi 0, %s294
      %s312 = sphi 0, %s312
      %s314 = sphi 0, %s312
      %s315 = sphi 0, %s314
      %s329 = sphi 0, %s315
      %s333 = sphi 0, %s333
      %s335 = sphi 0, %s333
      %s336 = sphi 0, %s335
      %s350 = sphi 0, %s336
      %s354 = sphi 0, %s354
      %s356 = sphi 0, %s354
      %s357 = sphi 0, %s356
      %s371 = sphi 0, %s357
      %s375 = sphi 0, %s375
      %s377 = sphi 0, %s375
      %s378 = sphi 0, %s377
      %s392 = sphi 0, %s378
      %s398 = sphi 0, %s400
      %s401 = sphi 0, %s398
      %s402 = sphi 0, %s401
      %s418 = sphi 0, %s402
    $region4: #{tpu_custom_call.1} parent=1 // loop_header_branch
      %29 = sbr.rel (%p27) target = $region8
    $region5: #{tpu_custom_call.1} parent=1 // loop_body
      %s31 = ssub.s32 %s26, 1
      %s32 = ssub.s32 %s26, 2
      %s33 = sadd.s32 %s26, 1
      %s34 = ssub.s32 %s26, %s33
      %p35 = scmp.eq.s32.totalorder %s34, 0
      %s37 = sadd.s32 %s36, 1
      %s38 = scalar_select %p35, %s36, %s37
      %p41 = pneg %p35
      %p42 = scmp.eq.s32.totalorder %s26, 1
      %p43 = por %p41, %p42
      %p44 = scmp.ne.s32.totalorder %s36, %s39
      %p45 = scmp.eq.s32.totalorder %s26, 0
      %p46 = por %p44, %p45
      %p47 = scmp.ne.s32.totalorder %s36, %s39
      %p48 = scmp.eq.s32.totalorder %s31, 1
      %p49 = por %p47, %p48
      %p50 = scmp.ne.s32.totalorder %s39, %s40
      %p51 = scmp.eq.s32.totalorder %s31, 0
      %p52 = por %p50, %p51
      %p53 = scmp.ne.s32.totalorder %s39, %s40
      %p54 = scmp.eq.s32.totalorder %s32, 1
      %p55 = por %p53, %p54
      %p57 = scmp.ne.s32.totalorder %s40, %s56
      %p58 = scmp.eq.s32.totalorder %s32, 0
      %p59 = por %p57, %p58
      %s61 = sadd.s32 %s60, 1
      %p64 = scmp.eq.s32.totalorder %s26, 1
      %p65 = scmp.ne.s32.totalorder %s60, %s62
      %p66 = scmp.eq.s32.totalorder %s26, 0
      %p67 = por %p65, %p66
      %p68 = scmp.ne.s32.totalorder %s60, %s62
      %p69 = scmp.eq.s32.totalorder %s31, 1
      %p70 = por %p68, %p69
      %p71 = scmp.ne.s32.totalorder %s62, %s63
      %p72 = scmp.eq.s32.totalorder %s31, 0
      %p73 = por %p71, %p72
      %p74 = scmp.ne.s32.totalorder %s62, %s63
      %p75 = scmp.eq.s32.totalorder %s32, 1
      %p76 = por %p74, %p75
      %p78 = scmp.ne.s32.totalorder %s63, %s77
      %p79 = scmp.eq.s32.totalorder %s32, 0
      %p80 = por %p78, %p79
      %s82 = sadd.s32 %s81, 1
      %p85 = scmp.eq.s32.totalorder %s26, 1
      %p86 = scmp.ne.s32.totalorder %s81, %s83
      %p87 = scmp.eq.s32.totalorder %s26, 0
      %p88 = por %p86, %p87
      %p89 = scmp.ne.s32.totalorder %s81, %s83
      %p90 = scmp.eq.s32.totalorder %s31, 1
      %p91 = por %p89, %p90
      %p92 = scmp.ne.s32.totalorder %s83, %s84
      %p93 = scmp.eq.s32.totalorder %s31, 0
      %p94 = por %p92, %p93
      %p95 = scmp.ne.s32.totalorder %s83, %s84
      %p96 = scmp.eq.s32.totalorder %s32, 1
      %p97 = por %p95, %p96
      %p99 = scmp.ne.s32.totalorder %s84, %s98
      %p100 = scmp.eq.s32.totalorder %s32, 0
      %p101 = por %p99, %p100
      %s103 = sadd.s32 %s102, 1
      %p106 = scmp.eq.s32.totalorder %s26, 1
      %p107 = scmp.ne.s32.totalorder %s102, %s104
      %p108 = scmp.eq.s32.totalorder %s26, 0
      %p109 = por %p107, %p108
      %p110 = scmp.ne.s32.totalorder %s102, %s104
      %p111 = scmp.eq.s32.totalorder %s31, 1
      %p112 = por %p110, %p111
      %p113 = scmp.ne.s32.totalorder %s104, %s105
      %p114 = scmp.eq.s32.totalorder %s31, 0
      %p115 = por %p113, %p114
      %p116 = scmp.ne.s32.totalorder %s104, %s105
      %p117 = scmp.eq.s32.totalorder %s32, 1
      %p118 = por %p116, %p117
      %p120 = scmp.ne.s32.totalorder %s105, %s119
      %p121 = scmp.eq.s32.totalorder %s32, 0
      %p122 = por %p120, %p121
      %s124 = sadd.s32 %s123, 1
      %p127 = scmp.eq.s32.totalorder %s26, 1
      %p128 = scmp.ne.s32.totalorder %s123, %s125
      %p129 = scmp.eq.s32.totalorder %s26, 0
      %p130 = por %p128, %p129
      %p131 = scmp.ne.s32.totalorder %s123, %s125
      %p132 = scmp.eq.s32.totalorder %s31, 1
      %p133 = por %p131, %p132
      %p134 = scmp.ne.s32.totalorder %s125, %s126
      %p135 = scmp.eq.s32.totalorder %s31, 0
      %p136 = por %p134, %p135
      %p137 = scmp.ne.s32.totalorder %s125, %s126
      %p138 = scmp.eq.s32.totalorder %s32, 1
      %p139 = por %p137, %p138
      %p141 = scmp.ne.s32.totalorder %s126, %s140
      %p142 = scmp.eq.s32.totalorder %s32, 0
      %p143 = por %p141, %p142
      %s145 = sadd.s32 %s144, 1
      %p148 = scmp.eq.s32.totalorder %s26, 1
      %p149 = scmp.ne.s32.totalorder %s144, %s146
      %p150 = scmp.eq.s32.totalorder %s26, 0
      %p151 = por %p149, %p150
      %p152 = scmp.ne.s32.totalorder %s144, %s146
      %p153 = scmp.eq.s32.totalorder %s31, 1
      %p154 = por %p152, %p153
      %p155 = scmp.ne.s32.totalorder %s146, %s147
      %p156 = scmp.eq.s32.totalorder %s31, 0
      %p157 = por %p155, %p156
      %p158 = scmp.ne.s32.totalorder %s146, %s147
      %p159 = scmp.eq.s32.totalorder %s32, 1
      %p160 = por %p158, %p159
      %p162 = scmp.ne.s32.totalorder %s147, %s161
      %p163 = scmp.eq.s32.totalorder %s32, 0
      %p164 = por %p162, %p163
      %s166 = sadd.s32 %s165, 1
      %p169 = scmp.eq.s32.totalorder %s26, 1
      %p170 = scmp.ne.s32.totalorder %s165, %s167
      %p171 = scmp.eq.s32.totalorder %s26, 0
      %p172 = por %p170, %p171
      %p173 = scmp.ne.s32.totalorder %s165, %s167
      %p174 = scmp.eq.s32.totalorder %s31, 1
      %p175 = por %p173, %p174
      %p176 = scmp.ne.s32.totalorder %s167, %s168
      %p177 = scmp.eq.s32.totalorder %s31, 0
      %p178 = por %p176, %p177
      %p179 = scmp.ne.s32.totalorder %s167, %s168
      %p180 = scmp.eq.s32.totalorder %s32, 1
      %p181 = por %p179, %p180
      %p183 = scmp.ne.s32.totalorder %s168, %s182
      %p184 = scmp.eq.s32.totalorder %s32, 0
      %p185 = por %p183, %p184
      %s187 = sadd.s32 %s186, 1
      %p190 = scmp.eq.s32.totalorder %s26, 1
      %p191 = scmp.ne.s32.totalorder %s186, %s188
      %p192 = scmp.eq.s32.totalorder %s26, 0
      %p193 = por %p191, %p192
      %p194 = scmp.ne.s32.totalorder %s186, %s188
      %p195 = scmp.eq.s32.totalorder %s31, 1
      %p196 = por %p194, %p195
      %p197 = scmp.ne.s32.totalorder %s188, %s189
      %p198 = scmp.eq.s32.totalorder %s31, 0
      %p199 = por %p197, %p198
      %p200 = scmp.ne.s32.totalorder %s188, %s189
      %p201 = scmp.eq.s32.totalorder %s32, 1
      %p202 = por %p200, %p201
      %p204 = scmp.ne.s32.totalorder %s189, %s203
      %p205 = scmp.eq.s32.totalorder %s32, 0
      %p206 = por %p204, %p205
      %s208 = sadd.s32 %s207, 1
      %p211 = scmp.eq.s32.totalorder %s26, 1
      %p212 = scmp.ne.s32.totalorder %s207, %s209
      %p213 = scmp.eq.s32.totalorder %s26, 0
      %p214 = por %p212, %p213
      %p215 = scmp.ne.s32.totalorder %s207, %s209
      %p216 = scmp.eq.s32.totalorder %s31, 1
      %p217 = por %p215, %p216
      %p218 = scmp.ne.s32.totalorder %s209, %s210
      %p219 = scmp.eq.s32.totalorder %s31, 0
      %p220 = por %p218, %p219
      %p221 = scmp.ne.s32.totalorder %s209, %s210
      %p222 = scmp.eq.s32.totalorder %s32, 1
      %p223 = por %p221, %p222
      %p225 = scmp.ne.s32.totalorder %s210, %s224
      %p226 = scmp.eq.s32.totalorder %s32, 0
      %p227 = por %p225, %p226
      %s229 = sadd.s32 %s228, 1
      %p232 = scmp.eq.s32.totalorder %s26, 1
      %p233 = scmp.ne.s32.totalorder %s228, %s230
      %p234 = scmp.eq.s32.totalorder %s26, 0
      %p235 = por %p233, %p234
      %p236 = scmp.ne.s32.totalorder %s228, %s230
      %p237 = scmp.eq.s32.totalorder %s31, 1
      %p238 = por %p236, %p237
      %p239 = scmp.ne.s32.totalorder %s230, %s231
      %p240 = scmp.eq.s32.totalorder %s31, 0
      %p241 = por %p239, %p240
      %p242 = scmp.ne.s32.totalorder %s230, %s231
      %p243 = scmp.eq.s32.totalorder %s32, 1
      %p244 = por %p242, %p243
      %p246 = scmp.ne.s32.totalorder %s231, %s245
      %p247 = scmp.eq.s32.totalorder %s32, 0
      %p248 = por %p246, %p247
      %s250 = sadd.s32 %s249, 1
      %p253 = scmp.eq.s32.totalorder %s26, 1
      %p254 = scmp.ne.s32.totalorder %s249, %s251
      %p255 = scmp.eq.s32.totalorder %s26, 0
      %p256 = por %p254, %p255
      %p257 = scmp.ne.s32.totalorder %s249, %s251
      %p258 = scmp.eq.s32.totalorder %s31, 1
      %p259 = por %p257, %p258
      %p260 = scmp.ne.s32.totalorder %s251, %s252
      %p261 = scmp.eq.s32.totalorder %s31, 0
      %p262 = por %p260, %p261
      %p263 = scmp.ne.s32.totalorder %s251, %s252
      %p264 = scmp.eq.s32.totalorder %s32, 1
      %p265 = por %p263, %p264
      %p267 = scmp.ne.s32.totalorder %s252, %s266
      %p268 = scmp.eq.s32.totalorder %s32, 0
      %p269 = por %p267, %p268
      %s271 = sadd.s32 %s270, 1
      %p274 = scmp.eq.s32.totalorder %s26, 1
      %p275 = scmp.ne.s32.totalorder %s270, %s272
      %p276 = scmp.eq.s32.totalorder %s26, 0
      %p277 = por %p275, %p276
      %p278 = scmp.ne.s32.totalorder %s270, %s272
      %p279 = scmp.eq.s32.totalorder %s31, 1
      %p280 = por %p278, %p279
      %p281 = scmp.ne.s32.totalorder %s272, %s273
      %p282 = scmp.eq.s32.totalorder %s31, 0
      %p283 = por %p281, %p282
      %p284 = scmp.ne.s32.totalorder %s272, %s273
      %p285 = scmp.eq.s32.totalorder %s32, 1
      %p286 = por %p284, %p285
      %p288 = scmp.ne.s32.totalorder %s273, %s287
      %p289 = scmp.eq.s32.totalorder %s32, 0
      %p290 = por %p288, %p289
      %s292 = sadd.s32 %s291, 1
      %p295 = scmp.eq.s32.totalorder %s26, 1
      %p296 = scmp.ne.s32.totalorder %s291, %s293
      %p297 = scmp.eq.s32.totalorder %s26, 0
      %p298 = por %p296, %p297
      %p299 = scmp.ne.s32.totalorder %s291, %s293
      %p300 = scmp.eq.s32.totalorder %s31, 1
      %p301 = por %p299, %p300
      %p302 = scmp.ne.s32.totalorder %s293, %s294
      %p303 = scmp.eq.s32.totalorder %s31, 0
      %p304 = por %p302, %p303
      %p305 = scmp.ne.s32.totalorder %s293, %s294
      %p306 = scmp.eq.s32.totalorder %s32, 1
      %p307 = por %p305, %p306
      %p309 = scmp.ne.s32.totalorder %s294, %s308
      %p310 = scmp.eq.s32.totalorder %s32, 0
      %p311 = por %p309, %p310
      %s313 = sadd.s32 %s312, 1
      %p316 = scmp.eq.s32.totalorder %s26, 1
      %p317 = scmp.ne.s32.totalorder %s312, %s314
      %p318 = scmp.eq.s32.totalorder %s26, 0
      %p319 = por %p317, %p318
      %p320 = scmp.ne.s32.totalorder %s312, %s314
      %p321 = scmp.eq.s32.totalorder %s31, 1
      %p322 = por %p320, %p321
      %p323 = scmp.ne.s32.totalorder %s314, %s315
      %p324 = scmp.eq.s32.totalorder %s31, 0
      %p325 = por %p323, %p324
      %p326 = scmp.ne.s32.totalorder %s314, %s315
      %p327 = scmp.eq.s32.totalorder %s32, 1
      %p328 = por %p326, %p327
      %p330 = scmp.ne.s32.totalorder %s315, %s329
      %p331 = scmp.eq.s32.totalorder %s32, 0
      %p332 = por %p330, %p331
      %s334 = sadd.s32 %s333, 1
      %p337 = scmp.eq.s32.totalorder %s26, 1
      %p338 = scmp.ne.s32.totalorder %s333, %s335
      %p339 = scmp.eq.s32.totalorder %s26, 0
      %p340 = por %p338, %p339
      %p341 = scmp.ne.s32.totalorder %s333, %s335
      %p342 = scmp.eq.s32.totalorder %s31, 1
      %p343 = por %p341, %p342
      %p344 = scmp.ne.s32.totalorder %s335, %s336
      %p345 = scmp.eq.s32.totalorder %s31, 0
      %p346 = por %p344, %p345
      %p347 = scmp.ne.s32.totalorder %s335, %s336
      %p348 = scmp.eq.s32.totalorder %s32, 1
      %p349 = por %p347, %p348
      %p351 = scmp.ne.s32.totalorder %s336, %s350
      %p352 = scmp.eq.s32.totalorder %s32, 0
      %p353 = por %p351, %p352
      %s355 = sadd.s32 %s354, 1
      %p358 = scmp.eq.s32.totalorder %s26, 1
      %p359 = scmp.ne.s32.totalorder %s354, %s356
      %p360 = scmp.eq.s32.totalorder %s26, 0
      %p361 = por %p359, %p360
      %p362 = scmp.ne.s32.totalorder %s354, %s356
      %p363 = scmp.eq.s32.totalorder %s31, 1
      %p364 = por %p362, %p363
      %p365 = scmp.ne.s32.totalorder %s356, %s357
      %p366 = scmp.eq.s32.totalorder %s31, 0
      %p367 = por %p365, %p366
      %p368 = scmp.ne.s32.totalorder %s356, %s357
      %p369 = scmp.eq.s32.totalorder %s32, 1
      %p370 = por %p368, %p369
      %p372 = scmp.ne.s32.totalorder %s357, %s371
      %p373 = scmp.eq.s32.totalorder %s32, 0
      %p374 = por %p372, %p373
      %s376 = sadd.s32 %s375, 1
      %p379 = scmp.eq.s32.totalorder %s26, 1
      %p380 = scmp.ne.s32.totalorder %s375, %s377
      %p381 = scmp.eq.s32.totalorder %s26, 0
      %p382 = por %p380, %p381
      %p383 = scmp.ne.s32.totalorder %s375, %s377
      %p384 = scmp.eq.s32.totalorder %s31, 1
      %p385 = por %p383, %p384
      %p386 = scmp.ne.s32.totalorder %s377, %s378
      %p387 = scmp.eq.s32.totalorder %s31, 0
      %p388 = por %p386, %p387
      %p389 = scmp.ne.s32.totalorder %s377, %s378
      %p390 = scmp.eq.s32.totalorder %s32, 1
      %p391 = por %p389, %p390
      %p393 = scmp.ne.s32.totalorder %s378, %s392
      %p394 = scmp.eq.s32.totalorder %s32, 0
      %p395 = por %p393, %p394
      %s396 = ssub.s32 %s26, %s33
      %p397 = scmp.eq.s32.totalorder %s396, 0
      %s399 = sadd.s32 %s398, 1
      %s400 = scalar_select %p397, %s398, %s399
      %p403 = pneg %p397
      %p404 = scmp.eq.s32.totalorder %s26, 1
      %p405 = por %p403, %p404
      %p406 = scmp.ne.s32.totalorder %s398, %s401
      %p407 = scmp.eq.s32.totalorder %s26, 0
      %p408 = por %p406, %p407
      %p409 = scmp.ne.s32.totalorder %s398, %s401
      %p410 = scmp.eq.s32.totalorder %s31, 1
      %p411 = por %p409, %p410
      %p412 = scmp.ne.s32.totalorder %s401, %s402
      %p413 = scmp.eq.s32.totalorder %s31, 0
      %p414 = por %p412, %p413
      %p415 = scmp.ne.s32.totalorder %s401, %s402
      %p416 = scmp.eq.s32.totalorder %s32, 1
      %p417 = por %p415, %p416
      %p419 = scmp.ne.s32.totalorder %s402, %s418
      %p420 = scmp.eq.s32.totalorder %s32, 0
      %p421 = por %p419, %p420
      %p422 = scmp.le.s32.totalorder 1, %s26
      %p423 = scmp.lt.s32.totalorder %s26, 3
      %p424 = pnand %p422, %p423
      %p425 = pneg %p424
      // Predicated region
      $region9: #{tpu_custom_call.1} parent=5 // pred_check
        _
      $region10: #{tpu_custom_call.1} parent=5 // pred_check_branch
        %427 = sbr.rel (%p424) target = $region12
      $region11: #{tpu_custom_call.1} parent=5 // pred_region
        %s428 = ssub.s32 %s26, 1
        // Predicated region
        $region13: #{tpu_custom_call.1} parent=11 // pred_check
          %p429 = pneg %p73
        $region14: #{tpu_custom_call.1} parent=11 // pred_check_branch
          %431 = sbr.rel (%p429) target = $region16
        $region15: #{tpu_custom_call.1} parent=11 // pred_region
          _
        $region16: #{tpu_custom_call.1} parent=11 // pred_fallthru
          _
        // Predicated region
        $region17: #{tpu_custom_call.1} parent=11 // pred_check
          %p432 = pneg %p94
        $region18: #{tpu_custom_call.1} parent=11 // pred_check_branch
          %434 = sbr.rel (%p432) target = $region20
        $region19: #{tpu_custom_call.1} parent=11 // pred_region
          _
        $region20: #{tpu_custom_call.1} parent=11 // pred_fallthru
          _
        // Predicated region
        $region21: #{tpu_custom_call.1} parent=11 // pred_check
          %p435 = pneg %p115
        $region22: #{tpu_custom_call.1} parent=11 // pred_check_branch
          %437 = sbr.rel (%p435) target = $region24
        $region23: #{tpu_custom_call.1} parent=11 // pred_region
          _
        $region24: #{tpu_custom_call.1} parent=11 // pred_fallthru
          _
        // Predicated region
        $region25: #{tpu_custom_call.1} parent=11 // pred_check
          %p438 = pneg %p136
        $region26: #{tpu_custom_call.1} parent=11 // pred_check_branch
          %440 = sbr.rel (%p438) target = $region28
        $region27: #{tpu_custom_call.1} parent=11 // pred_region
          _
        $region28: #{tpu_custom_call.1} parent=11 // pred_fallthru
          _
        // Predicated region
        $region29: #{tpu_custom_call.1} parent=11 // pred_check
          %p441 = pneg %p157
        $region30: #{tpu_custom_call.1} parent=11 // pred_check_branch
          %443 = sbr.rel (%p441) target = $region32
        $region31: #{tpu_custom_call.1} parent=11 // pred_region
          _
        $region32: #{tpu_custom_call.1} parent=11 // pred_fallthru
          _
        // Predicated region
        $region33: #{tpu_custom_call.1} parent=11 // pred_check
          %p444 = pneg %p178
        $region34: #{tpu_custom_call.1} parent=11 // pred_check_branch
          %446 = sbr.rel (%p444) target = $region36
        $region35: #{tpu_custom_call.1} parent=11 // pred_region
          _
        $region36: #{tpu_custom_call.1} parent=11 // pred_fallthru
          _
        // Predicated region
        $region37: #{tpu_custom_call.1} parent=11 // pred_check
          %p447 = pneg %p199
        $region38: #{tpu_custom_call.1} parent=11 // pred_check_branch
          %449 = sbr.rel (%p447) target = $region40
        $region39: #{tpu_custom_call.1} parent=11 // pred_region
          _
        $region40: #{tpu_custom_call.1} parent=11 // pred_fallthru
          _
        // Predicated region
        $region41: #{tpu_custom_call.1} parent=11 // pred_check
          %p450 = pneg %p220
        $region42: #{tpu_custom_call.1} parent=11 // pred_check_branch
          %452 = sbr.rel (%p450) target = $region44
        $region43: #{tpu_custom_call.1} parent=11 // pred_region
          _
        $region44: #{tpu_custom_call.1} parent=11 // pred_fallthru
          _
        // Predicated region
        $region45: #{tpu_custom_call.1} parent=11 // pred_check
          %p453 = pneg %p241
        $region46: #{tpu_custom_call.1} parent=11 // pred_check_branch
          %455 = sbr.rel (%p453) target = $region48
        $region47: #{tpu_custom_call.1} parent=11 // pred_region
          _
        $region48: #{tpu_custom_call.1} parent=11 // pred_fallthru
          _
        // Predicated region
        $region49: #{tpu_custom_call.1} parent=11 // pred_check
          %p456 = pneg %p262
        $region50: #{tpu_custom_call.1} parent=11 // pred_check_branch
          %458 = sbr.rel (%p456) target = $region52
        $region51: #{tpu_custom_call.1} parent=11 // pred_region
          _
        $region52: #{tpu_custom_call.1} parent=11 // pred_fallthru
          _
        // Predicated region
        $region53: #{tpu_custom_call.1} parent=11 // pred_check
          %p459 = pneg %p283
        $region54: #{tpu_custom_call.1} parent=11 // pred_check_branch
          %461 = sbr.rel (%p459) target = $region56
        $region55: #{tpu_custom_call.1} parent=11 // pred_region
          _
        $region56: #{tpu_custom_call.1} parent=11 // pred_fallthru
          _
        // Predicated region
        $region57: #{tpu_custom_call.1} parent=11 // pred_check
          %p462 = pneg %p304
        $region58: #{tpu_custom_call.1} parent=11 // pred_check_branch
          %464 = sbr.rel (%p462) target = $region60
        $region59: #{tpu_custom_call.1} parent=11 // pred_region
          _
        $region60: #{tpu_custom_call.1} parent=11 // pred_fallthru
          _
        // Predicated region
        $region61: #{tpu_custom_call.1} parent=11 // pred_check
          %p465 = pneg %p325
        $region62: #{tpu_custom_call.1} parent=11 // pred_check_branch
          %467 = sbr.rel (%p465) target = $region64
        $region63: #{tpu_custom_call.1} parent=11 // pred_region
          _
        $region64: #{tpu_custom_call.1} parent=11 // pred_fallthru
          _
        // Predicated region
        $region65: #{tpu_custom_call.1} parent=11 // pred_check
          %p468 = pneg %p346
        $region66: #{tpu_custom_call.1} parent=11 // pred_check_branch
          %470 = sbr.rel (%p468) target = $region68
        $region67: #{tpu_custom_call.1} parent=11 // pred_region
          _
        $region68: #{tpu_custom_call.1} parent=11 // pred_fallthru
          _
        // Predicated region
        $region69: #{tpu_custom_call.1} parent=11 // pred_check
          %p471 = pneg %p367
        $region70: #{tpu_custom_call.1} parent=11 // pred_check_branch
          %473 = sbr.rel (%p471) target = $region72
        $region71: #{tpu_custom_call.1} parent=11 // pred_region
          _
        $region72: #{tpu_custom_call.1} parent=11 // pred_fallthru
          _
        // Predicated region
        $region73: #{tpu_custom_call.1} parent=11 // pred_check
          %p474 = pneg %p388
        $region74: #{tpu_custom_call.1} parent=11 // pred_check_branch
          %476 = sbr.rel (%p474) target = $region76
        $region75: #{tpu_custom_call.1} parent=11 // pred_region
          _
        $region76: #{tpu_custom_call.1} parent=11 // pred_fallthru
          _
      $region12: #{tpu_custom_call.1} parent=5 // pred_fallthru
        _
      %p477 = scmp.lt.s32.totalorder %s26, 2
      // Predicated region
      $region77: #{tpu_custom_call.1} parent=5 // pred_check
        %p478 = pneg %p477
      $region78: #{tpu_custom_call.1} parent=5 // pred_check_branch
        %480 = sbr.rel (%p478) target = $region80
      $region79: #{tpu_custom_call.1} parent=5 // pred_region
        // Predicated region
        $region81: #{tpu_custom_call.1} parent=79 // pred_check
          %p481 = pneg %p46
        $region82: #{tpu_custom_call.1} parent=79 // pred_check_branch
          %483 = sbr.rel (%p481) target = $region84
        $region83: #{tpu_custom_call.1} parent=79 // pred_region
          %p484 = scmp.lt.s32.totalorder %s26, 1
          %s485 = scalar_select %p484, %s26, 1
          %s486 = smul.addr %s485, 8
          %s487 = scalar_lea.vmem %s0, %s486
        $region84: #{tpu_custom_call.1} parent=79 // pred_fallthru
          _
      $region80: #{tpu_custom_call.1} parent=5 // pred_fallthru
        _
      %p488 = scmp.le.s32.totalorder 1, %s26
      %p489 = scmp.lt.s32.totalorder %s26, 3
      %p490 = pnand %p488, %p489
      %p491 = pneg %p490
      // Predicated region
      $region85: #{tpu_custom_call.1} parent=5 // pred_check
        _
      $region86: #{tpu_custom_call.1} parent=5 // pred_check_branch
        %493 = sbr.rel (%p490) target = $region88
      $region87: #{tpu_custom_call.1} parent=5 // pred_region
        %s494 = ssub.s32 %s26, 1
        %p495 = scmp.lt.s32.totalorder %s31, 1
        %s496 = scalar_select %p495, %s31, 1
        %s497 = smul.addr %s496, 8
        %s498 = scalar_lea.vmem %s0, %s497
        %p499 = pneg %p52
        %p500 = pneg %p49
        %p501 = pneg %p73
        %p502 = pneg %p70
        %p503 = pneg %p94
        %p504 = pneg %p91
        %p505 = pneg %p115
        %p506 = pneg %p112
        %p507 = pneg %p136
        %p508 = pneg %p133
        %p509 = pneg %p157
        %p510 = pneg %p154
        %p511 = pneg %p178
        %p512 = pneg %p175
        %p513 = pneg %p199
        %p514 = pneg %p196
        %p515 = pneg %p220
        %p516 = pneg %p217
        %p517 = pneg %p241
        %p518 = pneg %p238
        %p519 = pneg %p262
        %p520 = pneg %p259
        %p521 = pneg %p283
        %p522 = pneg %p280
        %p523 = pneg %p304
        %p524 = pneg %p301
        %p525 = pneg %p325
        %p526 = pneg %p322
        %p527 = pneg %p346
        %p528 = pneg %p343
        %p529 = pneg %p367
        %p530 = pneg %p364
        %p531 = pneg %p388
        %p532 = pneg %p385
        %p533 = pneg %p414
        %p534 = pneg %p411
        %s535 = sand.u32 %s401, 1
        %s536 = scalar_lea.sflag [#allocation3], %s535
        %s537 = sand.u32 %s401, 1
        %s538 = smul.addr %s537, 4
        %s539 = scalar_lea.vmem [#allocation2], %s538
        %p540 = scmp.lt.s32.totalorder %s31, 1
        %s541 = scalar_select %p540, %s31, 1
        %s542 = smul.addr %s541, 8
        %s543 = scalar_lea.vmem %s0, %s542
        %v545 = vld [vmem:[%s543] sm:$0xff]
        %v546 = vld [vmem:[%s1] sm:$0xf]
        %v547 = vld [vmem:[%s1 + $0x4] sm:$0xf]
        %v548 = vld [vmem:[%s1 + $0x8] sm:$0xf]
        %v549 = vld [vmem:[%s1 + $0xc] sm:$0xf]
        %v550 = vld [vmem:[%s1 + $0x10] sm:$0xf]
        %v551 = vld [vmem:[%s1 + $0x14] sm:$0xf]
        %v552 = vld [vmem:[%s1 + $0x18] sm:$0xf]
        %v553 = vld [vmem:[%s1 + $0x1c] sm:$0xf]
        %v554 = vld [vmem:[%s1 + $0x20] sm:$0xf]
        %v555 = vld [vmem:[%s1 + $0x24] sm:$0xf]
        %v556 = vld [vmem:[%s1 + $0x28] sm:$0xf]
        %v557 = vld [vmem:[%s1 + $0x2c] sm:$0xf]
        %v558 = vld [vmem:[%s1 + $0x30] sm:$0xf]
        %v559 = vld [vmem:[%s1 + $0x34] sm:$0xf]
        %v560 = vld [vmem:[%s1 + $0x38] sm:$0xf]
        %v561 = vld [vmem:[%s1 + $0x3c] sm:$0xf]
        %v562 = vld [vmem:[%s2] sm:$0xf]
        %v563 = vld [vmem:[%s2 + $0x4] sm:$0xf]
        %v564 = vld [vmem:[%s2 + $0x8] sm:$0xf]
        %v565 = vld [vmem:[%s2 + $0xc] sm:$0xf]
        %v566 = vld [vmem:[%s2 + $0x10] sm:$0xf]
        %v567 = vld [vmem:[%s2 + $0x14] sm:$0xf]
        %v568 = vld [vmem:[%s2 + $0x18] sm:$0xf]
        %v569 = vld [vmem:[%s2 + $0x1c] sm:$0xf]
        %v570 = vld [vmem:[%s2 + $0x20] sm:$0xf]
        %v571 = vld [vmem:[%s2 + $0x24] sm:$0xf]
        %v572 = vld [vmem:[%s2 + $0x28] sm:$0xf]
        %v573 = vld [vmem:[%s2 + $0x2c] sm:$0xf]
        %v574 = vld [vmem:[%s2 + $0x30] sm:$0xf]
        %v575 = vld [vmem:[%s2 + $0x34] sm:$0xf]
        %v576 = vld [vmem:[%s2 + $0x38] sm:$0xf]
        %v577 = vld [vmem:[%s2 + $0x3c] sm:$0xf]
        %v578 = vld [vmem:[%s3] sm:$0xf]
        %v579 = vld [vmem:[%s3 + $0x4] sm:$0xf]
        %v580 = vld [vmem:[%s3 + $0x8] sm:$0xf]
        %v581 = vld [vmem:[%s3 + $0xc] sm:$0xf]
        %v582 = vld [vmem:[%s3 + $0x10] sm:$0xf]
        %v583 = vld [vmem:[%s3 + $0x14] sm:$0xf]
        %v584 = vld [vmem:[%s3 + $0x18] sm:$0xf]
        %v585 = vld [vmem:[%s3 + $0x1c] sm:$0xf]
        %v586 = vld [vmem:[%s3 + $0x20] sm:$0xf]
        %v587 = vld [vmem:[%s3 + $0x24] sm:$0xf]
        %v588 = vld [vmem:[%s3 + $0x28] sm:$0xf]
        %v589 = vld [vmem:[%s3 + $0x2c] sm:$0xf]
        %v590 = vld [vmem:[%s3 + $0x30] sm:$0xf]
        %v591 = vld [vmem:[%s3 + $0x34] sm:$0xf]
        %v592 = vld [vmem:[%s3 + $0x38] sm:$0xf]
        %v593 = vld [vmem:[%s3 + $0x3c] sm:$0xf]
        %v594 = vld [vmem:[%s7] sm:$0xf]
        %v595 = vld [vmem:[%s7 + $0x4] sm:$0xf]
        %v596 = vld [vmem:[%s7 + $0x8] sm:$0xf]
        %v597 = vld [vmem:[%s7 + $0xc] sm:$0xf]
        %v598 = vld [vmem:[%s13] sm:$0xf]
        %v599 = vld [vmem:[%s13 + $0x4] sm:$0xf]
        %v600 = vld [vmem:[%s13 + $0x8] sm:$0xf]
        %v601 = vld [vmem:[%s13 + $0xc] sm:$0xf]
        %v602 = vld [vmem:[%s15] sm:$0xf]
        %v603 = vld [vmem:[%s15 + $0x4] sm:$0xf]
        %v604 = vld [vmem:[%s15 + $0x8] sm:$0xf]
        %v605 = vld [vmem:[%s15 + $0xc] sm:$0xf]
        %v606 = vld [vmem:[%s15 + $0x10] sm:$0xf]
        %v607 = vld [vmem:[%s15 + $0x14] sm:$0xf]
        %v608 = vld [vmem:[%s15 + $0x18] sm:$0xf]
        %v609 = vld [vmem:[%s15 + $0x1c] sm:$0xf]
        %v610 = vld [vmem:[%s9] sm:$0x1]
        %v612 = vlaneseq
        %v613 = vshrl.u32 %v612, 7
        %v614 = vsub.s32 0, %v613
        %v615 = vrot.slane %v610, %v614
        %v617 = vld [vmem:[%s10] sm:$0x1]
        %v619 = vlaneseq
        %v620 = vshrl.u32 %v619, 7
        %v621 = vsub.s32 0, %v620
        %v622 = vrot.slane %v617, %v621
        %v624 = vld [vmem:[%s11] sm:$0x1]
        %v626 = vlaneseq
        %v627 = vshrl.u32 %v626, 7
        %v628 = vsub.s32 0, %v627
        %v629 = vrot.slane %v624, %v628
        %v631 = vld [vmem:[%s12] sm:$0x1]
        %v633 = vlaneseq
        %v634 = vshrl.u32 %v633, 7
        %v635 = vsub.s32 0, %v634
        %v636 = vrot.slane %v631, %v635
        %v638 = vld [vmem:[%s4] sm:$0x1]
        %v639 = vld [vmem:[%s4 + $0x1] sm:$0x1]
        %v640 = vld [vmem:[%s4 + $0x2] sm:$0x1]
        %v641 = vld [vmem:[%s4 + $0x3] sm:$0x1]
        %v646 = vlaneseq
        %v647 = vshrl.u32 %v646, 7
        %v648 = vsub.s32 0, %v647
        %v649 = vrot.slane %v638, %v648
        %v650 = vlaneseq
        %v651 = vshrl.u32 %v650, 7
        %v652 = vsub.s32 0, %v651
        %v653 = vrot.slane %v639, %v652
        %v654 = vlaneseq
        %v655 = vshrl.u32 %v654, 7
        %v656 = vsub.s32 0, %v655
        %v657 = vrot.slane %v640, %v656
        %v658 = vlaneseq
        %v659 = vshrl.u32 %v658, 7
        %v660 = vsub.s32 0, %v659
        %v661 = vrot.slane %v641, %v660
        %v666 = vld [vmem:[%s5] sm:$0x1]
        %v667 = vld [vmem:[%s5 + $0x1] sm:$0x1]
        %v668 = vld [vmem:[%s5 + $0x2] sm:$0x1]
        %v669 = vld [vmem:[%s5 + $0x3] sm:$0x1]
        %v674 = vlaneseq
        %v675 = vshrl.u32 %v674, 7
        %v676 = vsub.s32 0, %v675
        %v677 = vrot.slane %v666, %v676
        %v678 = vlaneseq
        %v679 = vshrl.u32 %v678, 7
        %v680 = vsub.s32 0, %v679
        %v681 = vrot.slane %v667, %v680
        %v682 = vlaneseq
        %v683 = vshrl.u32 %v682, 7
        %v684 = vsub.s32 0, %v683
        %v685 = vrot.slane %v668, %v684
        %v686 = vlaneseq
        %v687 = vshrl.u32 %v686, 7
        %v688 = vsub.s32 0, %v687
        %v689 = vrot.slane %v669, %v688
        %v694 = vld [vmem:[%s6] sm:$0x1]
        %v695 = vld [vmem:[%s6 + $0x1] sm:$0x1]
        %v696 = vld [vmem:[%s6 + $0x2] sm:$0x1]
        %v697 = vld [vmem:[%s6 + $0x3] sm:$0x1]
        %v702 = vlaneseq
        %v703 = vshrl.u32 %v702, 7
        %v704 = vsub.s32 0, %v703
        %v705 = vrot.slane %v694, %v704
        %v706 = vlaneseq
        %v707 = vshrl.u32 %v706, 7
        %v708 = vsub.s32 0, %v707
        %v709 = vrot.slane %v695, %v708
        %v710 = vlaneseq
        %v711 = vshrl.u32 %v710, 7
        %v712 = vsub.s32 0, %v711
        %v713 = vrot.slane %v696, %v712
        %v714 = vlaneseq
        %v715 = vshrl.u32 %v714, 7
        %v716 = vsub.s32 0, %v715
        %v717 = vrot.slane %v697, %v716
        %v722 = vld [vmem:[%s8] sm:$0x1]
        %v724 = vlaneseq
        %v725 = vshrl.u32 %v724, 7
        %v726 = vsub.s32 0, %v725
        %v727 = vrot.slane %v722, %v726
        %v729 = vld [vmem:[%s14] sm:$0x1]
        %v731 = vlaneseq
        %v732 = vshrl.u32 %v731, 7
        %v733 = vsub.s32 0, %v732
        %v734 = vrot.slane %v729, %v733
        %v736 = vld [vmem:[%s16] sm:$0x1]
        %v738 = vlaneseq
        %v739 = vshrl.u32 %v738, 7
        %v740 = vsub.s32 0, %v739
        %v741 = vrot.slane %v736, %v740
        loop: start=0, step=1, limit=2
        $region89: #{tpu_custom_call.1} parent=87 // loop_pre_header
          _
        $region90: #{tpu_custom_call.1} parent=87 // loop_header
          %s744 = sphi 0, %s748
          %p745 = scmp.ge.s32.totalorder %s744, 2
          %v749 = vphi %v545, %v2163
        $region91: #{tpu_custom_call.1} parent=87 // loop_header_branch
          %747 = sbr.rel (%p745) target = $region95
        $region92: #{tpu_custom_call.1} parent=87 // loop_body
          %vm750 = vcmask 261120
          %v751 = vsel %vm750, %v749, 0.0
          %752 = vadd.xlane.f32.xlu0 %v751
          %v753 = vpop.xlane.xlu0 %752
          %v754 = vrcp.pop 32.0
          %v755 = vmul.f32 %v753, %v754
          %v756 = vsub.f32 %v749, %v755
          %v757 = vmul.f32 %v756, %v756
          %v758 = vsel %vm750, %v757, 0.0
          %759 = vadd.xlane.f32.xlu0 %v758
          %v760 = vpop.xlane.xlu0 %759
          %v761 = vmul.f32 %v760, %v754
          %v762 = vadd.f32 %v761, 1e-05
          %v763 = vrsqrt.pop %v762
          %v764 = vmul.f32 %v756, %v763
          %v765 = vmul.f32 %v764, %v615
          %v766 = vadd.f32 %v765, %v622
          %v767 = vpack.c.bf16 %v766, %v766
          %v772 = vunpack.c.l.b16 %v546
          %v773 = vunpack.c.l.b16 %v547
          %v774 = vunpack.c.l.b16 %v548
          %v775 = vunpack.c.l.b16 %v549
          %v776 = vpack.c.b16 %v773, %v772
          %v777 = vpack.c.b16 %v775, %v774
          %v781 = vsel %vm750, %v767, 0
          %783 = vmatprep.subr.bf16.mxu0 0
          %784 = vmatpush1.bf16.msra.mxu0 %v776
          %785 = vmatprep.subr.bf16.mxu0 0
          %786 = vmatpush1.bf16.msra.mxu0 %v777
          %787 = vmatprep.subr.bf16.mxu0 0
          %788 = vmatpush1.bf16.msra.mxu0 0
          %789 = vmatprep.subr.bf16.mxu0 0
          %790 = vmatpush1.bf16.msra.mxu0 0
          %791 = vmatprep.subr.bf16.mxu0 0
          %792 = vmatpush1.bf16.msra.mxu0 0
          %793 = vmatprep.subr.bf16.mxu0 0
          %794 = vmatpush1.bf16.msra.mxu0 0
          %795 = vmatprep.subr.bf16.mxu0 0
          %796 = vmatpush1.bf16.msra.mxu0 0
          %797 = vmatprep.subr.bf16.mxu0 0
          %798 = vmatpush1.bf16.msra.mxu0 0
          %799 = vmatprep.subr.bf16.mxu0 0
          %800 = vmatpush1.bf16.msra.mxu0 0
          %801 = vmatprep.subr.bf16.mxu0 0
          %802 = vmatpush1.bf16.msra.mxu0 0
          %803 = vmatprep.subr.bf16.mxu0 0
          %804 = vmatpush1.bf16.msra.mxu0 0
          %805 = vmatprep.subr.bf16.mxu0 0
          %806 = vmatpush1.bf16.msra.mxu0 0
          %807 = vmatprep.subr.bf16.mxu0 0
          %808 = vmatpush1.bf16.msra.mxu0 0
          %809 = vmatprep.subr.bf16.mxu0 0
          %810 = vmatpush1.bf16.msra.mxu0 0
          %811 = vmatprep.subr.bf16.mxu0 0
          %812 = vmatpush1.bf16.msra.mxu0 0
          %813 = vmatprep.subr.bf16.mxu0 0
          %814 = vmatpush1.bf16.msra.mxu0 0
          %815 = vmatprep.mubr.bf16.mxu0 0
          %816 = vmatmul.mubr.bf16.gmra.mrb[0].mxu0 %v781
          %v817 = vpop.f32.mrb[0].mxu0
          %v818 = vadd.f32 %v649, %v817
          %v819 = vpop.f32.mrb[0].mxu0
          %v820 = vpop.f32.mrb[0].mxu0
          %v821 = vpop.f32.mrb[0].mxu0
          %822 = vdwg.mxu0
          %v827 = vunpack.c.l.b16 %v550
          %v828 = vunpack.c.l.b16 %v551
          %v829 = vunpack.c.l.b16 %v552
          %v830 = vunpack.c.l.b16 %v553
          %v831 = vpack.c.b16 %v828, %v827
          %v832 = vpack.c.b16 %v830, %v829
          %835 = vmatprep.subr.bf16.mxu0 0
          %836 = vmatpush1.bf16.msra.mxu0 %v831
          %837 = vmatprep.subr.bf16.mxu0 0
          %838 = vmatpush1.bf16.msra.mxu0 %v832
          %839 = vmatprep.subr.bf16.mxu0 0
          %840 = vmatpush1.bf16.msra.mxu0 0
          %841 = vmatprep.subr.bf16.mxu0 0
          %842 = vmatpush1.bf16.msra.mxu0 0
          %843 = vmatprep.subr.bf16.mxu0 0
          %844 = vmatpush1.bf16.msra.mxu0 0
          %845 = vmatprep.subr.bf16.mxu0 0
          %846 = vmatpush1.bf16.msra.mxu0 0
          %847 = vmatprep.subr.bf16.mxu0 0
          %848 = vmatpush1.bf16.msra.mxu0 0
          %849 = vmatprep.subr.bf16.mxu0 0
          %850 = vmatpush1.bf16.msra.mxu0 0
          %851 = vmatprep.subr.bf16.mxu0 0
          %852 = vmatpush1.bf16.msra.mxu0 0
          %853 = vmatprep.subr.bf16.mxu0 0
          %854 = vmatpush1.bf16.msra.mxu0 0
          %855 = vmatprep.subr.bf16.mxu0 0
          %856 = vmatpush1.bf16.msra.mxu0 0
          %857 = vmatprep.subr.bf16.mxu0 0
          %858 = vmatpush1.bf16.msra.mxu0 0
          %859 = vmatprep.subr.bf16.mxu0 0
          %860 = vmatpush1.bf16.msra.mxu0 0
          %861 = vmatprep.subr.bf16.mxu0 0
          %862 = vmatpush1.bf16.msra.mxu0 0
          %863 = vmatprep.subr.bf16.mxu0 0
          %864 = vmatpush1.bf16.msra.mxu0 0
          %865 = vmatprep.subr.bf16.mxu0 0
          %866 = vmatpush1.bf16.msra.mxu0 0
          %867 = vmatprep.mubr.bf16.mxu0 0
          %868 = vmatmul.mubr.bf16.gmra.mrb[0].mxu0 %v781
          %v869 = vpop.f32.mrb[0].mxu0
          %v870 = vadd.f32 %v653, %v869
          %v871 = vpop.f32.mrb[0].mxu0
          %v872 = vpop.f32.mrb[0].mxu0
          %v873 = vpop.f32.mrb[0].mxu0
          %874 = vdwg.mxu0
          %v879 = vunpack.c.l.b16 %v554
          %v880 = vunpack.c.l.b16 %v555
          %v881 = vunpack.c.l.b16 %v556
          %v882 = vunpack.c.l.b16 %v557
          %v883 = vpack.c.b16 %v880, %v879
          %v884 = vpack.c.b16 %v882, %v881
          %887 = vmatprep.subr.bf16.mxu0 0
          %888 = vmatpush1.bf16.msra.mxu0 %v883
          %889 = vmatprep.subr.bf16.mxu0 0
          %890 = vmatpush1.bf16.msra.mxu0 %v884
          %891 = vmatprep.subr.bf16.mxu0 0
          %892 = vmatpush1.bf16.msra.mxu0 0
          %893 = vmatprep.subr.bf16.mxu0 0
          %894 = vmatpush1.bf16.msra.mxu0 0
          %895 = vmatprep.subr.bf16.mxu0 0
          %896 = vmatpush1.bf16.msra.mxu0 0
          %897 = vmatprep.subr.bf16.mxu0 0
          %898 = vmatpush1.bf16.msra.mxu0 0
          %899 = vmatprep.subr.bf16.mxu0 0
          %900 = vmatpush1.bf16.msra.mxu0 0
          %901 = vmatprep.subr.bf16.mxu0 0
          %902 = vmatpush1.bf16.msra.mxu0 0
          %903 = vmatprep.subr.bf16.mxu0 0
          %904 = vmatpush1.bf16.msra.mxu0 0
          %905 = vmatprep.subr.bf16.mxu0 0
          %906 = vmatpush1.bf16.msra.mxu0 0
          %907 = vmatprep.subr.bf16.mxu0 0
          %908 = vmatpush1.bf16.msra.mxu0 0
          %909 = vmatprep.subr.bf16.mxu0 0
          %910 = vmatpush1.bf16.msra.mxu0 0
          %911 = vmatprep.subr.bf16.mxu0 0
          %912 = vmatpush1.bf16.msra.mxu0 0
          %913 = vmatprep.subr.bf16.mxu0 0
          %914 = vmatpush1.bf16.msra.mxu0 0
          %915 = vmatprep.subr.bf16.mxu0 0
          %916 = vmatpush1.bf16.msra.mxu0 0
          %917 = vmatprep.subr.bf16.mxu0 0
          %918 = vmatpush1.bf16.msra.mxu0 0
          %919 = vmatprep.mubr.bf16.mxu0 0
          %920 = vmatmul.mubr.bf16.gmra.mrb[0].mxu0 %v781
          %v921 = vpop.f32.mrb[0].mxu0
          %v922 = vadd.f32 %v657, %v921
          %v923 = vpop.f32.mrb[0].mxu0
          %v924 = vpop.f32.mrb[0].mxu0
          %v925 = vpop.f32.mrb[0].mxu0
          %926 = vdwg.mxu0
          %v931 = vunpack.c.l.b16 %v558
          %v932 = vunpack.c.l.b16 %v559
          %v933 = vunpack.c.l.b16 %v560
          %v934 = vunpack.c.l.b16 %v561
          %v935 = vpack.c.b16 %v932, %v931
          %v936 = vpack.c.b16 %v934, %v933
          %939 = vmatprep.subr.bf16.mxu0 0
          %940 = vmatpush1.bf16.msra.mxu0 %v935
          %941 = vmatprep.subr.bf16.mxu0 0
          %942 = vmatpush1.bf16.msra.mxu0 %v936
          %943 = vmatprep.subr.bf16.mxu0 0
          %944 = vmatpush1.bf16.msra.mxu0 0
          %945 = vmatprep.subr.bf16.mxu0 0
          %946 = vmatpush1.bf16.msra.mxu0 0
          %947 = vmatprep.subr.bf16.mxu0 0
          %948 = vmatpush1.bf16.msra.mxu0 0
          %949 = vmatprep.subr.bf16.mxu0 0
          %950 = vmatpush1.bf16.msra.mxu0 0
          %951 = vmatprep.subr.bf16.mxu0 0
          %952 = vmatpush1.bf16.msra.mxu0 0
          %953 = vmatprep.subr.bf16.mxu0 0
          %954 = vmatpush1.bf16.msra.mxu0 0
          %955 = vmatprep.subr.bf16.mxu0 0
          %956 = vmatpush1.bf16.msra.mxu0 0
          %957 = vmatprep.subr.bf16.mxu0 0
          %958 = vmatpush1.bf16.msra.mxu0 0
          %959 = vmatprep.subr.bf16.mxu0 0
          %960 = vmatpush1.bf16.msra.mxu0 0
          %961 = vmatprep.subr.bf16.mxu0 0
          %962 = vmatpush1.bf16.msra.mxu0 0
          %963 = vmatprep.subr.bf16.mxu0 0
          %964 = vmatpush1.bf16.msra.mxu0 0
          %965 = vmatprep.subr.bf16.mxu0 0
          %966 = vmatpush1.bf16.msra.mxu0 0
          %967 = vmatprep.subr.bf16.mxu0 0
          %968 = vmatpush1.bf16.msra.mxu0 0
          %969 = vmatprep.subr.bf16.mxu0 0
          %970 = vmatpush1.bf16.msra.mxu0 0
          %971 = vmatprep.mubr.bf16.mxu0 0
          %972 = vmatmul.mubr.bf16.gmra.mrb[0].mxu0 %v781
          %v973 = vpop.f32.mrb[0].mxu0
          %v974 = vadd.f32 %v661, %v973
          %v975 = vpop.f32.mrb[0].mxu0
          %v976 = vpop.f32.mrb[0].mxu0
          %v977 = vpop.f32.mrb[0].mxu0
          %978 = vdwg.mxu0
          %v983 = vunpack.c.l.b16 %v562
          %v984 = vunpack.c.l.b16 %v563
          %v985 = vunpack.c.l.b16 %v564
          %v986 = vunpack.c.l.b16 %v565
          %v987 = vpack.c.b16 %v984, %v983
          %v988 = vpack.c.b16 %v986, %v985
          %991 = vmatprep.subr.bf16.mxu0 0
          %992 = vmatpush1.bf16.msra.mxu0 %v987
          %993 = vmatprep.subr.bf16.mxu0 0
          %994 = vmatpush1.bf16.msra.mxu0 %v988
          %995 = vmatprep.subr.bf16.mxu0 0
          %996 = vmatpush1.bf16.msra.mxu0 0
          %997 = vmatprep.subr.bf16.mxu0 0
          %998 = vmatpush1.bf16.msra.mxu0 0
          %999 = vmatprep.subr.bf16.mxu0 0
          %1000 = vmatpush1.bf16.msra.mxu0 0
          %1001 = vmatprep.subr.bf16.mxu0 0
          %1002 = vmatpush1.bf16.msra.mxu0 0
          %1003 = vmatprep.subr.bf16.mxu0 0
          %1004 = vmatpush1.bf16.msra.mxu0 0
          %1005 = vmatprep.subr.bf16.mxu0 0
          %1006 = vmatpush1.bf16.msra.mxu0 0
          %1007 = vmatprep.subr.bf16.mxu0 0
          %1008 = vmatpush1.bf16.msra.mxu0 0
          %1009 = vmatprep.subr.bf16.mxu0 0
          %1010 = vmatpush1.bf16.msra.mxu0 0
          %1011 = vmatprep.subr.bf16.mxu0 0
          %1012 = vmatpush1.bf16.msra.mxu0 0
          %1013 = vmatprep.subr.bf16.mxu0 0
          %1014 = vmatpush1.bf16.msra.mxu0 0
          %1015 = vmatprep.subr.bf16.mxu0 0
          %1016 = vmatpush1.bf16.msra.mxu0 0
          %1017 = vmatprep.subr.bf16.mxu0 0
          %1018 = vmatpush1.bf16.msra.mxu0 0
          %1019 = vmatprep.subr.bf16.mxu0 0
          %1020 = vmatpush1.bf16.msra.mxu0 0
          %1021 = vmatprep.subr.bf16.mxu0 0
          %1022 = vmatpush1.bf16.msra.mxu0 0
          %1023 = vmatprep.mubr.bf16.mxu0 0
          %1024 = vmatmul.mubr.bf16.gmra.mrb[0].mxu0 %v781
          %v1025 = vpop.f32.mrb[0].mxu0
          %v1026 = vadd.f32 %v677, %v1025
          %v1027 = vpop.f32.mrb[0].mxu0
          %v1028 = vpop.f32.mrb[0].mxu0
          %v1029 = vpop.f32.mrb[0].mxu0
          %1030 = vdwg.mxu0
          %v1035 = vunpack.c.l.b16 %v566
          %v1036 = vunpack.c.l.b16 %v567
          %v1037 = vunpack.c.l.b16 %v568
          %v1038 = vunpack.c.l.b16 %v569
          %v1039 = vpack.c.b16 %v1036, %v1035
          %v1040 = vpack.c.b16 %v1038, %v1037
          %1043 = vmatprep.subr.bf16.mxu0 0
          %1044 = vmatpush1.bf16.msra.mxu0 %v1039
          %1045 = vmatprep.subr.bf16.mxu0 0
          %1046 = vmatpush1.bf16.msra.mxu0 %v1040
          %1047 = vmatprep.subr.bf16.mxu0 0
          %1048 = vmatpush1.bf16.msra.mxu0 0
          %1049 = vmatprep.subr.bf16.mxu0 0
          %1050 = vmatpush1.bf16.msra.mxu0 0
          %1051 = vmatprep.subr.bf16.mxu0 0
          %1052 = vmatpush1.bf16.msra.mxu0 0
          %1053 = vmatprep.subr.bf16.mxu0 0
          %1054 = vmatpush1.bf16.msra.mxu0 0
          %1055 = vmatprep.subr.bf16.mxu0 0
          %1056 = vmatpush1.bf16.msra.mxu0 0
          %1057 = vmatprep.subr.bf16.mxu0 0
          %1058 = vmatpush1.bf16.msra.mxu0 0
          %1059 = vmatprep.subr.bf16.mxu0 0
          %1060 = vmatpush1.bf16.msra.mxu0 0
          %1061 = vmatprep.subr.bf16.mxu0 0
          %1062 = vmatpush1.bf16.msra.mxu0 0
          %1063 = vmatprep.subr.bf16.mxu0 0
          %1064 = vmatpush1.bf16.msra.mxu0 0
          %1065 = vmatprep.subr.bf16.mxu0 0
          %1066 = vmatpush1.bf16.msra.mxu0 0
          %1067 = vmatprep.subr.bf16.mxu0 0
          %1068 = vmatpush1.bf16.msra.mxu0 0
          %1069 = vmatprep.subr.bf16.mxu0 0
          %1070 = vmatpush1.bf16.msra.mxu0 0
          %1071 = vmatprep.subr.bf16.mxu0 0
          %1072 = vmatpush1.bf16.msra.mxu0 0
          %1073 = vmatprep.subr.bf16.mxu0 0
          %1074 = vmatpush1.bf16.msra.mxu0 0
          %1075 = vmatprep.mubr.bf16.mxu0 0
          %1076 = vmatmul.mubr.bf16.gmra.mrb[0].mxu0 %v781
          %v1077 = vpop.f32.mrb[0].mxu0
          %v1078 = vadd.f32 %v681, %v1077
          %v1079 = vpop.f32.mrb[0].mxu0
          %v1080 = vpop.f32.mrb[0].mxu0
          %v1081 = vpop.f32.mrb[0].mxu0
          %1082 = vdwg.mxu0
          %v1087 = vunpack.c.l.b16 %v570
          %v1088 = vunpack.c.l.b16 %v571
          %v1089 = vunpack.c.l.b16 %v572
          %v1090 = vunpack.c.l.b16 %v573
          %v1091 = vpack.c.b16 %v1088, %v1087
          %v1092 = vpack.c.b16 %v1090, %v1089
          %1095 = vmatprep.subr.bf16.mxu0 0
          %1096 = vmatpush1.bf16.msra.mxu0 %v1091
          %1097 = vmatprep.subr.bf16.mxu0 0
          %1098 = vmatpush1.bf16.msra.mxu0 %v1092
          %1099 = vmatprep.subr.bf16.mxu0 0
          %1100 = vmatpush1.bf16.msra.mxu0 0
          %1101 = vmatprep.subr.bf16.mxu0 0
          %1102 = vmatpush1.bf16.msra.mxu0 0
          %1103 = vmatprep.subr.bf16.mxu0 0
          %1104 = vmatpush1.bf16.msra.mxu0 0
          %1105 = vmatprep.subr.bf16.mxu0 0
          %1106 = vmatpush1.bf16.msra.mxu0 0
          %1107 = vmatprep.subr.bf16.mxu0 0
          %1108 = vmatpush1.bf16.msra.mxu0 0
          %1109 = vmatprep.subr.bf16.mxu0 0
          %1110 = vmatpush1.bf16.msra.mxu0 0
          %1111 = vmatprep.subr.bf16.mxu0 0
          %1112 = vmatpush1.bf16.msra.mxu0 0
          %1113 = vmatprep.subr.bf16.mxu0 0
          %1114 = vmatpush1.bf16.msra.mxu0 0
          %1115 = vmatprep.subr.bf16.mxu0 0
          %1116 = vmatpush1.bf16.msra.mxu0 0
          %1117 = vmatprep.subr.bf16.mxu0 0
          %1118 = vmatpush1.bf16.msra.mxu0 0
          %1119 = vmatprep.subr.bf16.mxu0 0
          %1120 = vmatpush1.bf16.msra.mxu0 0
          %1121 = vmatprep.subr.bf16.mxu0 0
          %1122 = vmatpush1.bf16.msra.mxu0 0
          %1123 = vmatprep.subr.bf16.mxu0 0
          %1124 = vmatpush1.bf16.msra.mxu0 0
          %1125 = vmatprep.subr.bf16.mxu0 0
          %1126 = vmatpush1.bf16.msra.mxu0 0
          %1127 = vmatprep.mubr.bf16.mxu0 0
          %1128 = vmatmul.mubr.bf16.gmra.mrb[0].mxu0 %v781
          %v1129 = vpop.f32.mrb[0].mxu0
          %v1130 = vadd.f32 %v685, %v1129
          %v1131 = vpop.f32.mrb[0].mxu0
          %v1132 = vpop.f32.mrb[0].mxu0
          %v1133 = vpop.f32.mrb[0].mxu0
          %1134 = vdwg.mxu0
          %v1139 = vunpack.c.l.b16 %v574
          %v1140 = vunpack.c.l.b16 %v575
          %v1141 = vunpack.c.l.b16 %v576
          %v1142 = vunpack.c.l.b16 %v577
          %v1143 = vpack.c.b16 %v1140, %v1139
          %v1144 = vpack.c.b16 %v1142, %v1141
          %1147 = vmatprep.subr.bf16.mxu0 0
          %1148 = vmatpush1.bf16.msra.mxu0 %v1143
          %1149 = vmatprep.subr.bf16.mxu0 0
          %1150 = vmatpush1.bf16.msra.mxu0 %v1144
          %1151 = vmatprep.subr.bf16.mxu0 0
          %1152 = vmatpush1.bf16.msra.mxu0 0
          %1153 = vmatprep.subr.bf16.mxu0 0
          %1154 = vmatpush1.bf16.msra.mxu0 0
          %1155 = vmatprep.subr.bf16.mxu0 0
          %1156 = vmatpush1.bf16.msra.mxu0 0
          %1157 = vmatprep.subr.bf16.mxu0 0
          %1158 = vmatpush1.bf16.msra.mxu0 0
          %1159 = vmatprep.subr.bf16.mxu0 0
          %1160 = vmatpush1.bf16.msra.mxu0 0
          %1161 = vmatprep.subr.bf16.mxu0 0
          %1162 = vmatpush1.bf16.msra.mxu0 0
          %1163 = vmatprep.subr.bf16.mxu0 0
          %1164 = vmatpush1.bf16.msra.mxu0 0
          %1165 = vmatprep.subr.bf16.mxu0 0
          %1166 = vmatpush1.bf16.msra.mxu0 0
          %1167 = vmatprep.subr.bf16.mxu0 0
          %1168 = vmatpush1.bf16.msra.mxu0 0
          %1169 = vmatprep.subr.bf16.mxu0 0
          %1170 = vmatpush1.bf16.msra.mxu0 0
          %1171 = vmatprep.subr.bf16.mxu0 0
          %1172 = vmatpush1.bf16.msra.mxu0 0
          %1173 = vmatprep.subr.bf16.mxu0 0
          %1174 = vmatpush1.bf16.msra.mxu0 0
          %1175 = vmatprep.subr.bf16.mxu0 0
          %1176 = vmatpush1.bf16.msra.mxu0 0
          %1177 = vmatprep.subr.bf16.mxu0 0
          %1178 = vmatpush1.bf16.msra.mxu0 0
          %1179 = vmatprep.mubr.bf16.mxu0 0
          %1180 = vmatmul.mubr.bf16.gmra.mrb[0].mxu0 %v781
          %v1181 = vpop.f32.mrb[0].mxu0
          %v1182 = vadd.f32 %v689, %v1181
          %v1183 = vpop.f32.mrb[0].mxu0
          %v1184 = vpop.f32.mrb[0].mxu0
          %v1185 = vpop.f32.mrb[0].mxu0
          %1186 = vdwg.mxu0
          %v1191 = vunpack.c.l.b16 %v578
          %v1192 = vunpack.c.l.b16 %v579
          %v1193 = vunpack.c.l.b16 %v580
          %v1194 = vunpack.c.l.b16 %v581
          %v1195 = vpack.c.b16 %v1192, %v1191
          %v1196 = vpack.c.b16 %v1194, %v1193
          %1199 = vmatprep.subr.bf16.mxu0 0
          %1200 = vmatpush1.bf16.msra.mxu0 %v1195
          %1201 = vmatprep.subr.bf16.mxu0 0
          %1202 = vmatpush1.bf16.msra.mxu0 %v1196
          %1203 = vmatprep.subr.bf16.mxu0 0
          %1204 = vmatpush1.bf16.msra.mxu0 0
          %1205 = vmatprep.subr.bf16.mxu0 0
          %1206 = vmatpush1.bf16.msra.mxu0 0
          %1207 = vmatprep.subr.bf16.mxu0 0
          %1208 = vmatpush1.bf16.msra.mxu0 0
          %1209 = vmatprep.subr.bf16.mxu0 0
          %1210 = vmatpush1.bf16.msra.mxu0 0
          %1211 = vmatprep.subr.bf16.mxu0 0
          %1212 = vmatpush1.bf16.msra.mxu0 0
          %1213 = vmatprep.subr.bf16.mxu0 0
          %1214 = vmatpush1.bf16.msra.mxu0 0
          %1215 = vmatprep.subr.bf16.mxu0 0
          %1216 = vmatpush1.bf16.msra.mxu0 0
          %1217 = vmatprep.subr.bf16.mxu0 0
          %1218 = vmatpush1.bf16.msra.mxu0 0
          %1219 = vmatprep.subr.bf16.mxu0 0
          %1220 = vmatpush1.bf16.msra.mxu0 0
          %1221 = vmatprep.subr.bf16.mxu0 0
          %1222 = vmatpush1.bf16.msra.mxu0 0
          %1223 = vmatprep.subr.bf16.mxu0 0
          %1224 = vmatpush1.bf16.msra.mxu0 0
          %1225 = vmatprep.subr.bf16.mxu0 0
          %1226 = vmatpush1.bf16.msra.mxu0 0
          %1227 = vmatprep.subr.bf16.mxu0 0
          %1228 = vmatpush1.bf16.msra.mxu0 0
          %1229 = vmatprep.subr.bf16.mxu0 0
          %1230 = vmatpush1.bf16.msra.mxu0 0
          %1231 = vmatprep.mubr.bf16.mxu0 0
          %1232 = vmatmul.mubr.bf16.gmra.mrb[0].mxu0 %v781
          %v1233 = vpop.f32.mrb[0].mxu0
          %v1234 = vadd.f32 %v705, %v1233
          %v1235 = vpop.f32.mrb[0].mxu0
          %v1236 = vpop.f32.mrb[0].mxu0
          %v1237 = vpop.f32.mrb[0].mxu0
          %1238 = vdwg.mxu0
          %v1243 = vunpack.c.l.b16 %v582
          %v1244 = vunpack.c.l.b16 %v583
          %v1245 = vunpack.c.l.b16 %v584
          %v1246 = vunpack.c.l.b16 %v585
          %v1247 = vpack.c.b16 %v1244, %v1243
          %v1248 = vpack.c.b16 %v1246, %v1245
          %1251 = vmatprep.subr.bf16.mxu0 0
          %1252 = vmatpush1.bf16.msra.mxu0 %v1247
          %1253 = vmatprep.subr.bf16.mxu0 0
          %1254 = vmatpush1.bf16.msra.mxu0 %v1248
          %1255 = vmatprep.subr.bf16.mxu0 0
          %1256 = vmatpush1.bf16.msra.mxu0 0
          %1257 = vmatprep.subr.bf16.mxu0 0
          %1258 = vmatpush1.bf16.msra.mxu0 0
          %1259 = vmatprep.subr.bf16.mxu0 0
          %1260 = vmatpush1.bf16.msra.mxu0 0
          %1261 = vmatprep.subr.bf16.mxu0 0
          %1262 = vmatpush1.bf16.msra.mxu0 0
          %1263 = vmatprep.subr.bf16.mxu0 0
          %1264 = vmatpush1.bf16.msra.mxu0 0
          %1265 = vmatprep.subr.bf16.mxu0 0
          %1266 = vmatpush1.bf16.msra.mxu0 0
          %1267 = vmatprep.subr.bf16.mxu0 0
          %1268 = vmatpush1.bf16.msra.mxu0 0
          %1269 = vmatprep.subr.bf16.mxu0 0
          %1270 = vmatpush1.bf16.msra.mxu0 0
          %1271 = vmatprep.subr.bf16.mxu0 0
          %1272 = vmatpush1.bf16.msra.mxu0 0
          %1273 = vmatprep.subr.bf16.mxu0 0
          %1274 = vmatpush1.bf16.msra.mxu0 0
          %1275 = vmatprep.subr.bf16.mxu0 0
          %1276 = vmatpush1.bf16.msra.mxu0 0
          %1277 = vmatprep.subr.bf16.mxu0 0
          %1278 = vmatpush1.bf16.msra.mxu0 0
          %1279 = vmatprep.subr.bf16.mxu0 0
          %1280 = vmatpush1.bf16.msra.mxu0 0
          %1281 = vmatprep.subr.bf16.mxu0 0
          %1282 = vmatpush1.bf16.msra.mxu0 0
          %1283 = vmatprep.mubr.bf16.mxu0 0
          %1284 = vmatmul.mubr.bf16.gmra.mrb[0].mxu0 %v781
          %v1285 = vpop.f32.mrb[0].mxu0
          %v1286 = vadd.f32 %v709, %v1285
          %v1287 = vpop.f32.mrb[0].mxu0
          %v1288 = vpop.f32.mrb[0].mxu0
          %v1289 = vpop.f32.mrb[0].mxu0
          %1290 = vdwg.mxu0
          %v1295 = vunpack.c.l.b16 %v586
          %v1296 = vunpack.c.l.b16 %v587
          %v1297 = vunpack.c.l.b16 %v588
          %v1298 = vunpack.c.l.b16 %v589
          %v1299 = vpack.c.b16 %v1296, %v1295
          %v1300 = vpack.c.b16 %v1298, %v1297
          %1303 = vmatprep.subr.bf16.mxu0 0
          %1304 = vmatpush1.bf16.msra.mxu0 %v1299
          %1305 = vmatprep.subr.bf16.mxu0 0
          %1306 = vmatpush1.bf16.msra.mxu0 %v1300
          %1307 = vmatprep.subr.bf16.mxu0 0
          %1308 = vmatpush1.bf16.msra.mxu0 0
          %1309 = vmatprep.subr.bf16.mxu0 0
          %1310 = vmatpush1.bf16.msra.mxu0 0
          %1311 = vmatprep.subr.bf16.mxu0 0
          %1312 = vmatpush1.bf16.msra.mxu0 0
          %1313 = vmatprep.subr.bf16.mxu0 0
          %1314 = vmatpush1.bf16.msra.mxu0 0
          %1315 = vmatprep.subr.bf16.mxu0 0
          %1316 = vmatpush1.bf16.msra.mxu0 0
          %1317 = vmatprep.subr.bf16.mxu0 0
          %1318 = vmatpush1.bf16.msra.mxu0 0
          %1319 = vmatprep.subr.bf16.mxu0 0
          %1320 = vmatpush1.bf16.msra.mxu0 0
          %1321 = vmatprep.subr.bf16.mxu0 0
          %1322 = vmatpush1.bf16.msra.mxu0 0
          %1323 = vmatprep.subr.bf16.mxu0 0
          %1324 = vmatpush1.bf16.msra.mxu0 0
          %1325 = vmatprep.subr.bf16.mxu0 0
          %1326 = vmatpush1.bf16.msra.mxu0 0
          %1327 = vmatprep.subr.bf16.mxu0 0
          %1328 = vmatpush1.bf16.msra.mxu0 0
          %1329 = vmatprep.subr.bf16.mxu0 0
          %1330 = vmatpush1.bf16.msra.mxu0 0
          %1331 = vmatprep.subr.bf16.mxu0 0
          %1332 = vmatpush1.bf16.msra.mxu0 0
          %1333 = vmatprep.subr.bf16.mxu0 0
          %1334 = vmatpush1.bf16.msra.mxu0 0
          %1335 = vmatprep.mubr.bf16.mxu0 0
          %1336 = vmatmul.mubr.bf16.gmra.mrb[0].mxu0 %v781
          %v1337 = vpop.f32.mrb[0].mxu0
          %v1338 = vadd.f32 %v713, %v1337
          %v1339 = vpop.f32.mrb[0].mxu0
          %v1340 = vpop.f32.mrb[0].mxu0
          %v1341 = vpop.f32.mrb[0].mxu0
          %1342 = vdwg.mxu0
          %v1347 = vunpack.c.l.b16 %v590
          %v1348 = vunpack.c.l.b16 %v591
          %v1349 = vunpack.c.l.b16 %v592
          %v1350 = vunpack.c.l.b16 %v593
          %v1351 = vpack.c.b16 %v1348, %v1347
          %v1352 = vpack.c.b16 %v1350, %v1349
          %1355 = vmatprep.subr.bf16.mxu0 0
          %1356 = vmatpush1.bf16.msra.mxu0 %v1351
          %1357 = vmatprep.subr.bf16.mxu0 0
          %1358 = vmatpush1.bf16.msra.mxu0 %v1352
          %1359 = vmatprep.subr.bf16.mxu0 0
          %1360 = vmatpush1.bf16.msra.mxu0 0
          %1361 = vmatprep.subr.bf16.mxu0 0
          %1362 = vmatpush1.bf16.msra.mxu0 0
          %1363 = vmatprep.subr.bf16.mxu0 0
          %1364 = vmatpush1.bf16.msra.mxu0 0
          %1365 = vmatprep.subr.bf16.mxu0 0
          %1366 = vmatpush1.bf16.msra.mxu0 0
          %1367 = vmatprep.subr.bf16.mxu0 0
          %1368 = vmatpush1.bf16.msra.mxu0 0
          %1369 = vmatprep.subr.bf16.mxu0 0
          %1370 = vmatpush1.bf16.msra.mxu0 0
          %1371 = vmatprep.subr.bf16.mxu0 0
          %1372 = vmatpush1.bf16.msra.mxu0 0
          %1373 = vmatprep.subr.bf16.mxu0 0
          %1374 = vmatpush1.bf16.msra.mxu0 0
          %1375 = vmatprep.subr.bf16.mxu0 0
          %1376 = vmatpush1.bf16.msra.mxu0 0
          %1377 = vmatprep.subr.bf16.mxu0 0
          %1378 = vmatpush1.bf16.msra.mxu0 0
          %1379 = vmatprep.subr.bf16.mxu0 0
          %1380 = vmatpush1.bf16.msra.mxu0 0
          %1381 = vmatprep.subr.bf16.mxu0 0
          %1382 = vmatpush1.bf16.msra.mxu0 0
          %1383 = vmatprep.subr.bf16.mxu0 0
          %1384 = vmatpush1.bf16.msra.mxu0 0
          %1385 = vmatprep.subr.bf16.mxu0 0
          %1386 = vmatpush1.bf16.msra.mxu0 0
          %1387 = vmatprep.mubr.bf16.mxu0 0
          %1388 = vmatmul.mubr.bf16.gmra.mrb[0].mxu0 %v781
          %v1389 = vpop.f32.mrb[0].mxu0
          %v1390 = vadd.f32 %v717, %v1389
          %v1391 = vpop.f32.mrb[0].mxu0
          %v1392 = vpop.f32.mrb[0].mxu0
          %v1393 = vpop.f32.mrb[0].mxu0
          %1394 = vdwg.mxu0
          %v1395 = vpack.c.bf16 %v818, %v818
          %v1396 = vpack.c.bf16 %v870, %v870
          %v1397 = vpack.c.bf16 %v922, %v922
          %v1398 = vpack.c.bf16 %v974, %v974
          %v1399 = vpack.c.bf16 %v1026, %v1026
          %v1400 = vpack.c.bf16 %v1078, %v1078
          %v1401 = vpack.c.bf16 %v1130, %v1130
          %v1402 = vpack.c.bf16 %v1182, %v1182
          %vm1403 = vcmask 64512
          %v1405 = vsel %vm1403, %v1395, 0
          %v1408 = vsel %vm1403, %v1399, 0
          %1410 = vmatprep.subr.bf16.mxu0 0
          %1411 = vmatpush1.bf16.xpose.msra.mxu0 %v1408
          %1412 = vmatprep.subr.bf16.mxu0 0
          %1413 = vmatpush1.bf16.xpose.msra.mxu0 0
          %1414 = vmatprep.subr.bf16.mxu0 0
          %1415 = vmatpush1.bf16.xpose.msra.mxu0 0
          %1416 = vmatprep.subr.bf16.mxu0 0
          %1417 = vmatpush1.bf16.xpose.msra.mxu0 0
          %1418 = vmatprep.subr.bf16.mxu0 0
          %1419 = vmatpush1.bf16.xpose.msra.mxu0 0
          %1420 = vmatprep.subr.bf16.mxu0 0
          %1421 = vmatpush1.bf16.xpose.msra.mxu0 0
          %1422 = vmatprep.subr.bf16.mxu0 0
          %1423 = vmatpush1.bf16.xpose.msra.mxu0 0
          %1424 = vmatprep.subr.bf16.mxu0 0
          %1425 = vmatpush1.bf16.xpose.msra.mxu0 0
          %1426 = vmatprep.subr.bf16.mxu0 0
          %1427 = vmatpush1.bf16.xpose.msra.mxu0 0
          %1428 = vmatprep.subr.bf16.mxu0 0
          %1429 = vmatpush1.bf16.xpose.msra.mxu0 0
          %1430 = vmatprep.subr.bf16.mxu0 0
          %1431 = vmatpush1.bf16.xpose.msra.mxu0 0
          %1432 = vmatprep.subr.bf16.mxu0 0
          %1433 = vmatpush1.bf16.xpose.msra.mxu0 0
          %1434 = vmatprep.subr.bf16.mxu0 0
          %1435 = vmatpush1.bf16.xpose.msra.mxu0 0
          %1436 = vmatprep.subr.bf16.mxu0 0
          %1437 = vmatpush1.bf16.xpose.msra.mxu0 0
          %1438 = vmatprep.subr.bf16.mxu0 0
          %1439 = vmatpush1.bf16.xpose.msra.mxu0 0
          %1440 = vmatprep.subr.bf16.mxu0 0
          %1441 = vmatpush1.bf16.xpose.msra.mxu0 0
          %1442 = vmatprep.mubr.bf16.mxu0 0
          %1443 = vmatmul.mubr.bf16.gmra.mrb[0].mxu0 %v1405
          %v1444 = vpop.f32.mrb[0].mxu0
          %v1445 = vadd.f32 0.0, %v1444
          %v1446 = vpop.f32.mrb[0].mxu0
          %v1447 = vpop.f32.mrb[0].mxu0
          %v1448 = vpop.f32.mrb[0].mxu0
          %1449 = vdwg.mxu0
          %v1451 = vsel %vm1403, %v1396, 0
          %v1454 = vsel %vm1403, %v1400, 0
          %1456 = vmatprep.subr.bf16.mxu0 0
          %1457 = vmatpush1.bf16.xpose.msra.mxu0 %v1454
          %1458 = vmatprep.subr.bf16.mxu0 0
          %1459 = vmatpush1.bf16.xpose.msra.mxu0 0
          %1460 = vmatprep.subr.bf16.mxu0 0
          %1461 = vmatpush1.bf16.xpose.msra.mxu0 0
          %1462 = vmatprep.subr.bf16.mxu0 0
          %1463 = vmatpush1.bf16.xpose.msra.mxu0 0
          %1464 = vmatprep.subr.bf16.mxu0 0
          %1465 = vmatpush1.bf16.xpose.msra.mxu0 0
          %1466 = vmatprep.subr.bf16.mxu0 0
          %1467 = vmatpush1.bf16.xpose.msra.mxu0 0
          %1468 = vmatprep.subr.bf16.mxu0 0
          %1469 = vmatpush1.bf16.xpose.msra.mxu0 0
          %1470 = vmatprep.subr.bf16.mxu0 0
          %1471 = vmatpush1.bf16.xpose.msra.mxu0 0
          %1472 = vmatprep.subr.bf16.mxu0 0
          %1473 = vmatpush1.bf16.xpose.msra.mxu0 0
          %1474 = vmatprep.subr.bf16.mxu0 0
          %1475 = vmatpush1.bf16.xpose.msra.mxu0 0
          %1476 = vmatprep.subr.bf16.mxu0 0
          %1477 = vmatpush1.bf16.xpose.msra.mxu0 0
          %1478 = vmatprep.subr.bf16.mxu0 0
          %1479 = vmatpush1.bf16.xpose.msra.mxu0 0
          %1480 = vmatprep.subr.bf16.mxu0 0
          %1481 = vmatpush1.bf16.xpose.msra.mxu0 0
          %1482 = vmatprep.subr.bf16.mxu0 0
          %1483 = vmatpush1.bf16.xpose.msra.mxu0 0
          %1484 = vmatprep.subr.bf16.mxu0 0
          %1485 = vmatpush1.bf16.xpose.msra.mxu0 0
          %1486 = vmatprep.subr.bf16.mxu0 0
          %1487 = vmatpush1.bf16.xpose.msra.mxu0 0
          %1488 = vmatprep.mubr.bf16.mxu0 0
          %1489 = vmatmul.mubr.bf16.gmra.mrb[0].mxu0 %v1451
          %v1490 = vpop.f32.mrb[0].mxu0
          %v1491 = vadd.f32 0.0, %v1490
          %v1492 = vpop.f32.mrb[0].mxu0
          %v1493 = vpop.f32.mrb[0].mxu0
          %v1494 = vpop.f32.mrb[0].mxu0
          %1495 = vdwg.mxu0
          %v1497 = vsel %vm1403, %v1397, 0
          %v1500 = vsel %vm1403, %v1401, 0
          %1502 = vmatprep.subr.bf16.mxu0 0
          %1503 = vmatpush1.bf16.xpose.msra.mxu0 %v1500
          %1504 = vmatprep.subr.bf16.mxu0 0
          %1505 = vmatpush1.bf16.xpose.msra.mxu0 0
          %1506 = vmatprep.subr.bf16.mxu0 0
          %1507 = vmatpush1.bf16.xpose.msra.mxu0 0
          %1508 = vmatprep.subr.bf16.mxu0 0
          %1509 = vmatpush1.bf16.xpose.msra.mxu0 0
          %1510 = vmatprep.subr.bf16.mxu0 0
          %1511 = vmatpush1.bf16.xpose.msra.mxu0 0
          %1512 = vmatprep.subr.bf16.mxu0 0
          %1513 = vmatpush1.bf16.xpose.msra.mxu0 0
          %1514 = vmatprep.subr.bf16.mxu0 0
          %1515 = vmatpush1.bf16.xpose.msra.mxu0 0
          %1516 = vmatprep.subr.bf16.mxu0 0
          %1517 = vmatpush1.bf16.xpose.msra.mxu0 0
          %1518 = vmatprep.subr.bf16.mxu0 0
          %1519 = vmatpush1.bf16.xpose.msra.mxu0 0
          %1520 = vmatprep.subr.bf16.mxu0 0
          %1521 = vmatpush1.bf16.xpose.msra.mxu0 0
          %1522 = vmatprep.subr.bf16.mxu0 0
          %1523 = vmatpush1.bf16.xpose.msra.mxu0 0
          %1524 = vmatprep.subr.bf16.mxu0 0
          %1525 = vmatpush1.bf16.xpose.msra.mxu0 0
          %1526 = vmatprep.subr.bf16.mxu0 0
          %1527 = vmatpush1.bf16.xpose.msra.mxu0 0
          %1528 = vmatprep.subr.bf16.mxu0 0
          %1529 = vmatpush1.bf16.xpose.msra.mxu0 0
          %1530 = vmatprep.subr.bf16.mxu0 0
          %1531 = vmatpush1.bf16.xpose.msra.mxu0 0
          %1532 = vmatprep.subr.bf16.mxu0 0
          %1533 = vmatpush1.bf16.xpose.msra.mxu0 0
          %1534 = vmatprep.mubr.bf16.mxu0 0
          %1535 = vmatmul.mubr.bf16.gmra.mrb[0].mxu0 %v1497
          %v1536 = vpop.f32.mrb[0].mxu0
          %v1537 = vadd.f32 0.0, %v1536
          %v1538 = vpop.f32.mrb[0].mxu0
          %v1539 = vpop.f32.mrb[0].mxu0
          %v1540 = vpop.f32.mrb[0].mxu0
          %1541 = vdwg.mxu0
          %v1543 = vsel %vm1403, %v1398, 0
          %v1546 = vsel %vm1403, %v1402, 0
          %1548 = vmatprep.subr.bf16.mxu0 0
          %1549 = vmatpush1.bf16.xpose.msra.mxu0 %v1546
          %1550 = vmatprep.subr.bf16.mxu0 0
          %1551 = vmatpush1.bf16.xpose.msra.mxu0 0
          %1552 = vmatprep.subr.bf16.mxu0 0
          %1553 = vmatpush1.bf16.xpose.msra.mxu0 0
          %1554 = vmatprep.subr.bf16.mxu0 0
          %1555 = vmatpush1.bf16.xpose.msra.mxu0 0
          %1556 = vmatprep.subr.bf16.mxu0 0
          %1557 = vmatpush1.bf16.xpose.msra.mxu0 0
          %1558 = vmatprep.subr.bf16.mxu0 0
          %1559 = vmatpush1.bf16.xpose.msra.mxu0 0
          %1560 = vmatprep.subr.bf16.mxu0 0
          %1561 = vmatpush1.bf16.xpose.msra.mxu0 0
          %1562 = vmatprep.subr.bf16.mxu0 0
          %1563 = vmatpush1.bf16.xpose.msra.mxu0 0
          %1564 = vmatprep.subr.bf16.mxu0 0
          %1565 = vmatpush1.bf16.xpose.msra.mxu0 0
          %1566 = vmatprep.subr.bf16.mxu0 0
          %1567 = vmatpush1.bf16.xpose.msra.mxu0 0
          %1568 = vmatprep.subr.bf16.mxu0 0
          %1569 = vmatpush1.bf16.xpose.msra.mxu0 0
          %1570 = vmatprep.subr.bf16.mxu0 0
          %1571 = vmatpush1.bf16.xpose.msra.mxu0 0
          %1572 = vmatprep.subr.bf16.mxu0 0
          %1573 = vmatpush1.bf16.xpose.msra.mxu0 0
          %1574 = vmatprep.subr.bf16.mxu0 0
          %1575 = vmatpush1.bf16.xpose.msra.mxu0 0
          %1576 = vmatprep.subr.bf16.mxu0 0
          %1577 = vmatpush1.bf16.xpose.msra.mxu0 0
          %1578 = vmatprep.subr.bf16.mxu0 0
          %1579 = vmatpush1.bf16.xpose.msra.mxu0 0
          %1580 = vmatprep.mubr.bf16.mxu0 0
          %1581 = vmatmul.mubr.bf16.gmra.mrb[0].mxu0 %v1543
          %v1582 = vpop.f32.mrb[0].mxu0
          %v1583 = vadd.f32 0.0, %v1582
          %v1584 = vpop.f32.mrb[0].mxu0
          %v1585 = vpop.f32.mrb[0].mxu0
          %v1586 = vpop.f32.mrb[0].mxu0
          %1587 = vdwg.mxu0
          %v1588 = vsel %vm1403, %v1445, -inf
          %1589 = vmax.xlane.f32.xlu0 %v1588
          %v1590 = vpop.xlane.xlu0 %1589
          %v1591 = vsel %vm1403, %v1491, -inf
          %1592 = vmax.xlane.f32.xlu0 %v1591
          %v1593 = vpop.xlane.xlu0 %1592
          %v1594 = vsel %vm1403, %v1537, -inf
          %1595 = vmax.xlane.f32.xlu0 %v1594
          %v1596 = vpop.xlane.xlu0 %1595
          %v1597 = vsel %vm1403, %v1583, -inf
          %1598 = vmax.xlane.f32.xlu0 %v1597
          %v1599 = vpop.xlane.xlu0 %1598
          %v1600 = vsub.f32 %v1445, %v1590
          %v1601 = vsub.f32 %v1491, %v1593
          %v1602 = vsub.f32 %v1537, %v1596
          %v1603 = vsub.f32 %v1583, %v1599
          %v1604 = vmul.f32 %v1600, 1.442695
          %v1605 = vpow.pop %v1604
          %v1606 = vmul.f32 %v1601, 1.442695
          %v1607 = vpow.pop %v1606
          %v1608 = vmul.f32 %v1602, 1.442695
          %v1609 = vpow.pop %v1608
          %v1610 = vmul.f32 %v1603, 1.442695
          %v1611 = vpow.pop %v1610
          %v1612 = vsel %vm1403, %v1605, 0.0
          %1613 = vadd.xlane.f32.xlu0 %v1612
          %v1614 = vpop.xlane.xlu0 %1613
          %v1615 = vsel %vm1403, %v1607, 0.0
          %1616 = vadd.xlane.f32.xlu0 %v1615
          %v1617 = vpop.xlane.xlu0 %1616
          %v1618 = vsel %vm1403, %v1609, 0.0
          %1619 = vadd.xlane.f32.xlu0 %v1618
          %v1620 = vpop.xlane.xlu0 %1619
          %v1621 = vsel %vm1403, %v1611, 0.0
          %1622 = vadd.xlane.f32.xlu0 %v1621
          %v1623 = vpop.xlane.xlu0 %1622
          %v1624 = vrcp.pop %v1614
          %v1625 = vrcp.pop %v1617
          %v1626 = vrcp.pop %v1620
          %v1627 = vrcp.pop %v1623
          %v1628 = vmul.f32 %v1605, %v1624
          %v1629 = vmul.f32 %v1607, %v1625
          %v1630 = vmul.f32 %v1609, %v1626
          %v1631 = vmul.f32 %v1611, %v1627
          %v1632 = vpack.c.bf16 %v1628, %v1628
          %v1633 = vpack.c.bf16 %v1629, %v1629
          %v1634 = vpack.c.bf16 %v1630, %v1630
          %v1635 = vpack.c.bf16 %v1631, %v1631
          %v1636 = vpack.c.bf16 %v1234, %v1234
          %v1637 = vpack.c.bf16 %v1286, %v1286
          %v1638 = vpack.c.bf16 %v1338, %v1338
          %v1639 = vpack.c.bf16 %v1390, %v1390
          %v1641 = vsel %vm1403, %v1632, 0
          %vm1643 = vcmask 1043456
          %v1645 = vsel %vm1643, %v1636, 0
          %1647 = vmatprep.subr.bf16.mxu0 0
          %1648 = vmatpush1.bf16.msra.mxu0 %v1645
          %1649 = vmatprep.subr.bf16.mxu0 0
          %1650 = vmatpush1.bf16.msra.mxu0 0
          %1651 = vmatprep.subr.bf16.mxu0 0
          %1652 = vmatpush1.bf16.msra.mxu0 0
          %1653 = vmatprep.subr.bf16.mxu0 0
          %1654 = vmatpush1.bf16.msra.mxu0 0
          %1655 = vmatprep.subr.bf16.mxu0 0
          %1656 = vmatpush1.bf16.msra.mxu0 0
          %1657 = vmatprep.subr.bf16.mxu0 0
          %1658 = vmatpush1.bf16.msra.mxu0 0
          %1659 = vmatprep.subr.bf16.mxu0 0
          %1660 = vmatpush1.bf16.msra.mxu0 0
          %1661 = vmatprep.subr.bf16.mxu0 0
          %1662 = vmatpush1.bf16.msra.mxu0 0
          %1663 = vmatprep.subr.bf16.mxu0 0
          %1664 = vmatpush1.bf16.msra.mxu0 0
          %1665 = vmatprep.subr.bf16.mxu0 0
          %1666 = vmatpush1.bf16.msra.mxu0 0
          %1667 = vmatprep.subr.bf16.mxu0 0
          %1668 = vmatpush1.bf16.msra.mxu0 0
          %1669 = vmatprep.subr.bf16.mxu0 0
          %1670 = vmatpush1.bf16.msra.mxu0 0
          %1671 = vmatprep.subr.bf16.mxu0 0
          %1672 = vmatpush1.bf16.msra.mxu0 0
          %1673 = vmatprep.subr.bf16.mxu0 0
          %1674 = vmatpush1.bf16.msra.mxu0 0
          %1675 = vmatprep.subr.bf16.mxu0 0
          %1676 = vmatpush1.bf16.msra.mxu0 0
          %1677 = vmatprep.subr.bf16.mxu0 0
          %1678 = vmatpush1.bf16.msra.mxu0 0
          %1679 = vmatprep.mubr.bf16.mxu0 0
          %1680 = vmatmul.mubr.bf16.gmra.mrb[0].mxu0 %v1641
          %v1681 = vpop.f32.mrb[0].mxu0
          %v1682 = vadd.f32 0.0, %v1681
          %v1683 = vpop.f32.mrb[0].mxu0
          %v1684 = vpop.f32.mrb[0].mxu0
          %v1685 = vpop.f32.mrb[0].mxu0
          %1686 = vdwg.mxu0
          %v1688 = vsel %vm1403, %v1633, 0
          %v1691 = vsel %vm1643, %v1637, 0
          %1693 = vmatprep.subr.bf16.mxu0 0
          %1694 = vmatpush1.bf16.msra.mxu0 %v1691
          %1695 = vmatprep.subr.bf16.mxu0 0
          %1696 = vmatpush1.bf16.msra.mxu0 0
          %1697 = vmatprep.subr.bf16.mxu0 0
          %1698 = vmatpush1.bf16.msra.mxu0 0
          %1699 = vmatprep.subr.bf16.mxu0 0
          %1700 = vmatpush1.bf16.msra.mxu0 0
          %1701 = vmatprep.subr.bf16.mxu0 0
          %1702 = vmatpush1.bf16.msra.mxu0 0
          %1703 = vmatprep.subr.bf16.mxu0 0
          %1704 = vmatpush1.bf16.msra.mxu0 0
          %1705 = vmatprep.subr.bf16.mxu0 0
          %1706 = vmatpush1.bf16.msra.mxu0 0
          %1707 = vmatprep.subr.bf16.mxu0 0
          %1708 = vmatpush1.bf16.msra.mxu0 0
          %1709 = vmatprep.subr.bf16.mxu0 0
          %1710 = vmatpush1.bf16.msra.mxu0 0
          %1711 = vmatprep.subr.bf16.mxu0 0
          %1712 = vmatpush1.bf16.msra.mxu0 0
          %1713 = vmatprep.subr.bf16.mxu0 0
          %1714 = vmatpush1.bf16.msra.mxu0 0
          %1715 = vmatprep.subr.bf16.mxu0 0
          %1716 = vmatpush1.bf16.msra.mxu0 0
          %1717 = vmatprep.subr.bf16.mxu0 0
          %1718 = vmatpush1.bf16.msra.mxu0 0
          %1719 = vmatprep.subr.bf16.mxu0 0
          %1720 = vmatpush1.bf16.msra.mxu0 0
          %1721 = vmatprep.subr.bf16.mxu0 0
          %1722 = vmatpush1.bf16.msra.mxu0 0
          %1723 = vmatprep.subr.bf16.mxu0 0
          %1724 = vmatpush1.bf16.msra.mxu0 0
          %1725 = vmatprep.mubr.bf16.mxu0 0
          %1726 = vmatmul.mubr.bf16.gmra.mrb[0].mxu0 %v1688
          %v1727 = vpop.f32.mrb[0].mxu0
          %v1728 = vadd.f32 0.0, %v1727
          %v1729 = vpop.f32.mrb[0].mxu0
          %v1730 = vpop.f32.mrb[0].mxu0
          %v1731 = vpop.f32.mrb[0].mxu0
          %1732 = vdwg.mxu0
          %v1734 = vsel %vm1403, %v1634, 0
          %v1737 = vsel %vm1643, %v1638, 0
          %1739 = vmatprep.subr.bf16.mxu0 0
          %1740 = vmatpush1.bf16.msra.mxu0 %v1737
          %1741 = vmatprep.subr.bf16.mxu0 0
          %1742 = vmatpush1.bf16.msra.mxu0 0
          %1743 = vmatprep.subr.bf16.mxu0 0
          %1744 = vmatpush1.bf16.msra.mxu0 0
          %1745 = vmatprep.subr.bf16.mxu0 0
          %1746 = vmatpush1.bf16.msra.mxu0 0
          %1747 = vmatprep.subr.bf16.mxu0 0
          %1748 = vmatpush1.bf16.msra.mxu0 0
          %1749 = vmatprep.subr.bf16.mxu0 0
          %1750 = vmatpush1.bf16.msra.mxu0 0
          %1751 = vmatprep.subr.bf16.mxu0 0
          %1752 = vmatpush1.bf16.msra.mxu0 0
          %1753 = vmatprep.subr.bf16.mxu0 0
          %1754 = vmatpush1.bf16.msra.mxu0 0
          %1755 = vmatprep.subr.bf16.mxu0 0
          %1756 = vmatpush1.bf16.msra.mxu0 0
          %1757 = vmatprep.subr.bf16.mxu0 0
          %1758 = vmatpush1.bf16.msra.mxu0 0
          %1759 = vmatprep.subr.bf16.mxu0 0
          %1760 = vmatpush1.bf16.msra.mxu0 0
          %1761 = vmatprep.subr.bf16.mxu0 0
          %1762 = vmatpush1.bf16.msra.mxu0 0
          %1763 = vmatprep.subr.bf16.mxu0 0
          %1764 = vmatpush1.bf16.msra.mxu0 0
          %1765 = vmatprep.subr.bf16.mxu0 0
          %1766 = vmatpush1.bf16.msra.mxu0 0
          %1767 = vmatprep.subr.bf16.mxu0 0
          %1768 = vmatpush1.bf16.msra.mxu0 0
          %1769 = vmatprep.subr.bf16.mxu0 0
          %1770 = vmatpush1.bf16.msra.mxu0 0
          %1771 = vmatprep.mubr.bf16.mxu0 0
          %1772 = vmatmul.mubr.bf16.gmra.mrb[0].mxu0 %v1734
          %v1773 = vpop.f32.mrb[0].mxu0
          %v1774 = vadd.f32 0.0, %v1773
          %v1775 = vpop.f32.mrb[0].mxu0
          %v1776 = vpop.f32.mrb[0].mxu0
          %v1777 = vpop.f32.mrb[0].mxu0
          %1778 = vdwg.mxu0
          %v1780 = vsel %vm1403, %v1635, 0
          %v1783 = vsel %vm1643, %v1639, 0
          %1785 = vmatprep.subr.bf16.mxu0 0
          %1786 = vmatpush1.bf16.msra.mxu0 %v1783
          %1787 = vmatprep.subr.bf16.mxu0 0
          %1788 = vmatpush1.bf16.msra.mxu0 0
          %1789 = vmatprep.subr.bf16.mxu0 0
          %1790 = vmatpush1.bf16.msra.mxu0 0
          %1791 = vmatprep.subr.bf16.mxu0 0
          %1792 = vmatpush1.bf16.msra.mxu0 0
          %1793 = vmatprep.subr.bf16.mxu0 0
          %1794 = vmatpush1.bf16.msra.mxu0 0
          %1795 = vmatprep.subr.bf16.mxu0 0
          %1796 = vmatpush1.bf16.msra.mxu0 0
          %1797 = vmatprep.subr.bf16.mxu0 0
          %1798 = vmatpush1.bf16.msra.mxu0 0
          %1799 = vmatprep.subr.bf16.mxu0 0
          %1800 = vmatpush1.bf16.msra.mxu0 0
          %1801 = vmatprep.subr.bf16.mxu0 0
          %1802 = vmatpush1.bf16.msra.mxu0 0
          %1803 = vmatprep.subr.bf16.mxu0 0
          %1804 = vmatpush1.bf16.msra.mxu0 0
          %1805 = vmatprep.subr.bf16.mxu0 0
          %1806 = vmatpush1.bf16.msra.mxu0 0
          %1807 = vmatprep.subr.bf16.mxu0 0
          %1808 = vmatpush1.bf16.msra.mxu0 0
          %1809 = vmatprep.subr.bf16.mxu0 0
          %1810 = vmatpush1.bf16.msra.mxu0 0
          %1811 = vmatprep.subr.bf16.mxu0 0
          %1812 = vmatpush1.bf16.msra.mxu0 0
          %1813 = vmatprep.subr.bf16.mxu0 0
          %1814 = vmatpush1.bf16.msra.mxu0 0
          %1815 = vmatprep.subr.bf16.mxu0 0
          %1816 = vmatpush1.bf16.msra.mxu0 0
          %1817 = vmatprep.mubr.bf16.mxu0 0
          %1818 = vmatmul.mubr.bf16.gmra.mrb[0].mxu0 %v1780
          %v1819 = vpop.f32.mrb[0].mxu0
          %v1820 = vadd.f32 0.0, %v1819
          %v1821 = vpop.f32.mrb[0].mxu0
          %v1822 = vpop.f32.mrb[0].mxu0
          %v1823 = vpop.f32.mrb[0].mxu0
          %1824 = vdwg.mxu0
          %v1825 = vpack.c.bf16 %v1682, %v1682
          %v1826 = vpack.c.bf16 %v1728, %v1728
          %v1827 = vpack.c.bf16 %v1774, %v1774
          %v1828 = vpack.c.bf16 %v1820, %v1820
          %v1830 = vsel %vm1403, %v1825, 0
          %v1833 = vsel %vm1643, %v594, 0
          %1835 = vmatprep.subr.bf16.mxu0 0
          %1836 = vmatpush1.bf16.msra.mxu0 %v1833
          %1837 = vmatprep.subr.bf16.mxu0 0
          %1838 = vmatpush1.bf16.msra.mxu0 0
          %1839 = vmatprep.subr.bf16.mxu0 0
          %1840 = vmatpush1.bf16.msra.mxu0 0
          %1841 = vmatprep.subr.bf16.mxu0 0
          %1842 = vmatpush1.bf16.msra.mxu0 0
          %1843 = vmatprep.subr.bf16.mxu0 0
          %1844 = vmatpush1.bf16.msra.mxu0 0
          %1845 = vmatprep.subr.bf16.mxu0 0
          %1846 = vmatpush1.bf16.msra.mxu0 0
          %1847 = vmatprep.subr.bf16.mxu0 0
          %1848 = vmatpush1.bf16.msra.mxu0 0
          %1849 = vmatprep.subr.bf16.mxu0 0
          %1850 = vmatpush1.bf16.msra.mxu0 0
          %1851 = vmatprep.subr.bf16.mxu0 0
          %1852 = vmatpush1.bf16.msra.mxu0 0
          %1853 = vmatprep.subr.bf16.mxu0 0
          %1854 = vmatpush1.bf16.msra.mxu0 0
          %1855 = vmatprep.subr.bf16.mxu0 0
          %1856 = vmatpush1.bf16.msra.mxu0 0
          %1857 = vmatprep.subr.bf16.mxu0 0
          %1858 = vmatpush1.bf16.msra.mxu0 0
          %1859 = vmatprep.subr.bf16.mxu0 0
          %1860 = vmatpush1.bf16.msra.mxu0 0
          %1861 = vmatprep.subr.bf16.mxu0 0
          %1862 = vmatpush1.bf16.msra.mxu0 0
          %1863 = vmatprep.subr.bf16.mxu0 0
          %1864 = vmatpush1.bf16.msra.mxu0 0
          %1865 = vmatprep.subr.bf16.mxu0 0
          %1866 = vmatpush1.bf16.msra.mxu0 0
          %1867 = vmatprep.mubr.bf16.mxu0 0
          %1868 = vmatmul.mubr.bf16.gmra.mrb[0].mxu0 %v1830
          %v1869 = vpop.f32.mrb[0].mxu0
          %v1870 = vadd.f32 0.0, %v1869
          %v1871 = vpop.f32.mrb[0].mxu0
          %v1872 = vpop.f32.mrb[0].mxu0
          %v1873 = vpop.f32.mrb[0].mxu0
          %1874 = vdwg.mxu0
          %v1876 = vsel %vm1403, %v1826, 0
          %v1879 = vsel %vm1643, %v595, 0
          %1881 = vmatprep.subr.bf16.mxu0 0
          %1882 = vmatpush1.bf16.msra.mxu0 %v1879
          %1883 = vmatprep.subr.bf16.mxu0 0
          %1884 = vmatpush1.bf16.msra.mxu0 0
          %1885 = vmatprep.subr.bf16.mxu0 0
          %1886 = vmatpush1.bf16.msra.mxu0 0
          %1887 = vmatprep.subr.bf16.mxu0 0
          %1888 = vmatpush1.bf16.msra.mxu0 0
          %1889 = vmatprep.subr.bf16.mxu0 0
          %1890 = vmatpush1.bf16.msra.mxu0 0
          %1891 = vmatprep.subr.bf16.mxu0 0
          %1892 = vmatpush1.bf16.msra.mxu0 0
          %1893 = vmatprep.subr.bf16.mxu0 0
          %1894 = vmatpush1.bf16.msra.mxu0 0
          %1895 = vmatprep.subr.bf16.mxu0 0
          %1896 = vmatpush1.bf16.msra.mxu0 0
          %1897 = vmatprep.subr.bf16.mxu0 0
          %1898 = vmatpush1.bf16.msra.mxu0 0
          %1899 = vmatprep.subr.bf16.mxu0 0
          %1900 = vmatpush1.bf16.msra.mxu0 0
          %1901 = vmatprep.subr.bf16.mxu0 0
          %1902 = vmatpush1.bf16.msra.mxu0 0
          %1903 = vmatprep.subr.bf16.mxu0 0
          %1904 = vmatpush1.bf16.msra.mxu0 0
          %1905 = vmatprep.subr.bf16.mxu0 0
          %1906 = vmatpush1.bf16.msra.mxu0 0
          %1907 = vmatprep.subr.bf16.mxu0 0
          %1908 = vmatpush1.bf16.msra.mxu0 0
          %1909 = vmatprep.subr.bf16.mxu0 0
          %1910 = vmatpush1.bf16.msra.mxu0 0
          %1911 = vmatprep.subr.bf16.mxu0 0
          %1912 = vmatpush1.bf16.msra.mxu0 0
          %1913 = vmatprep.mubr.bf16.mxu0 0
          %1914 = vmatmul.mubr.bf16.gmra.mrb[0].mxu0 %v1876
          %v1915 = vpop.f32.mrb[0].mxu0
          %v1916 = vadd.f32 0.0, %v1915
          %v1917 = vpop.f32.mrb[0].mxu0
          %v1918 = vpop.f32.mrb[0].mxu0
          %v1919 = vpop.f32.mrb[0].mxu0
          %1920 = vdwg.mxu0
          %v1922 = vsel %vm1403, %v1827, 0
          %v1925 = vsel %vm1643, %v596, 0
          %1927 = vmatprep.subr.bf16.mxu0 0
          %1928 = vmatpush1.bf16.msra.mxu0 %v1925
          %1929 = vmatprep.subr.bf16.mxu0 0
          %1930 = vmatpush1.bf16.msra.mxu0 0
          %1931 = vmatprep.subr.bf16.mxu0 0
          %1932 = vmatpush1.bf16.msra.mxu0 0
          %1933 = vmatprep.subr.bf16.mxu0 0
          %1934 = vmatpush1.bf16.msra.mxu0 0
          %1935 = vmatprep.subr.bf16.mxu0 0
          %1936 = vmatpush1.bf16.msra.mxu0 0
          %1937 = vmatprep.subr.bf16.mxu0 0
          %1938 = vmatpush1.bf16.msra.mxu0 0
          %1939 = vmatprep.subr.bf16.mxu0 0
          %1940 = vmatpush1.bf16.msra.mxu0 0
          %1941 = vmatprep.subr.bf16.mxu0 0
          %1942 = vmatpush1.bf16.msra.mxu0 0
          %1943 = vmatprep.subr.bf16.mxu0 0
          %1944 = vmatpush1.bf16.msra.mxu0 0
          %1945 = vmatprep.subr.bf16.mxu0 0
          %1946 = vmatpush1.bf16.msra.mxu0 0
          %1947 = vmatprep.subr.bf16.mxu0 0
          %1948 = vmatpush1.bf16.msra.mxu0 0
          %1949 = vmatprep.subr.bf16.mxu0 0
          %1950 = vmatpush1.bf16.msra.mxu0 0
          %1951 = vmatprep.subr.bf16.mxu0 0
          %1952 = vmatpush1.bf16.msra.mxu0 0
          %1953 = vmatprep.subr.bf16.mxu0 0
          %1954 = vmatpush1.bf16.msra.mxu0 0
          %1955 = vmatprep.subr.bf16.mxu0 0
          %1956 = vmatpush1.bf16.msra.mxu0 0
          %1957 = vmatprep.subr.bf16.mxu0 0
          %1958 = vmatpush1.bf16.msra.mxu0 0
          %1959 = vmatprep.mubr.bf16.mxu0 0
          %1960 = vmatmul.mubr.bf16.gmra.mrb[0].mxu0 %v1922
          %v1961 = vpop.f32.mrb[0].mxu0
          %v1962 = vadd.f32 0.0, %v1961
          %v1963 = vpop.f32.mrb[0].mxu0
          %v1964 = vpop.f32.mrb[0].mxu0
          %v1965 = vpop.f32.mrb[0].mxu0
          %1966 = vdwg.mxu0
          %v1968 = vsel %vm1403, %v1828, 0
          %v1971 = vsel %vm1643, %v597, 0
          %1973 = vmatprep.subr.bf16.mxu0 0
          %1974 = vmatpush1.bf16.msra.mxu0 %v1971
          %1975 = vmatprep.subr.bf16.mxu0 0
          %1976 = vmatpush1.bf16.msra.mxu0 0
          %1977 = vmatprep.subr.bf16.mxu0 0
          %1978 = vmatpush1.bf16.msra.mxu0 0
          %1979 = vmatprep.subr.bf16.mxu0 0
          %1980 = vmatpush1.bf16.msra.mxu0 0
          %1981 = vmatprep.subr.bf16.mxu0 0
          %1982 = vmatpush1.bf16.msra.mxu0 0
          %1983 = vmatprep.subr.bf16.mxu0 0
          %1984 = vmatpush1.bf16.msra.mxu0 0
          %1985 = vmatprep.subr.bf16.mxu0 0
          %1986 = vmatpush1.bf16.msra.mxu0 0
          %1987 = vmatprep.subr.bf16.mxu0 0
          %1988 = vmatpush1.bf16.msra.mxu0 0
          %1989 = vmatprep.subr.bf16.mxu0 0
          %1990 = vmatpush1.bf16.msra.mxu0 0
          %1991 = vmatprep.subr.bf16.mxu0 0
          %1992 = vmatpush1.bf16.msra.mxu0 0
          %1993 = vmatprep.subr.bf16.mxu0 0
          %1994 = vmatpush1.bf16.msra.mxu0 0
          %1995 = vmatprep.subr.bf16.mxu0 0
          %1996 = vmatpush1.bf16.msra.mxu0 0
          %1997 = vmatprep.subr.bf16.mxu0 0
          %1998 = vmatpush1.bf16.msra.mxu0 0
          %1999 = vmatprep.subr.bf16.mxu0 0
          %2000 = vmatpush1.bf16.msra.mxu0 0
          %2001 = vmatprep.subr.bf16.mxu0 0
          %2002 = vmatpush1.bf16.msra.mxu0 0
          %2003 = vmatprep.subr.bf16.mxu0 0
          %2004 = vmatpush1.bf16.msra.mxu0 0
          %2005 = vmatprep.mubr.bf16.mxu0 0
          %2006 = vmatmul.mubr.bf16.gmra.mrb[0].mxu0 %v1968
          %v2007 = vpop.f32.mrb[0].mxu0
          %v2008 = vadd.f32 0.0, %v2007
          %v2009 = vpop.f32.mrb[0].mxu0
          %v2010 = vpop.f32.mrb[0].mxu0
          %v2011 = vpop.f32.mrb[0].mxu0
          %2012 = vdwg.mxu0
          %v2013 = vsel %vm750, %v1870, 0.0
          %v2014 = vsel %vm750, %v1916, 0.0
          %v2015 = vadd.f32 %v2013, %v2014
          %v2016 = vsel %vm750, %v1962, 0.0
          %v2017 = vadd.f32 %v2015, %v2016
          %v2018 = vsel %vm750, %v2008, 0.0
          %v2019 = vadd.f32 %v2017, %v2018
          %v2020 = vadd.f32 %v2019, %v727
          %v2021 = vadd.f32 %v749, %v2020
          %v2022 = vsel %vm750, %v2021, 0.0
          %2023 = vadd.xlane.f32.xlu0 %v2022
          %v2024 = vpop.xlane.xlu0 %2023
          %v2025 = vmul.f32 %v2024, %v754
          %v2026 = vsub.f32 %v2021, %v2025
          %v2027 = vmul.f32 %v2026, %v2026
          %v2028 = vsel %vm750, %v2027, 0.0
          %2029 = vadd.xlane.f32.xlu0 %v2028
          %v2030 = vpop.xlane.xlu0 %2029
          %v2031 = vmul.f32 %v2030, %v754
          %v2032 = vadd.f32 %v2031, 1e-05
          %v2033 = vrsqrt.pop %v2032
          %v2034 = vmul.f32 %v2026, %v2033
          %v2035 = vmul.f32 %v2034, %v629
          %v2036 = vadd.f32 %v2035, %v636
          %v2037 = vpack.c.bf16 %v2036, %v2036
          %v2042 = vunpack.c.l.b16 %v598
          %v2043 = vunpack.c.l.b16 %v599
          %v2044 = vunpack.c.l.b16 %v600
          %v2045 = vunpack.c.l.b16 %v601
          %v2046 = vpack.c.b16 %v2043, %v2042
          %v2047 = vpack.c.b16 %v2045, %v2044
          %v2051 = vsel %vm750, %v2037, 0
          %2053 = vmatprep.subr.bf16.mxu0 0
          %2054 = vmatpush1.bf16.msra.mxu0 %v2046
          %2055 = vmatprep.subr.bf16.mxu0 0
          %2056 = vmatpush1.bf16.msra.mxu0 %v2047
          %2057 = vmatprep.subr.bf16.mxu0 0
          %2058 = vmatpush1.bf16.msra.mxu0 0
          %2059 = vmatprep.subr.bf16.mxu0 0
          %2060 = vmatpush1.bf16.msra.mxu0 0
          %2061 = vmatprep.subr.bf16.mxu0 0
          %2062 = vmatpush1.bf16.msra.mxu0 0
          %2063 = vmatprep.subr.bf16.mxu0 0
          %2064 = vmatpush1.bf16.msra.mxu0 0
          %2065 = vmatprep.subr.bf16.mxu0 0
          %2066 = vmatpush1.bf16.msra.mxu0 0
          %2067 = vmatprep.subr.bf16.mxu0 0
          %2068 = vmatpush1.bf16.msra.mxu0 0
          %2069 = vmatprep.subr.bf16.mxu0 0
          %2070 = vmatpush1.bf16.msra.mxu0 0
          %2071 = vmatprep.subr.bf16.mxu0 0
          %2072 = vmatpush1.bf16.msra.mxu0 0
          %2073 = vmatprep.subr.bf16.mxu0 0
          %2074 = vmatpush1.bf16.msra.mxu0 0
          %2075 = vmatprep.subr.bf16.mxu0 0
          %2076 = vmatpush1.bf16.msra.mxu0 0
          %2077 = vmatprep.subr.bf16.mxu0 0
          %2078 = vmatpush1.bf16.msra.mxu0 0
          %2079 = vmatprep.subr.bf16.mxu0 0
          %2080 = vmatpush1.bf16.msra.mxu0 0
          %2081 = vmatprep.subr.bf16.mxu0 0
          %2082 = vmatpush1.bf16.msra.mxu0 0
          %2083 = vmatprep.subr.bf16.mxu0 0
          %2084 = vmatpush1.bf16.msra.mxu0 0
          %2085 = vmatprep.mubr.bf16.mxu0 0
          %2086 = vmatmul.mubr.bf16.gmra.mrb[0].mxu0 %v2051
          %v2087 = vpop.f32.mrb[0].mxu0
          %v2088 = vadd.f32 %v734, %v2087
          %v2089 = vpop.f32.mrb[0].mxu0
          %v2090 = vpop.f32.mrb[0].mxu0
          %v2091 = vpop.f32.mrb[0].mxu0
          %2092 = vdwg.mxu0
          %v2093 = vmax.f32 %v2088, 0.0
          %v2094 = vpack.c.bf16 %v2093, %v2093
          %v2103 = vunpack.c.l.b16 %v602
          %v2104 = vunpack.c.l.b16 %v603
          %v2105 = vunpack.c.l.b16 %v604
          %v2106 = vunpack.c.l.b16 %v605
          %v2107 = vunpack.c.l.b16 %v606
          %v2108 = vunpack.c.l.b16 %v607
          %v2109 = vunpack.c.l.b16 %v608
          %v2110 = vunpack.c.l.b16 %v609
          %v2111 = vpack.c.b16 %v2104, %v2103
          %v2112 = vpack.c.b16 %v2106, %v2105
          %v2113 = vpack.c.b16 %v2108, %v2107
          %v2114 = vpack.c.b16 %v2110, %v2109
          %vm2119 = vcmask 523264
          %v2121 = vsel %vm2119, %v2094, 0
          %2123 = vmatprep.subr.bf16.mxu0 0
          %2124 = vmatpush1.bf16.msra.mxu0 %v2111
          %2125 = vmatprep.subr.bf16.mxu0 0
          %2126 = vmatpush1.bf16.msra.mxu0 %v2112
          %2127 = vmatprep.subr.bf16.mxu0 0
          %2128 = vmatpush1.bf16.msra.mxu0 %v2113
          %2129 = vmatprep.subr.bf16.mxu0 0
          %2130 = vmatpush1.bf16.msra.mxu0 %v2114
          %2131 = vmatprep.subr.bf16.mxu0 0
          %2132 = vmatpush1.bf16.msra.mxu0 0
          %2133 = vmatprep.subr.bf16.mxu0 0
          %2134 = vmatpush1.bf16.msra.mxu0 0
          %2135 = vmatprep.subr.bf16.mxu0 0
          %2136 = vmatpush1.bf16.msra.mxu0 0
          %2137 = vmatprep.subr.bf16.mxu0 0
          %2138 = vmatpush1.bf16.msra.mxu0 0
          %2139 = vmatprep.subr.bf16.mxu0 0
          %2140 = vmatpush1.bf16.msra.mxu0 0
          %2141 = vmatprep.subr.bf16.mxu0 0
          %2142 = vmatpush1.bf16.msra.mxu0 0
          %2143 = vmatprep.subr.bf16.mxu0 0
          %2144 = vmatpush1.bf16.msra.mxu0 0
          %2145 = vmatprep.subr.bf16.mxu0 0
          %2146 = vmatpush1.bf16.msra.mxu0 0
          %2147 = vmatprep.subr.bf16.mxu0 0
          %2148 = vmatpush1.bf16.msra.mxu0 0
          %2149 = vmatprep.subr.bf16.mxu0 0
          %2150 = vmatpush1.bf16.msra.mxu0 0
          %2151 = vmatprep.subr.bf16.mxu0 0
          %2152 = vmatpush1.bf16.msra.mxu0 0
          %2153 = vmatprep.subr.bf16.mxu0 0
          %2154 = vmatpush1.bf16.msra.mxu0 0
          %2155 = vmatprep.mubr.bf16.mxu0 0
          %2156 = vmatmul.mubr.bf16.gmra.mrb[0].mxu0 %v2121
          %v2157 = vpop.f32.mrb[0].mxu0
          %v2158 = vadd.f32 %v741, %v2157
          %v2159 = vpop.f32.mrb[0].mxu0
          %v2160 = vpop.f32.mrb[0].mxu0
          %v2161 = vpop.f32.mrb[0].mxu0
          %2162 = vdwg.mxu0
          %v2163 = vadd.f32 %v2021, %v2158
        $region93: #{tpu_custom_call.1} parent=87 // loop_footer
          %s748 = sadd.s32 1, %s744
        $region94: #{tpu_custom_call.1} parent=87 // loop_footer_branch
          %743 = sbr.rel target = $region90
        $region95: #{tpu_custom_call.1} parent=87 // loop_exit
          _
        %v2164 = vpack.c.bf16 %v749, %v749
        %vm2165 = vcmask 257024
        %2166 = vst.msk [vmem:[%s539] sm:$0xf] %vm2165, %v2164
        %s2167 = sand.u32 %s401, 1
        %s2168 = scalar_lea.sflag [#allocation3], %s2167
        %s2169 = sand.u32 %s401, 1
        %s2170 = smul.addr %s2169, 4
        %s2171 = scalar_lea.vmem [#allocation2], %s2170
        // Predicated region
        $region96: #{tpu_custom_call.1} parent=87 // pred_check
          %p2172 = pneg %p411
        $region97: #{tpu_custom_call.1} parent=87 // pred_check_branch
          %2174 = sbr.rel (%p2172) target = $region99
        $region98: #{tpu_custom_call.1} parent=87 // pred_region
          %s2176 = ssub.s32 64, 64
          %2177 = vsyncadd %s2168, %s2176
          %s2178 = smul.addr %s31, 64
          %s2179 = scalar_lea.hbm %s17, %s2178
          %s2181 = sshll.u32 %s2171, 4
          %s2182 = int_to_ptr.vmem [resolvable:$true] %s2181
          %2184 = dma.vmem_to_hbm [thread:$0]  %s2182, 64, %s2179, %s2168
        $region99: #{tpu_custom_call.1} parent=87 // pred_fallthru
          _
      $region88: #{tpu_custom_call.1} parent=5 // pred_fallthru
        _
      %p2185 = scmp.le.s32.totalorder 2, %s26
      // Predicated region
      $region100: #{tpu_custom_call.1} parent=5 // pred_check
        %p2186 = pneg %p2185
      $region101: #{tpu_custom_call.1} parent=5 // pred_check_branch
        %2188 = sbr.rel (%p2186) target = $region103
      $region102: #{tpu_custom_call.1} parent=5 // pred_region
        %s2189 = ssub.s32 %s26, 2
        // Predicated region
        $region104: #{tpu_custom_call.1} parent=102 // pred_check
          %p2190 = pneg %p417
        $region105: #{tpu_custom_call.1} parent=102 // pred_check_branch
          %2192 = sbr.rel (%p2190) target = $region107
        $region106: #{tpu_custom_call.1} parent=102 // pred_region
          %s2193 = sand.u32 %s402, 1
          %s2194 = scalar_lea.sflag [#allocation3], %s2193
          %s2195 = sand.u32 %s402, 1
          %s2196 = smul.addr %s2195, 4
          %s2197 = scalar_lea.vmem [#allocation2], %s2196
          %2198 = dma.done %s2194, 64
        $region107: #{tpu_custom_call.1} parent=102 // pred_fallthru
          _
      $region103: #{tpu_custom_call.1} parent=5 // pred_fallthru
        _
    $region6: #{tpu_custom_call.1} parent=1 // loop_footer
      %s30 = sadd.s32 1, %s26
    $region7: #{tpu_custom_call.1} parent=1 // loop_footer_branch
      %25 = sbr.rel target = $region3
    $region8: #{tpu_custom_call.1} parent=1 // loop_exit
      _
    %2199 = vsyncpa [#allocation3], 1
    %s2200 = scalar_lea.sflag [#allocation3], 1
    %2201 = vsyncpa %s2200, 1

// kernel: tpu_custom_call.1
$region0: #{tpu_custom_call.1}
  #allocation0 [shape = 'u32[]', space=smem, size = 0x4, offset = 0x4, fixed_abs, tag = 'smem constant byte address 0x4 - core index']
  #allocation1 [shape = 'u32[144,128]{1,0:T(1,128)}', space=vmem, size = 0x12000, scoped, tag = 'internal scratch']
  %s0 = inlined_call_operand.vmem [shape: f32[2,8,32], index: 0, kind: input, shape index: {}]
  %s1 = inlined_call_operand.vmem [shape: bf16[4,32,8], index: 1, kind: input, shape index: {}]
  %s2 = inlined_call_operand.vmem [shape: bf16[4,32,8], index: 2, kind: input, shape index: {}]
  %s3 = inlined_call_operand.vmem [shape: bf16[4,32,8], index: 3, kind: input, shape index: {}]
  %s4 = inlined_call_operand.vmem [shape: f32[4,1,8], index: 4, kind: input, shape index: {}]
  %s5 = inlined_call_operand.vmem [shape: f32[4,1,8], index: 5, kind: input, shape index: {}]
  %s6 = inlined_call_operand.vmem [shape: f32[4,1,8], index: 6, kind: input, shape index: {}]
  %s7 = inlined_call_operand.vmem [shape: bf16[4,8,32], index: 7, kind: input, shape index: {}]
  %s8 = inlined_call_operand.vmem [shape: f32[1,32], index: 8, kind: input, shape index: {}]
  %s9 = inlined_call_operand.vmem [shape: f32[1,32], index: 9, kind: input, shape index: {}]
  %s10 = inlined_call_operand.vmem [shape: f32[1,32], index: 10, kind: input, shape index: {}]
  %s11 = inlined_call_operand.vmem [shape: f32[1,32], index: 11, kind: input, shape index: {}]
  %s12 = inlined_call_operand.vmem [shape: f32[1,32], index: 12, kind: input, shape index: {}]
  %s13 = inlined_call_operand.vmem [shape: bf16[32,64], index: 13, kind: input, shape index: {}]
  %s14 = inlined_call_operand.vmem [shape: f32[1,64], index: 14, kind: input, shape index: {}]
  %s15 = inlined_call_operand.vmem [shape: bf16[64,32], index: 15, kind: input, shape index: {}]
  %s16 = inlined_call_operand.vmem [shape: f32[1,32], index: 16, kind: input, shape index: {}]
  %s17 = inlined_call_operand.hbm [shape: bf16[2,8,32], index: 17, kind: output, shape index: {}]
  %s18 = sld [smem:[#allocation0]]
  $region108: #{tpu_custom_call.1} parent=0
    _
  %s20 = ssub.s32 1, %s18
  %s21 = scalar_select 0, %s20, %s18
  $region1: #{tpu_custom_call.1} parent=0
    #allocation2 [shape = 'u8[4096]{0}', space=vmem, size = 0x1000, scoped, tag = 'output window, operand 0']
    #allocation3 [shape = 's32[2]{0}', space=sflag, size = 0x8, scoped, tag = 'scoped memory for tpu_custom_call.1']
    %22 = vsyncpa [#allocation3], 0
    %s23 = scalar_lea.sflag [#allocation3], 1
    %24 = vsyncpa %s23, 0
    loop: start=0, step=1, limit=4
    $region2: #{tpu_custom_call.1} parent=1 // loop_pre_header
      _
    $region3: #{tpu_custom_call.1} parent=1 // loop_header
      %s26 = sphi 0, %s30
      %p27 = scmp.ge.s32.totalorder %s26, 4
      %s36 = sphi 0, %s38
      %s39 = sphi 0, %s36
      %s40 = sphi 0, %s39
      %s56 = sphi 0, %s40
      %s60 = sphi 0, %s60
      %s62 = sphi 0, %s60
      %s63 = sphi 0, %s62
      %s77 = sphi 0, %s63
      %s81 = sphi 0, %s81
      %s83 = sphi 0, %s81
      %s84 = sphi 0, %s83
      %s98 = sphi 0, %s84
      %s102 = sphi 0, %s102
      %s104 = sphi 0, %s102
      %s105 = sphi 0, %s104
      %s119 = sphi 0, %s105
      %s123 = sphi 0, %s123
      %s125 = sphi 0, %s123
      %s126 = sphi 0, %s125
      %s140 = sphi 0, %s126
      %s144 = sphi 0, %s144
      %s146 = sphi 0, %s144
      %s147 = sphi 0, %s146
      %s161 = sphi 0, %s147
      %s165 = sphi 0, %s165
      %s167 = sphi 0, %s165
      %s168 = sphi 0, %s167
      %s182 = sphi 0, %s168
      %s186 = sphi 0, %s186
      %s188 = sphi 0, %s186
      %s189 = sphi 0, %s188
      %s203 = sphi 0, %s189
      %s207 = sphi 0, %s207
      %s209 = sphi 0, %s207
      %s210 = sphi 0, %s209
      %s224 = sphi 0, %s210
      %s228 = sphi 0, %s228
      %s230 = sphi 0, %s228
      %s231 = sphi 0, %s230
      %s245 = sphi 0, %s231
      %s249 = sphi 0, %s249
      %s251 = sphi 0, %s249
      %s252 = sphi 0, %s251
      %s266 = sphi 0, %s252
      %s270 = sphi 0, %s270
      %s272 = sphi 0, %s270
      %s273 = sphi 0, %s272
      %s287 = sphi 0, %s273
      %s291 = sphi 0, %s291
      %s293 = sphi 0, %s291
      %s294 = sphi 0, %s293
      %s308 = sphi 0, %s294
      %s312 = sphi 0, %s312
      %s314 = sphi 0, %s312
      %s315 = sphi 0, %s314
      %s329 = sphi 0, %s315
      %s333 = sphi 0, %s333
      %s335 = sphi 0, %s333
      %s336 = sphi 0, %s335
      %s350 = sphi 0, %s336
      %s354 = sphi 0, %s354
      %s356 = sphi 0, %s354
      %s357 = sphi 0, %s356
      %s371 = sphi 0, %s357
      %s375 = sphi 0, %s375
      %s377 = sphi 0, %s375
      %s378 = sphi 0, %s377
      %s392 = sphi 0, %s378
      %s398 = sphi 0, %s400
      %s401 = sphi 0, %s398
      %s402 = sphi 0, %s401
      %s418 = sphi 0, %s402
    $region4: #{tpu_custom_call.1} parent=1 // loop_header_branch
      %29 = sbr.rel (%p27) target = $region8
    $region5: #{tpu_custom_call.1} parent=1 // loop_body
      %s31 = ssub.s32 %s26, 1
      %s32 = ssub.s32 %s26, 2
      %s33 = sadd.s32 %s26, 1
      %s34 = ssub.s32 %s26, %s33
      %p35 = scmp.eq.s32.totalorder %s34, 0
      %s37 = sadd.s32 %s36, 1
      %s38 = scalar_select %p35, %s36, %s37
      %p41 = pneg %p35
      %p42 = scmp.eq.s32.totalorder %s26, 1
      %p43 = por %p41, %p42
      %p44 = scmp.ne.s32.totalorder %s36, %s39
      %p45 = scmp.eq.s32.totalorder %s26, 0
      %p46 = por %p44, %p45
      %p47 = scmp.ne.s32.totalorder %s36, %s39
      %p48 = scmp.eq.s32.totalorder %s31, 1
      %p49 = por %p47, %p48
      %p50 = scmp.ne.s32.totalorder %s39, %s40
      %p51 = scmp.eq.s32.totalorder %s31, 0
      %p52 = por %p50, %p51
      %p53 = scmp.ne.s32.totalorder %s39, %s40
      %p54 = scmp.eq.s32.totalorder %s32, 1
      %p55 = por %p53, %p54
      %p57 = scmp.ne.s32.totalorder %s40, %s56
      %p58 = scmp.eq.s32.totalorder %s32, 0
      %p59 = por %p57, %p58
      %s61 = sadd.s32 %s60, 1
      %p64 = scmp.eq.s32.totalorder %s26, 1
      %p65 = scmp.ne.s32.totalorder %s60, %s62
      %p66 = scmp.eq.s32.totalorder %s26, 0
      %p67 = por %p65, %p66
      %p68 = scmp.ne.s32.totalorder %s60, %s62
      %p69 = scmp.eq.s32.totalorder %s31, 1
      %p70 = por %p68, %p69
      %p71 = scmp.ne.s32.totalorder %s62, %s63
      %p72 = scmp.eq.s32.totalorder %s31, 0
      %p73 = por %p71, %p72
      %p74 = scmp.ne.s32.totalorder %s62, %s63
      %p75 = scmp.eq.s32.totalorder %s32, 1
      %p76 = por %p74, %p75
      %p78 = scmp.ne.s32.totalorder %s63, %s77
      %p79 = scmp.eq.s32.totalorder %s32, 0
      %p80 = por %p78, %p79
      %s82 = sadd.s32 %s81, 1
      %p85 = scmp.eq.s32.totalorder %s26, 1
      %p86 = scmp.ne.s32.totalorder %s81, %s83
      %p87 = scmp.eq.s32.totalorder %s26, 0
      %p88 = por %p86, %p87
      %p89 = scmp.ne.s32.totalorder %s81, %s83
      %p90 = scmp.eq.s32.totalorder %s31, 1
      %p91 = por %p89, %p90
      %p92 = scmp.ne.s32.totalorder %s83, %s84
      %p93 = scmp.eq.s32.totalorder %s31, 0
      %p94 = por %p92, %p93
      %p95 = scmp.ne.s32.totalorder %s83, %s84
      %p96 = scmp.eq.s32.totalorder %s32, 1
      %p97 = por %p95, %p96
      %p99 = scmp.ne.s32.totalorder %s84, %s98
      %p100 = scmp.eq.s32.totalorder %s32, 0
      %p101 = por %p99, %p100
      %s103 = sadd.s32 %s102, 1
      %p106 = scmp.eq.s32.totalorder %s26, 1
      %p107 = scmp.ne.s32.totalorder %s102, %s104
      %p108 = scmp.eq.s32.totalorder %s26, 0
      %p109 = por %p107, %p108
      %p110 = scmp.ne.s32.totalorder %s102, %s104
      %p111 = scmp.eq.s32.totalorder %s31, 1
      %p112 = por %p110, %p111
      %p113 = scmp.ne.s32.totalorder %s104, %s105
      %p114 = scmp.eq.s32.totalorder %s31, 0
      %p115 = por %p113, %p114
      %p116 = scmp.ne.s32.totalorder %s104, %s105
      %p117 = scmp.eq.s32.totalorder %s32, 1
      %p118 = por %p116, %p117
      %p120 = scmp.ne.s32.totalorder %s105, %s119
      %p121 = scmp.eq.s32.totalorder %s32, 0
      %p122 = por %p120, %p121
      %s124 = sadd.s32 %s123, 1
      %p127 = scmp.eq.s32.totalorder %s26, 1
      %p128 = scmp.ne.s32.totalorder %s123, %s125
      %p129 = scmp.eq.s32.totalorder %s26, 0
      %p130 = por %p128, %p129
      %p131 = scmp.ne.s32.totalorder %s123, %s125
      %p132 = scmp.eq.s32.totalorder %s31, 1
      %p133 = por %p131, %p132
      %p134 = scmp.ne.s32.totalorder %s125, %s126
      %p135 = scmp.eq.s32.totalorder %s31, 0
      %p136 = por %p134, %p135
      %p137 = scmp.ne.s32.totalorder %s125, %s126
      %p138 = scmp.eq.s32.totalorder %s32, 1
      %p139 = por %p137, %p138
      %p141 = scmp.ne.s32.totalorder %s126, %s140
      %p142 = scmp.eq.s32.totalorder %s32, 0
      %p143 = por %p141, %p142
      %s145 = sadd.s32 %s144, 1
      %p148 = scmp.eq.s32.totalorder %s26, 1
      %p149 = scmp.ne.s32.totalorder %s144, %s146
      %p150 = scmp.eq.s32.totalorder %s26, 0
      %p151 = por %p149, %p150
      %p152 = scmp.ne.s32.totalorder %s144, %s146
      %p153 = scmp.eq.s32.totalorder %s31, 1
      %p154 = por %p152, %p153
      %p155 = scmp.ne.s32.totalorder %s146, %s147
      %p156 = scmp.eq.s32.totalorder %s31, 0
      %p157 = por %p155, %p156
      %p158 = scmp.ne.s32.totalorder %s146, %s147
      %p159 = scmp.eq.s32.totalorder %s32, 1
      %p160 = por %p158, %p159
      %p162 = scmp.ne.s32.totalorder %s147, %s161
      %p163 = scmp.eq.s32.totalorder %s32, 0
      %p164 = por %p162, %p163
      %s166 = sadd.s32 %s165, 1
      %p169 = scmp.eq.s32.totalorder %s26, 1
      %p170 = scmp.ne.s32.totalorder %s165, %s167
      %p171 = scmp.eq.s32.totalorder %s26, 0
      %p172 = por %p170, %p171
      %p173 = scmp.ne.s32.totalorder %s165, %s167
      %p174 = scmp.eq.s32.totalorder %s31, 1
      %p175 = por %p173, %p174
      %p176 = scmp.ne.s32.totalorder %s167, %s168
      %p177 = scmp.eq.s32.totalorder %s31, 0
      %p178 = por %p176, %p177
      %p179 = scmp.ne.s32.totalorder %s167, %s168
      %p180 = scmp.eq.s32.totalorder %s32, 1
      %p181 = por %p179, %p180
      %p183 = scmp.ne.s32.totalorder %s168, %s182
      %p184 = scmp.eq.s32.totalorder %s32, 0
      %p185 = por %p183, %p184
      %s187 = sadd.s32 %s186, 1
      %p190 = scmp.eq.s32.totalorder %s26, 1
      %p191 = scmp.ne.s32.totalorder %s186, %s188
      %p192 = scmp.eq.s32.totalorder %s26, 0
      %p193 = por %p191, %p192
      %p194 = scmp.ne.s32.totalorder %s186, %s188
      %p195 = scmp.eq.s32.totalorder %s31, 1
      %p196 = por %p194, %p195
      %p197 = scmp.ne.s32.totalorder %s188, %s189
      %p198 = scmp.eq.s32.totalorder %s31, 0
      %p199 = por %p197, %p198
      %p200 = scmp.ne.s32.totalorder %s188, %s189
      %p201 = scmp.eq.s32.totalorder %s32, 1
      %p202 = por %p200, %p201
      %p204 = scmp.ne.s32.totalorder %s189, %s203
      %p205 = scmp.eq.s32.totalorder %s32, 0
      %p206 = por %p204, %p205
      %s208 = sadd.s32 %s207, 1
      %p211 = scmp.eq.s32.totalorder %s26, 1
      %p212 = scmp.ne.s32.totalorder %s207, %s209
      %p213 = scmp.eq.s32.totalorder %s26, 0
      %p214 = por %p212, %p213
      %p215 = scmp.ne.s32.totalorder %s207, %s209
      %p216 = scmp.eq.s32.totalorder %s31, 1
      %p217 = por %p215, %p216
      %p218 = scmp.ne.s32.totalorder %s209, %s210
      %p219 = scmp.eq.s32.totalorder %s31, 0
      %p220 = por %p218, %p219
      %p221 = scmp.ne.s32.totalorder %s209, %s210
      %p222 = scmp.eq.s32.totalorder %s32, 1
      %p223 = por %p221, %p222
      %p225 = scmp.ne.s32.totalorder %s210, %s224
      %p226 = scmp.eq.s32.totalorder %s32, 0
      %p227 = por %p225, %p226
      %s229 = sadd.s32 %s228, 1
      %p232 = scmp.eq.s32.totalorder %s26, 1
      %p233 = scmp.ne.s32.totalorder %s228, %s230
      %p234 = scmp.eq.s32.totalorder %s26, 0
      %p235 = por %p233, %p234
      %p236 = scmp.ne.s32.totalorder %s228, %s230
      %p237 = scmp.eq.s32.totalorder %s31, 1
      %p238 = por %p236, %p237
      %p239 = scmp.ne.s32.totalorder %s230, %s231
      %p240 = scmp.eq.s32.totalorder %s31, 0
      %p241 = por %p239, %p240
      %p242 = scmp.ne.s32.totalorder %s230, %s231
      %p243 = scmp.eq.s32.totalorder %s32, 1
      %p244 = por %p242, %p243
      %p246 = scmp.ne.s32.totalorder %s231, %s245
      %p247 = scmp.eq.s32.totalorder %s32, 0
      %p248 = por %p246, %p247
      %s250 = sadd.s32 %s249, 1
      %p253 = scmp.eq.s32.totalorder %s26, 1
      %p254 = scmp.ne.s32.totalorder %s249, %s251
      %p255 = scmp.eq.s32.totalorder %s26, 0
      %p256 = por %p254, %p255
      %p257 = scmp.ne.s32.totalorder %s249, %s251
      %p258 = scmp.eq.s32.totalorder %s31, 1
      %p259 = por %p257, %p258
      %p260 = scmp.ne.s32.totalorder %s251, %s252
      %p261 = scmp.eq.s32.totalorder %s31, 0
      %p262 = por %p260, %p261
      %p263 = scmp.ne.s32.totalorder %s251, %s252
      %p264 = scmp.eq.s32.totalorder %s32, 1
      %p265 = por %p263, %p264
      %p267 = scmp.ne.s32.totalorder %s252, %s266
      %p268 = scmp.eq.s32.totalorder %s32, 0
      %p269 = por %p267, %p268
      %s271 = sadd.s32 %s270, 1
      %p274 = scmp.eq.s32.totalorder %s26, 1
      %p275 = scmp.ne.s32.totalorder %s270, %s272
      %p276 = scmp.eq.s32.totalorder %s26, 0
      %p277 = por %p275, %p276
      %p278 = scmp.ne.s32.totalorder %s270, %s272
      %p279 = scmp.eq.s32.totalorder %s31, 1
      %p280 = por %p278, %p279
      %p281 = scmp.ne.s32.totalorder %s272, %s273
      %p282 = scmp.eq.s32.totalorder %s31, 0
      %p283 = por %p281, %p282
      %p284 = scmp.ne.s32.totalorder %s272, %s273
      %p285 = scmp.eq.s32.totalorder %s32, 1
      %p286 = por %p284, %p285
      %p288 = scmp.ne.s32.totalorder %s273, %s287
      %p289 = scmp.eq.s32.totalorder %s32, 0
      %p290 = por %p288, %p289
      %s292 = sadd.s32 %s291, 1
      %p295 = scmp.eq.s32.totalorder %s26, 1
      %p296 = scmp.ne.s32.totalorder %s291, %s293
      %p297 = scmp.eq.s32.totalorder %s26, 0
      %p298 = por %p296, %p297
      %p299 = scmp.ne.s32.totalorder %s291, %s293
      %p300 = scmp.eq.s32.totalorder %s31, 1
      %p301 = por %p299, %p300
      %p302 = scmp.ne.s32.totalorder %s293, %s294
      %p303 = scmp.eq.s32.totalorder %s31, 0
      %p304 = por %p302, %p303
      %p305 = scmp.ne.s32.totalorder %s293, %s294
      %p306 = scmp.eq.s32.totalorder %s32, 1
      %p307 = por %p305, %p306
      %p309 = scmp.ne.s32.totalorder %s294, %s308
      %p310 = scmp.eq.s32.totalorder %s32, 0
      %p311 = por %p309, %p310
      %s313 = sadd.s32 %s312, 1
      %p316 = scmp.eq.s32.totalorder %s26, 1
      %p317 = scmp.ne.s32.totalorder %s312, %s314
      %p318 = scmp.eq.s32.totalorder %s26, 0
      %p319 = por %p317, %p318
      %p320 = scmp.ne.s32.totalorder %s312, %s314
      %p321 = scmp.eq.s32.totalorder %s31, 1
      %p322 = por %p320, %p321
      %p323 = scmp.ne.s32.totalorder %s314, %s315
      %p324 = scmp.eq.s32.totalorder %s31, 0
      %p325 = por %p323, %p324
      %p326 = scmp.ne.s32.totalorder %s314, %s315
      %p327 = scmp.eq.s32.totalorder %s32, 1
      %p328 = por %p326, %p327
      %p330 = scmp.ne.s32.totalorder %s315, %s329
      %p331 = scmp.eq.s32.totalorder %s32, 0
      %p332 = por %p330, %p331
      %s334 = sadd.s32 %s333, 1
      %p337 = scmp.eq.s32.totalorder %s26, 1
      %p338 = scmp.ne.s32.totalorder %s333, %s335
      %p339 = scmp.eq.s32.totalorder %s26, 0
      %p340 = por %p338, %p339
      %p341 = scmp.ne.s32.totalorder %s333, %s335
      %p342 = scmp.eq.s32.totalorder %s31, 1
      %p343 = por %p341, %p342
      %p344 = scmp.ne.s32.totalorder %s335, %s336
      %p345 = scmp.eq.s32.totalorder %s31, 0
      %p346 = por %p344, %p345
      %p347 = scmp.ne.s32.totalorder %s335, %s336
      %p348 = scmp.eq.s32.totalorder %s32, 1
      %p349 = por %p347, %p348
      %p351 = scmp.ne.s32.totalorder %s336, %s350
      %p352 = scmp.eq.s32.totalorder %s32, 0
      %p353 = por %p351, %p352
      %s355 = sadd.s32 %s354, 1
      %p358 = scmp.eq.s32.totalorder %s26, 1
      %p359 = scmp.ne.s32.totalorder %s354, %s356
      %p360 = scmp.eq.s32.totalorder %s26, 0
      %p361 = por %p359, %p360
      %p362 = scmp.ne.s32.totalorder %s354, %s356
      %p363 = scmp.eq.s32.totalorder %s31, 1
      %p364 = por %p362, %p363
      %p365 = scmp.ne.s32.totalorder %s356, %s357
      %p366 = scmp.eq.s32.totalorder %s31, 0
      %p367 = por %p365, %p366
      %p368 = scmp.ne.s32.totalorder %s356, %s357
      %p369 = scmp.eq.s32.totalorder %s32, 1
      %p370 = por %p368, %p369
      %p372 = scmp.ne.s32.totalorder %s357, %s371
      %p373 = scmp.eq.s32.totalorder %s32, 0
      %p374 = por %p372, %p373
      %s376 = sadd.s32 %s375, 1
      %p379 = scmp.eq.s32.totalorder %s26, 1
      %p380 = scmp.ne.s32.totalorder %s375, %s377
      %p381 = scmp.eq.s32.totalorder %s26, 0
      %p382 = por %p380, %p381
      %p383 = scmp.ne.s32.totalorder %s375, %s377
      %p384 = scmp.eq.s32.totalorder %s31, 1
      %p385 = por %p383, %p384
      %p386 = scmp.ne.s32.totalorder %s377, %s378
      %p387 = scmp.eq.s32.totalorder %s31, 0
      %p388 = por %p386, %p387
      %p389 = scmp.ne.s32.totalorder %s377, %s378
      %p390 = scmp.eq.s32.totalorder %s32, 1
      %p391 = por %p389, %p390
      %p393 = scmp.ne.s32.totalorder %s378, %s392
      %p394 = scmp.eq.s32.totalorder %s32, 0
      %p395 = por %p393, %p394
      %s396 = ssub.s32 %s26, %s33
      %p397 = scmp.eq.s32.totalorder %s396, 0
      %s399 = sadd.s32 %s398, 1
      %s400 = scalar_select %p397, %s398, %s399
      %p403 = pneg %p397
      %p404 = scmp.eq.s32.totalorder %s26, 1
      %p405 = por %p403, %p404
      %p406 = scmp.ne.s32.totalorder %s398, %s401
      %p407 = scmp.eq.s32.totalorder %s26, 0
      %p408 = por %p406, %p407
      %p409 = scmp.ne.s32.totalorder %s398, %s401
      %p410 = scmp.eq.s32.totalorder %s31, 1
      %p411 = por %p409, %p410
      %p412 = scmp.ne.s32.totalorder %s401, %s402
      %p413 = scmp.eq.s32.totalorder %s31, 0
      %p414 = por %p412, %p413
      %p415 = scmp.ne.s32.totalorder %s401, %s402
      %p416 = scmp.eq.s32.totalorder %s32, 1
      %p417 = por %p415, %p416
      %p419 = scmp.ne.s32.totalorder %s402, %s418
      %p420 = scmp.eq.s32.totalorder %s32, 0
      %p421 = por %p419, %p420
      %p422 = scmp.le.s32.totalorder 1, %s26
      %p423 = scmp.lt.s32.totalorder %s26, 3
      %p424 = pnand %p422, %p423
      %p425 = pneg %p424
      // Predicated region
      $region9: #{tpu_custom_call.1} parent=5 // pred_check
        _
      $region10: #{tpu_custom_call.1} parent=5 // pred_check_branch
        %427 = sbr.rel (%p424) target = $region12
      $region11: #{tpu_custom_call.1} parent=5 // pred_region
        %s428 = ssub.s32 %s26, 1
        // Predicated region
        $region13: #{tpu_custom_call.1} parent=11 // pred_check
          %p429 = pneg %p73
        $region14: #{tpu_custom_call.1} parent=11 // pred_check_branch
          %431 = sbr.rel (%p429) target = $region16
        $region15: #{tpu_custom_call.1} parent=11 // pred_region
          _
        $region16: #{tpu_custom_call.1} parent=11 // pred_fallthru
          _
        // Predicated region
        $region17: #{tpu_custom_call.1} parent=11 // pred_check
          %p432 = pneg %p94
        $region18: #{tpu_custom_call.1} parent=11 // pred_check_branch
          %434 = sbr.rel (%p432) target = $region20
        $region19: #{tpu_custom_call.1} parent=11 // pred_region
          _
        $region20: #{tpu_custom_call.1} parent=11 // pred_fallthru
          _
        // Predicated region
        $region21: #{tpu_custom_call.1} parent=11 // pred_check
          %p435 = pneg %p115
        $region22: #{tpu_custom_call.1} parent=11 // pred_check_branch
          %437 = sbr.rel (%p435) target = $region24
        $region23: #{tpu_custom_call.1} parent=11 // pred_region
          _
        $region24: #{tpu_custom_call.1} parent=11 // pred_fallthru
          _
        // Predicated region
        $region25: #{tpu_custom_call.1} parent=11 // pred_check
          %p438 = pneg %p136
        $region26: #{tpu_custom_call.1} parent=11 // pred_check_branch
          %440 = sbr.rel (%p438) target = $region28
        $region27: #{tpu_custom_call.1} parent=11 // pred_region
          _
        $region28: #{tpu_custom_call.1} parent=11 // pred_fallthru
          _
        // Predicated region
        $region29: #{tpu_custom_call.1} parent=11 // pred_check
          %p441 = pneg %p157
        $region30: #{tpu_custom_call.1} parent=11 // pred_check_branch
          %443 = sbr.rel (%p441) target = $region32
        $region31: #{tpu_custom_call.1} parent=11 // pred_region
          _
        $region32: #{tpu_custom_call.1} parent=11 // pred_fallthru
          _
        // Predicated region
        $region33: #{tpu_custom_call.1} parent=11 // pred_check
          %p444 = pneg %p178
        $region34: #{tpu_custom_call.1} parent=11 // pred_check_branch
          %446 = sbr.rel (%p444) target = $region36
        $region35: #{tpu_custom_call.1} parent=11 // pred_region
          _
        $region36: #{tpu_custom_call.1} parent=11 // pred_fallthru
          _
        // Predicated region
        $region37: #{tpu_custom_call.1} parent=11 // pred_check
          %p447 = pneg %p199
        $region38: #{tpu_custom_call.1} parent=11 // pred_check_branch
          %449 = sbr.rel (%p447) target = $region40
        $region39: #{tpu_custom_call.1} parent=11 // pred_region
          _
        $region40: #{tpu_custom_call.1} parent=11 // pred_fallthru
          _
        // Predicated region
        $region41: #{tpu_custom_call.1} parent=11 // pred_check
          %p450 = pneg %p220
        $region42: #{tpu_custom_call.1} parent=11 // pred_check_branch
          %452 = sbr.rel (%p450) target = $region44
        $region43: #{tpu_custom_call.1} parent=11 // pred_region
          _
        $region44: #{tpu_custom_call.1} parent=11 // pred_fallthru
          _
        // Predicated region
        $region45: #{tpu_custom_call.1} parent=11 // pred_check
          %p453 = pneg %p241
        $region46: #{tpu_custom_call.1} parent=11 // pred_check_branch
          %455 = sbr.rel (%p453) target = $region48
        $region47: #{tpu_custom_call.1} parent=11 // pred_region
          _
        $region48: #{tpu_custom_call.1} parent=11 // pred_fallthru
          _
        // Predicated region
        $region49: #{tpu_custom_call.1} parent=11 // pred_check
          %p456 = pneg %p262
        $region50: #{tpu_custom_call.1} parent=11 // pred_check_branch
          %458 = sbr.rel (%p456) target = $region52
        $region51: #{tpu_custom_call.1} parent=11 // pred_region
          _
        $region52: #{tpu_custom_call.1} parent=11 // pred_fallthru
          _
        // Predicated region
        $region53: #{tpu_custom_call.1} parent=11 // pred_check
          %p459 = pneg %p283
        $region54: #{tpu_custom_call.1} parent=11 // pred_check_branch
          %461 = sbr.rel (%p459) target = $region56
        $region55: #{tpu_custom_call.1} parent=11 // pred_region
          _
        $region56: #{tpu_custom_call.1} parent=11 // pred_fallthru
          _
        // Predicated region
        $region57: #{tpu_custom_call.1} parent=11 // pred_check
          %p462 = pneg %p304
        $region58: #{tpu_custom_call.1} parent=11 // pred_check_branch
          %464 = sbr.rel (%p462) target = $region60
        $region59: #{tpu_custom_call.1} parent=11 // pred_region
          _
        $region60: #{tpu_custom_call.1} parent=11 // pred_fallthru
          _
        // Predicated region
        $region61: #{tpu_custom_call.1} parent=11 // pred_check
          %p465 = pneg %p325
        $region62: #{tpu_custom_call.1} parent=11 // pred_check_branch
          %467 = sbr.rel (%p465) target = $region64
        $region63: #{tpu_custom_call.1} parent=11 // pred_region
          _
        $region64: #{tpu_custom_call.1} parent=11 // pred_fallthru
          _
        // Predicated region
        $region65: #{tpu_custom_call.1} parent=11 // pred_check
          %p468 = pneg %p346
        $region66: #{tpu_custom_call.1} parent=11 // pred_check_branch
          %470 = sbr.rel (%p468) target = $region68
        $region67: #{tpu_custom_call.1} parent=11 // pred_region
          _
        $region68: #{tpu_custom_call.1} parent=11 // pred_fallthru
          _
        // Predicated region
        $region69: #{tpu_custom_call.1} parent=11 // pred_check
          %p471 = pneg %p367
        $region70: #{tpu_custom_call.1} parent=11 // pred_check_branch
          %473 = sbr.rel (%p471) target = $region72
        $region71: #{tpu_custom_call.1} parent=11 // pred_region
          _
        $region72: #{tpu_custom_call.1} parent=11 // pred_fallthru
          _
        // Predicated region
        $region73: #{tpu_custom_call.1} parent=11 // pred_check
          %p474 = pneg %p388
        $region74: #{tpu_custom_call.1} parent=11 // pred_check_branch
          %476 = sbr.rel (%p474) target = $region76
        $region75: #{tpu_custom_call.1} parent=11 // pred_region
          _
        $region76: #{tpu_custom_call.1} parent=11 // pred_fallthru
          _
      $region12: #{tpu_custom_call.1} parent=5 // pred_fallthru
        _
      %p477 = scmp.lt.s32.totalorder %s26, 2
      // Predicated region
      $region77: #{tpu_custom_call.1} parent=5 // pred_check
        %p478 = pneg %p477
      $region78: #{tpu_custom_call.1} parent=5 // pred_check_branch
        %480 = sbr.rel (%p478) target = $region80
      $region79: #{tpu_custom_call.1} parent=5 // pred_region
        // Predicated region
        $region81: #{tpu_custom_call.1} parent=79 // pred_check
          %p481 = pneg %p46
        $region82: #{tpu_custom_call.1} parent=79 // pred_check_branch
          %483 = sbr.rel (%p481) target = $region84
        $region83: #{tpu_custom_call.1} parent=79 // pred_region
          %p484 = scmp.lt.s32.totalorder %s26, 1
          %s485 = scalar_select %p484, %s26, 1
          %s486 = smul.addr %s485, 8
          %s487 = scalar_lea.vmem %s0, %s486
        $region84: #{tpu_custom_call.1} parent=79 // pred_fallthru
          _
      $region80: #{tpu_custom_call.1} parent=5 // pred_fallthru
        _
      %p488 = scmp.le.s32.totalorder 1, %s26
      %p489 = scmp.lt.s32.totalorder %s26, 3
      %p490 = pnand %p488, %p489
      %p491 = pneg %p490
      // Predicated region
      $region85: #{tpu_custom_call.1} parent=5 // pred_check
        _
      $region86: #{tpu_custom_call.1} parent=5 // pred_check_branch
        %493 = sbr.rel (%p490) target = $region88
      $region87: #{tpu_custom_call.1} parent=5 // pred_region
        %s494 = ssub.s32 %s26, 1
        %p495 = scmp.lt.s32.totalorder %s31, 1
        %s496 = scalar_select %p495, %s31, 1
        %s497 = smul.addr %s496, 8
        %s498 = scalar_lea.vmem %s0, %s497
        %p499 = pneg %p52
        %p500 = pneg %p49
        %p501 = pneg %p73
        %p502 = pneg %p70
        %p503 = pneg %p94
        %p504 = pneg %p91
        %p505 = pneg %p115
        %p506 = pneg %p112
        %p507 = pneg %p136
        %p508 = pneg %p133
        %p509 = pneg %p157
        %p510 = pneg %p154
        %p511 = pneg %p178
        %p512 = pneg %p175
        %p513 = pneg %p199
        %p514 = pneg %p196
        %p515 = pneg %p220
        %p516 = pneg %p217
        %p517 = pneg %p241
        %p518 = pneg %p238
        %p519 = pneg %p262
        %p520 = pneg %p259
        %p521 = pneg %p283
        %p522 = pneg %p280
        %p523 = pneg %p304
        %p524 = pneg %p301
        %p525 = pneg %p325
        %p526 = pneg %p322
        %p527 = pneg %p346
        %p528 = pneg %p343
        %p529 = pneg %p367
        %p530 = pneg %p364
        %p531 = pneg %p388
        %p532 = pneg %p385
        %p533 = pneg %p414
        %p534 = pneg %p411
        %s535 = sand.u32 %s401, 1
        %s536 = scalar_lea.sflag [#allocation3], %s535
        %s537 = sand.u32 %s401, 1
        %s538 = smul.addr %s537, 4
        %s539 = scalar_lea.vmem [#allocation2], %s538
        %p540 = scmp.lt.s32.totalorder %s31, 1
        %s541 = scalar_select %p540, %s31, 1
        %s542 = smul.addr %s541, 8
        %s543 = scalar_lea.vmem %s0, %s542
        %v545 = vld [vmem:[%s543] sm:$0xff]
        %v546 = vld [vmem:[%s1] sm:$0xf]
        %v547 = vld [vmem:[%s1 + $0x4] sm:$0xf]
        %v548 = vld [vmem:[%s1 + $0x8] sm:$0xf]
        %v549 = vld [vmem:[%s1 + $0xc] sm:$0xf]
        %v550 = vld [vmem:[%s1 + $0x10] sm:$0xf]
        %v551 = vld [vmem:[%s1 + $0x14] sm:$0xf]
        %v552 = vld [vmem:[%s1 + $0x18] sm:$0xf]
        %v553 = vld [vmem:[%s1 + $0x1c] sm:$0xf]
        %v554 = vld [vmem:[%s1 + $0x20] sm:$0xf]
        %v555 = vld [vmem:[%s1 + $0x24] sm:$0xf]
        %v556 = vld [vmem:[%s1 + $0x28] sm:$0xf]
        %v557 = vld [vmem:[%s1 + $0x2c] sm:$0xf]
        %v558 = vld [vmem:[%s1 + $0x30] sm:$0xf]
        %v559 = vld [vmem:[%s1 + $0x34] sm:$0xf]
        %v560 = vld [vmem:[%s1 + $0x38] sm:$0xf]
        %v561 = vld [vmem:[%s1 + $0x3c] sm:$0xf]
        %v562 = vld [vmem:[%s2] sm:$0xf]
        %v563 = vld [vmem:[%s2 + $0x4] sm:$0xf]
        %v564 = vld [vmem:[%s2 + $0x8] sm:$0xf]
        %v565 = vld [vmem:[%s2 + $0xc] sm:$0xf]
        %v566 = vld [vmem:[%s2 + $0x10] sm:$0xf]
        %v567 = vld [vmem:[%s2 + $0x14] sm:$0xf]
        %v568 = vld [vmem:[%s2 + $0x18] sm:$0xf]
        %v569 = vld [vmem:[%s2 + $0x1c] sm:$0xf]
        %v570 = vld [vmem:[%s2 + $0x20] sm:$0xf]
        %v571 = vld [vmem:[%s2 + $0x24] sm:$0xf]
        %v572 = vld [vmem:[%s2 + $0x28] sm:$0xf]
        %v573 = vld [vmem:[%s2 + $0x2c] sm:$0xf]
        %v574 = vld [vmem:[%s2 + $0x30] sm:$0xf]
        %v575 = vld [vmem:[%s2 + $0x34] sm:$0xf]
        %v576 = vld [vmem:[%s2 + $0x38] sm:$0xf]
        %v577 = vld [vmem:[%s2 + $0x3c] sm:$0xf]
        %v578 = vld [vmem:[%s3] sm:$0xf]
        %v579 = vld [vmem:[%s3 + $0x4] sm:$0xf]
        %v580 = vld [vmem:[%s3 + $0x8] sm:$0xf]
        %v581 = vld [vmem:[%s3 + $0xc] sm:$0xf]
        %v582 = vld [vmem:[%s3 + $0x10] sm:$0xf]
        %v583 = vld [vmem:[%s3 + $0x14] sm:$0xf]
        %v584 = vld [vmem:[%s3 + $0x18] sm:$0xf]
        %v585 = vld [vmem:[%s3 + $0x1c] sm:$0xf]
        %v586 = vld [vmem:[%s3 + $0x20] sm:$0xf]
        %v587 = vld [vmem:[%s3 + $0x24] sm:$0xf]
        %v588 = vld [vmem:[%s3 + $0x28] sm:$0xf]
        %v589 = vld [vmem:[%s3 + $0x2c] sm:$0xf]
        %v590 = vld [vmem:[%s3 + $0x30] sm:$0xf]
        %v591 = vld [vmem:[%s3 + $0x34] sm:$0xf]
        %v592 = vld [vmem:[%s3 + $0x38] sm:$0xf]
        %v593 = vld [vmem:[%s3 + $0x3c] sm:$0xf]
        %v594 = vld [vmem:[%s7] sm:$0xf]
        %v595 = vld [vmem:[%s7 + $0x4] sm:$0xf]
        %v596 = vld [vmem:[%s7 + $0x8] sm:$0xf]
        %v597 = vld [vmem:[%s7 + $0xc] sm:$0xf]
        %v598 = vld [vmem:[%s13] sm:$0xf]
        %v599 = vld [vmem:[%s13 + $0x4] sm:$0xf]
        %v600 = vld [vmem:[%s13 + $0x8] sm:$0xf]
        %v601 = vld [vmem:[%s13 + $0xc] sm:$0xf]
        %v602 = vld [vmem:[%s15] sm:$0xf]
        %v603 = vld [vmem:[%s15 + $0x4] sm:$0xf]
        %v604 = vld [vmem:[%s15 + $0x8] sm:$0xf]
        %v605 = vld [vmem:[%s15 + $0xc] sm:$0xf]
        %v606 = vld [vmem:[%s15 + $0x10] sm:$0xf]
        %v607 = vld [vmem:[%s15 + $0x14] sm:$0xf]
        %v608 = vld [vmem:[%s15 + $0x18] sm:$0xf]
        %v609 = vld [vmem:[%s15 + $0x1c] sm:$0xf]
        %v610 = vld [vmem:[%s9] sm:$0x1]
        %v612 = vlaneseq
        %v613 = vshrl.u32 %v612, 7
        %v614 = vsub.s32 0, %v613
        %v615 = vrot.slane %v610, %v614
        %v617 = vld [vmem:[%s10] sm:$0x1]
        %v619 = vlaneseq
        %v620 = vshrl.u32 %v619, 7
        %v621 = vsub.s32 0, %v620
        %v622 = vrot.slane %v617, %v621
        %v624 = vld [vmem:[%s11] sm:$0x1]
        %v626 = vlaneseq
        %v627 = vshrl.u32 %v626, 7
        %v628 = vsub.s32 0, %v627
        %v629 = vrot.slane %v624, %v628
        %v631 = vld [vmem:[%s12] sm:$0x1]
        %v633 = vlaneseq
        %v634 = vshrl.u32 %v633, 7
        %v635 = vsub.s32 0, %v634
        %v636 = vrot.slane %v631, %v635
        %v638 = vld [vmem:[%s4] sm:$0x1]
        %v639 = vld [vmem:[%s4 + $0x1] sm:$0x1]
        %v640 = vld [vmem:[%s4 + $0x2] sm:$0x1]
        %v641 = vld [vmem:[%s4 + $0x3] sm:$0x1]
        %v646 = vlaneseq
        %v647 = vshrl.u32 %v646, 7
        %v648 = vsub.s32 0, %v647
        %v649 = vrot.slane %v638, %v648
        %v650 = vlaneseq
        %v651 = vshrl.u32 %v650, 7
        %v652 = vsub.s32 0, %v651
        %v653 = vrot.slane %v639, %v652
        %v654 = vlaneseq
        %v655 = vshrl.u32 %v654, 7
        %v656 = vsub.s32 0, %v655
        %v657 = vrot.slane %v640, %v656
        %v658 = vlaneseq
        %v659 = vshrl.u32 %v658, 7
        %v660 = vsub.s32 0, %v659
        %v661 = vrot.slane %v641, %v660
        %v666 = vld [vmem:[%s5] sm:$0x1]
        %v667 = vld [vmem:[%s5 + $0x1] sm:$0x1]
        %v668 = vld [vmem:[%s5 + $0x2] sm:$0x1]
        %v669 = vld [vmem:[%s5 + $0x3] sm:$0x1]
        %v674 = vlaneseq
        %v675 = vshrl.u32 %v674, 7
        %v676 = vsub.s32 0, %v675
        %v677 = vrot.slane %v666, %v676
        %v678 = vlaneseq
        %v679 = vshrl.u32 %v678, 7
        %v680 = vsub.s32 0, %v679
        %v681 = vrot.slane %v667, %v680
        %v682 = vlaneseq
        %v683 = vshrl.u32 %v682, 7
        %v684 = vsub.s32 0, %v683
        %v685 = vrot.slane %v668, %v684
        %v686 = vlaneseq
        %v687 = vshrl.u32 %v686, 7
        %v688 = vsub.s32 0, %v687
        %v689 = vrot.slane %v669, %v688
        %v694 = vld [vmem:[%s6] sm:$0x1]
        %v695 = vld [vmem:[%s6 + $0x1] sm:$0x1]
        %v696 = vld [vmem:[%s6 + $0x2] sm:$0x1]
        %v697 = vld [vmem:[%s6 + $0x3] sm:$0x1]
        %v702 = vlaneseq
        %v703 = vshrl.u32 %v702, 7
        %v704 = vsub.s32 0, %v703
        %v705 = vrot.slane %v694, %v704
        %v706 = vlaneseq
        %v707 = vshrl.u32 %v706, 7
        %v708 = vsub.s32 0, %v707
        %v709 = vrot.slane %v695, %v708
        %v710 = vlaneseq
        %v711 = vshrl.u32 %v710, 7
        %v712 = vsub.s32 0, %v711
        %v713 = vrot.slane %v696, %v712
        %v714 = vlaneseq
        %v715 = vshrl.u32 %v714, 7
        %v716 = vsub.s32 0, %v715
        %v717 = vrot.slane %v697, %v716
        %v722 = vld [vmem:[%s8] sm:$0x1]
        %v724 = vlaneseq
        %v725 = vshrl.u32 %v724, 7
        %v726 = vsub.s32 0, %v725
        %v727 = vrot.slane %v722, %v726
        %v729 = vld [vmem:[%s14] sm:$0x1]
        %v731 = vlaneseq
        %v732 = vshrl.u32 %v731, 7
        %v733 = vsub.s32 0, %v732
        %v734 = vrot.slane %v729, %v733
        %v736 = vld [vmem:[%s16] sm:$0x1]
        %v738 = vlaneseq
        %v739 = vshrl.u32 %v738, 7
        %v740 = vsub.s32 0, %v739
        %v741 = vrot.slane %v736, %v740
        loop: start=0, step=1, limit=2
        $region89: #{tpu_custom_call.1} parent=87 // loop_pre_header
          _
        $region90: #{tpu_custom_call.1} parent=87 // loop_header
          %s744 = sphi 0, %s748
          %p745 = scmp.ge.s32.totalorder %s744, 2
          %v749 = vphi %v545, %v2163
        $region91: #{tpu_custom_call.1} parent=87 // loop_header_branch
          %747 = sbr.rel (%p745) target = $region95
        $region92: #{tpu_custom_call.1} parent=87 // loop_body
          %vm750 = vcmask 261120
          %v751 = vsel %vm750, %v749, 0.0
          %752 = vadd.xlane.f32.xlu0 %v751
          %v753 = vpop.xlane.xlu0 %752
          %v754 = vrcp.pop 32.0
          %v755 = vmul.f32 %v753, %v754
          %v756 = vsub.f32 %v749, %v755
          %v757 = vmul.f32 %v756, %v756
          %v758 = vsel %vm750, %v757, 0.0
          %759 = vadd.xlane.f32.xlu0 %v758
          %v760 = vpop.xlane.xlu0 %759
          %v761 = vmul.f32 %v760, %v754
          %v762 = vadd.f32 %v761, 1e-05
          %v763 = vrsqrt.pop %v762
          %v764 = vmul.f32 %v756, %v763
          %v765 = vmul.f32 %v764, %v615
          %v766 = vadd.f32 %v765, %v622
          %v767 = vpack.c.bf16 %v766, %v766
          %v772 = vunpack.c.l.b16 %v546
          %v773 = vunpack.c.l.b16 %v547
          %v774 = vunpack.c.l.b16 %v548
          %v775 = vunpack.c.l.b16 %v549
          %v776 = vpack.c.b16 %v773, %v772
          %v777 = vpack.c.b16 %v775, %v774
          %v781 = vsel %vm750, %v767, 0
          %783 = vmatprep.subr.bf16.mxu0 0
          %784 = vmatpush1.bf16.msra.mxu0 %v776
          %785 = vmatprep.subr.bf16.mxu0 0
          %786 = vmatpush1.bf16.msra.mxu0 %v777
          %787 = vmatprep.subr.bf16.mxu0 0
          %788 = vmatpush1.bf16.msra.mxu0 0
          %789 = vmatprep.subr.bf16.mxu0 0
          %790 = vmatpush1.bf16.msra.mxu0 0
          %791 = vmatprep.subr.bf16.mxu0 0
          %792 = vmatpush1.bf16.msra.mxu0 0
          %793 = vmatprep.subr.bf16.mxu0 0
          %794 = vmatpush1.bf16.msra.mxu0 0
          %795 = vmatprep.subr.bf16.mxu0 0
          %796 = vmatpush1.bf16.msra.mxu0 0
          %797 = vmatprep.subr.bf16.mxu0 0
          %798 = vmatpush1.bf16.msra.mxu0 0
          %799 = vmatprep.subr.bf16.mxu0 0
          %800 = vmatpush1.bf16.msra.mxu0 0
          %801 = vmatprep.subr.bf16.mxu0 0
          %802 = vmatpush1.bf16.msra.mxu0 0
          %803 = vmatprep.subr.bf16.mxu0 0
          %804 = vmatpush1.bf16.msra.mxu0 0
          %805 = vmatprep.subr.bf16.mxu0 0
          %806 = vmatpush1.bf16.msra.mxu0 0
          %807 = vmatprep.subr.bf16.mxu0 0
          %808 = vmatpush1.bf16.msra.mxu0 0
          %809 = vmatprep.subr.bf16.mxu0 0
          %810 = vmatpush1.bf16.msra.mxu0 0
          %811 = vmatprep.subr.bf16.mxu0 0
          %812 = vmatpush1.bf16.msra.mxu0 0
          %813 = vmatprep.subr.bf16.mxu0 0
          %814 = vmatpush1.bf16.msra.mxu0 0
          %815 = vmatprep.mubr.bf16.mxu0 0
          %816 = vmatmul.mubr.bf16.gmra.mrb[0].mxu0 %v781
          %v817 = vpop.f32.mrb[0].mxu0
          %v818 = vadd.f32 %v649, %v817
          %v819 = vpop.f32.mrb[0].mxu0
          %v820 = vpop.f32.mrb[0].mxu0
          %v821 = vpop.f32.mrb[0].mxu0
          %822 = vdwg.mxu0
          %v827 = vunpack.c.l.b16 %v550
          %v828 = vunpack.c.l.b16 %v551
          %v829 = vunpack.c.l.b16 %v552
          %v830 = vunpack.c.l.b16 %v553
          %v831 = vpack.c.b16 %v828, %v827
          %v832 = vpack.c.b16 %v830, %v829
          %835 = vmatprep.subr.bf16.mxu0 0
          %836 = vmatpush1.bf16.msra.mxu0 %v831
          %837 = vmatprep.subr.bf16.mxu0 0
          %838 = vmatpush1.bf16.msra.mxu0 %v832
          %839 = vmatprep.subr.bf16.mxu0 0
          %840 = vmatpush1.bf16.msra.mxu0 0
          %841 = vmatprep.subr.bf16.mxu0 0
          %842 = vmatpush1.bf16.msra.mxu0 0
          %843 = vmatprep.subr.bf16.mxu0 0
          %844 = vmatpush1.bf16.msra.mxu0 0
          %845 = vmatprep.subr.bf16.mxu0 0
          %846 = vmatpush1.bf16.msra.mxu0 0
          %847 = vmatprep.subr.bf16.mxu0 0
          %848 = vmatpush1.bf16.msra.mxu0 0
          %849 = vmatprep.subr.bf16.mxu0 0
          %850 = vmatpush1.bf16.msra.mxu0 0
          %851 = vmatprep.subr.bf16.mxu0 0
          %852 = vmatpush1.bf16.msra.mxu0 0
          %853 = vmatprep.subr.bf16.mxu0 0
          %854 = vmatpush1.bf16.msra.mxu0 0
          %855 = vmatprep.subr.bf16.mxu0 0
          %856 = vmatpush1.bf16.msra.mxu0 0
          %857 = vmatprep.subr.bf16.mxu0 0
          %858 = vmatpush1.bf16.msra.mxu0 0
          %859 = vmatprep.subr.bf16.mxu0 0
          %860 = vmatpush1.bf16.msra.mxu0 0
          %861 = vmatprep.subr.bf16.mxu0 0
          %862 = vmatpush1.bf16.msra.mxu0 0
          %863 = vmatprep.subr.bf16.mxu0 0
          %864 = vmatpush1.bf16.msra.mxu0 0
          %865 = vmatprep.subr.bf16.mxu0 0
          %866 = vmatpush1.bf16.msra.mxu0 0
          %867 = vmatprep.mubr.bf16.mxu0 0
          %868 = vmatmul.mubr.bf16.gmra.mrb[0].mxu0 %v781
          %v869 = vpop.f32.mrb[0].mxu0
          %v870 = vadd.f32 %v653, %v869
          %v871 = vpop.f32.mrb[0].mxu0
          %v872 = vpop.f32.mrb[0].mxu0
          %v873 = vpop.f32.mrb[0].mxu0
          %874 = vdwg.mxu0
          %v879 = vunpack.c.l.b16 %v554
          %v880 = vunpack.c.l.b16 %v555
          %v881 = vunpack.c.l.b16 %v556
          %v882 = vunpack.c.l.b16 %v557
          %v883 = vpack.c.b16 %v880, %v879
          %v884 = vpack.c.b16 %v882, %v881
          %887 = vmatprep.subr.bf16.mxu0 0
          %888 = vmatpush1.bf16.msra.mxu0 %v883
          %889 = vmatprep.subr.bf16.mxu0 0
          %890 = vmatpush1.bf16.msra.mxu0 %v884
          %891 = vmatprep.subr.bf16.mxu0 0
          %892 = vmatpush1.bf16.msra.mxu0 0
          %893 = vmatprep.subr.bf16.mxu0 0
          %894 = vmatpush1.bf16.msra.mxu0 0
          %895 = vmatprep.subr.bf16.mxu0 0
          %896 = vmatpush1.bf16.msra.mxu0 0
          %897 = vmatprep.subr.bf16.mxu0 0
          %898 = vmatpush1.bf16.msra.mxu0 0
          %899 = vmatprep.subr.bf16.mxu0 0
          %900 = vmatpush1.bf16.msra.mxu0 0
          %901 = vmatprep.subr.bf16.mxu0 0
          %902 = vmatpush1.bf16.msra.mxu0 0
          %903 = vmatprep.subr.bf16.mxu0 0
          %904 = vmatpush1.bf16.msra.mxu0 0
          %905 = vmatprep.subr.bf16.mxu0 0
          %906 = vmatpush1.bf16.msra.mxu0 0
          %907 = vmatprep.subr.bf16.mxu0 0
          %908 = vmatpush1.bf16.msra.mxu0 0
          %909 = vmatprep.subr.bf16.mxu0 0
          %910 = vmatpush1.bf16.msra.mxu0 0
          %911 = vmatprep.subr.bf16.mxu0 0
          %912 = vmatpush1.bf16.msra.mxu0 0
          %913 = vmatprep.subr.bf16.mxu0 0
          %914 = vmatpush1.bf16.msra.mxu0 0
          %915 = vmatprep.subr.bf16.mxu0 0
          %916 = vmatpush1.bf16.msra.mxu0 0
          %917 = vmatprep.subr.bf16.mxu0 0
          %918 = vmatpush1.bf16.msra.mxu0 0
          %919 = vmatprep.mubr.bf16.mxu0 0
          %920 = vmatmul.mubr.bf16.gmra.mrb[0].mxu0 %v781
          %v921 = vpop.f32.mrb[0].mxu0
          %v922 = vadd.f32 %v657, %v921
          %v923 = vpop.f32.mrb[0].mxu0
          %v924 = vpop.f32.mrb[0].mxu0
          %v925 = vpop.f32.mrb[0].mxu0
          %926 = vdwg.mxu0
          %v931 = vunpack.c.l.b16 %v558
          %v932 = vunpack.c.l.b16 %v559
          %v933 = vunpack.c.l.b16 %v560
          %v934 = vunpack.c.l.b16 %v561
          %v935 = vpack.c.b16 %v932, %v931
          %v936 = vpack.c.b16 %v934, %v933
          %939 = vmatprep.subr.bf16.mxu0 0
          %940 = vmatpush1.bf16.msra.mxu0 %v935
          %941 = vmatprep.subr.bf16.mxu0 0
          %942 = vmatpush1.bf16.msra.mxu0 %v936
          %943 = vmatprep.subr.bf16.mxu0 0
          %944 = vmatpush1.bf16.msra.mxu0 0
          %945 = vmatprep.subr.bf16.mxu0 0
          %946 = vmatpush1.bf16.msra.mxu0 0
          %947 = vmatprep.subr.bf16.mxu0 0
          %948 = vmatpush1.bf16.msra.mxu0 0
          %949 = vmatprep.subr.bf16.mxu0 0
          %950 = vmatpush1.bf16.msra.mxu0 0
          %951 = vmatprep.subr.bf16.mxu0 0
          %952 = vmatpush1.bf16.msra.mxu0 0
          %953 = vmatprep.subr.bf16.mxu0 0
          %954 = vmatpush1.bf16.msra.mxu0 0
          %955 = vmatprep.subr.bf16.mxu0 0
          %956 = vmatpush1.bf16.msra.mxu0 0
          %957 = vmatprep.subr.bf16.mxu0 0
          %958 = vmatpush1.bf16.msra.mxu0 0
          %959 = vmatprep.subr.bf16.mxu0 0
          %960 = vmatpush1.bf16.msra.mxu0 0
          %961 = vmatprep.subr.bf16.mxu0 0
          %962 = vmatpush1.bf16.msra.mxu0 0
          %963 = vmatprep.subr.bf16.mxu0 0
          %964 = vmatpush1.bf16.msra.mxu0 0
          %965 = vmatprep.subr.bf16.mxu0 0
          %966 = vmatpush1.bf16.msra.mxu0 0
          %967 = vmatprep.subr.bf16.mxu0 0
          %968 = vmatpush1.bf16.msra.mxu0 0
          %969 = vmatprep.subr.bf16.mxu0 0
          %970 = vmatpush1.bf16.msra.mxu0 0
          %971 = vmatprep.mubr.bf16.mxu0 0
          %972 = vmatmul.mubr.bf16.gmra.mrb[0].mxu0 %v781
          %v973 = vpop.f32.mrb[0].mxu0
          %v974 = vadd.f32 %v661, %v973
          %v975 = vpop.f32.mrb[0].mxu0
          %v976 = vpop.f32.mrb[0].mxu0
          %v977 = vpop.f32.mrb[0].mxu0
          %978 = vdwg.mxu0
          %v983 = vunpack.c.l.b16 %v562
          %v984 = vunpack.c.l.b16 %v563
          %v985 = vunpack.c.l.b16 %v564
          %v986 = vunpack.c.l.b16 %v565
          %v987 = vpack.c.b16 %v984, %v983
          %v988 = vpack.c.b16 %v986, %v985
          %991 = vmatprep.subr.bf16.mxu0 0
          %992 = vmatpush1.bf16.msra.mxu0 %v987
          %993 = vmatprep.subr.bf16.mxu0 0
          %994 = vmatpush1.bf16.msra.mxu0 %v988
          %995 = vmatprep.subr.bf16.mxu0 0
          %996 = vmatpush1.bf16.msra.mxu0 0
          %997 = vmatprep.subr.bf16.mxu0 0
          %998 = vmatpush1.bf16.msra.mxu0 0
          %999 = vmatprep.subr.bf16.mxu0 0
          %1000 = vmatpush1.bf16.msra.mxu0 0
          %1001 = vmatprep.subr.bf16.mxu0 0
          %1002 = vmatpush1.bf16.msra.mxu0 0
          %1003 = vmatprep.subr.bf16.mxu0 0
          %1004 = vmatpush1.bf16.msra.mxu0 0
          %1005 = vmatprep.subr.bf16.mxu0 0
          %1006 = vmatpush1.bf16.msra.mxu0 0
          %1007 = vmatprep.subr.bf16.mxu0 0
          %1008 = vmatpush1.bf16.msra.mxu0 0
          %1009 = vmatprep.subr.bf16.mxu0 0
          %1010 = vmatpush1.bf16.msra.mxu0 0
          %1011 = vmatprep.subr.bf16.mxu0 0
          %1012 = vmatpush1.bf16.msra.mxu0 0
          %1013 = vmatprep.subr.bf16.mxu0 0
          %1014 = vmatpush1.bf16.msra.mxu0 0
          %1015 = vmatprep.subr.bf16.mxu0 0
          %1016 = vmatpush1.bf16.msra.mxu0 0
          %1017 = vmatprep.subr.bf16.mxu0 0
          %1018 = vmatpush1.bf16.msra.mxu0 0
          %1019 = vmatprep.subr.bf16.mxu0 0
          %1020 = vmatpush1.bf16.msra.mxu0 0
          %1021 = vmatprep.subr.bf16.mxu0 0
          %1022 = vmatpush1.bf16.msra.mxu0 0
          %1023 = vmatprep.mubr.bf16.mxu0 0
          %1024 = vmatmul.mubr.bf16.gmra.mrb[0].mxu0 %v781
          %v1025 = vpop.f32.mrb[0].mxu0
          %v1026 = vadd.f32 %v677, %v1025
          %v1027 = vpop.f32.mrb[0].mxu0
          %v1028 = vpop.f32.mrb[0].mxu0
          %v1029 = vpop.f32.mrb[0].mxu0
          %1030 = vdwg.mxu0
          %v1035 = vunpack.c.l.b16 %v566
          %v1036 = vunpack.c.l.b16 %v567
          %v1037 = vunpack.c.l.b16 %v568
          %v1038 = vunpack.c.l.b16 %v569
          %v1039 = vpack.c.b16 %v1036, %v1035
          %v1040 = vpack.c.b16 %v1038, %v1037
          %1043 = vmatprep.subr.bf16.mxu0 0
          %1044 = vmatpush1.bf16.msra.mxu0 %v1039
          %1045 = vmatprep.subr.bf16.mxu0 0
          %1046 = vmatpush1.bf16.msra.mxu0 %v1040
          %1047 = vmatprep.subr.bf16.mxu0 0
          %1048 = vmatpush1.bf16.msra.mxu0 0
          %1049 = vmatprep.subr.bf16.mxu0 0
          %1050 = vmatpush1.bf16.msra.mxu0 0
          %1051 = vmatprep.subr.bf16.mxu0 0
          %1052 = vmatpush1.bf16.msra.mxu0 0
          %1053 = vmatprep.subr.bf16.mxu0 0
          %1054 = vmatpush1.bf16.msra.mxu0 0
          %1055 = vmatprep.subr.bf16.mxu0 0
          %1056 = vmatpush1.bf16.msra.mxu0 0
          %1057 = vmatprep.subr.bf16.mxu0 0
          %1058 = vmatpush1.bf16.msra.mxu0 0
          %1059 = vmatprep.subr.bf16.mxu0 0
          %1060 = vmatpush1.bf16.msra.mxu0 0
          %1061 = vmatprep.subr.bf16.mxu0 0
          %1062 = vmatpush1.bf16.msra.mxu0 0
          %1063 = vmatprep.subr.bf16.mxu0 0
          %1064 = vmatpush1.bf16.msra.mxu0 0
          %1065 = vmatprep.subr.bf16.mxu0 0
          %1066 = vmatpush1.bf16.msra.mxu0 0
          %1067 = vmatprep.subr.bf16.mxu0 0
          %1068 = vmatpush1.bf16.msra.mxu0 0
          %1069 = vmatprep.subr.bf16.mxu0 0
          %1070 = vmatpush1.bf16.msra.mxu0 0
          %1071 = vmatprep.subr.bf16.mxu0 0
          %1072 = vmatpush1.bf16.msra.mxu0 0
          %1073 = vmatprep.subr.bf16.mxu0 0
          %1074 = vmatpush1.bf16.msra.mxu0 0
          %1075 = vmatprep.mubr.bf16.mxu0 0
          %1076 = vmatmul.mubr.bf16.gmra.mrb[0].mxu0 %v781
          %v1077 = vpop.f32.mrb[0].mxu0
          %v1078 = vadd.f32 %v681, %v1077
          %v1079 = vpop.f32.mrb[0].mxu0
          %v1080 = vpop.f32.mrb[0].mxu0
          %v1081 = vpop.f32.mrb[0].mxu0
          %1082 = vdwg.mxu0
          %v1087 = vunpack.c.l.b16 %v570
          %v1088 = vunpack.c.l.b16 %v571
          %v1089 = vunpack.c.l.b16 %v572
          %v1090 = vunpack.c.l.b16 %v573
          %v1091 = vpack.c.b16 %v1088, %v1087
          %v1092 = vpack.c.b16 %v1090, %v1089
          %1095 = vmatprep.subr.bf16.mxu0 0
          %1096 = vmatpush1.bf16.msra.mxu0 %v1091
          %1097 = vmatprep.subr.bf16.mxu0 0
          %1098 = vmatpush1.bf16.msra.mxu0 %v1092
          %1099 = vmatprep.subr.bf16.mxu0 0
          %1100 = vmatpush1.bf16.msra.mxu0 0
          %1101 = vmatprep.subr.bf16.mxu0 0
          %1102 = vmatpush1.bf16.msra.mxu0 0
          %1103 = vmatprep.subr.bf16.mxu0 0
          %1104 = vmatpush1.bf16.msra.mxu0 0
          %1105 = vmatprep.subr.bf16.mxu0 0
          %1106 = vmatpush1.bf16.msra.mxu0 0
          %1107 = vmatprep.subr.bf16.mxu0 0
          %1108 = vmatpush1.bf16.msra.mxu0 0
          %1109 = vmatprep.subr.bf16.mxu0 0
          %1110 = vmatpush1.bf16.msra.mxu0 0
          %1111 = vmatprep.subr.bf16.mxu0 0
          %1112 = vmatpush1.bf16.msra.mxu0 0
          %1113 = vmatprep.subr.bf16.mxu0 0
          %1114 = vmatpush1.bf16.msra.mxu0 0
          %1115 = vmatprep.subr.bf16.mxu0 0
          %1116 = vmatpush1.bf16.msra.mxu0 0
          %1117 = vmatprep.subr.bf16.mxu0 0
          %1118 = vmatpush1.bf16.msra.mxu0 0
          %1119 = vmatprep.subr.bf16.mxu0 0
          %1120 = vmatpush1.bf16.msra.mxu0 0
          %1121 = vmatprep.subr.bf16.mxu0 0
          %1122 = vmatpush1.bf16.msra.mxu0 0
          %1123 = vmatprep.subr.bf16.mxu0 0
          %1124 = vmatpush1.bf16.msra.mxu0 0
          %1125 = vmatprep.subr.bf16.mxu0 0
          %1126 = vmatpush1.bf16.msra.mxu0 0
          %1127 = vmatprep.mubr.bf16.mxu0 0
          %1128 = vmatmul.mubr.bf16.gmra.mrb[0].mxu0 %v781
          %v1129 = vpop.f32.mrb[0].mxu0
          %v1130 = vadd.f32 %v685, %v1129
          %v1131 = vpop.f32.mrb[0].mxu0
          %v1132 = vpop.f32.mrb[0].mxu0
          %v1133 = vpop.f32.mrb[0].mxu0
          %1134 = vdwg.mxu0
          %v1139 = vunpack.c.l.b16 %v574
          %v1140 = vunpack.c.l.b16 %v575
          %v1141 = vunpack.c.l.b16 %v576
          %v1142 = vunpack.c.l.b16 %v577
          %v1143 = vpack.c.b16 %v1140, %v1139
          %v1144 = vpack.c.b16 %v1142, %v1141
          %1147 = vmatprep.subr.bf16.mxu0 0
          %1148 = vmatpush1.bf16.msra.mxu0 %v1143
          %1149 = vmatprep.subr.bf16.mxu0 0
          %1150 = vmatpush1.bf16.msra.mxu0 %v1144
          %1151 = vmatprep.subr.bf16.mxu0 0
          %1152 = vmatpush1.bf16.msra.mxu0 0
          %1153 = vmatprep.subr.bf16.mxu0 0
          %1154 = vmatpush1.bf16.msra.mxu0 0
          %1155 = vmatprep.subr.bf16.mxu0 0
          %1156 = vmatpush1.bf16.msra.mxu0 0
          %1157 = vmatprep.subr.bf16.mxu0 0
          %1158 = vmatpush1.bf16.msra.mxu0 0
          %1159 = vmatprep.subr.bf16.mxu0 0
          %1160 = vmatpush1.bf16.msra.mxu0 0
          %1161 = vmatprep.subr.bf16.mxu0 0
          %1162 = vmatpush1.bf16.msra.mxu0 0
          %1163 = vmatprep.subr.bf16.mxu0 0
          %1164 = vmatpush1.bf16.msra.mxu0 0
          %1165 = vmatprep.subr.bf16.mxu0 0
          %1166 = vmatpush1.bf16.msra.mxu0 0
          %1167 = vmatprep.subr.bf16.mxu0 0
          %1168 = vmatpush1.bf16.msra.mxu0 0
          %1169 = vmatprep.subr.bf16.mxu0 0
          %1170 = vmatpush1.bf16.msra.mxu0 0
          %1171 = vmatprep.subr.bf16.mxu0 0
          %1172 = vmatpush1.bf16.msra.mxu0 0
          %1173 = vmatprep.subr.bf16.mxu0 0
          %1174 = vmatpush1.bf16.msra.mxu0 0
          %1175 = vmatprep.subr.bf16.mxu0 0
          %1176 = vmatpush1.bf16.msra.mxu0 0
          %1177 = vmatprep.subr.bf16.mxu0 0
          %1178 = vmatpush1.bf16.msra.mxu0 0
          %1179 = vmatprep.mubr.bf16.mxu0 0
          %1180 = vmatmul.mubr.bf16.gmra.mrb[0].mxu0 %v781
          %v1181 = vpop.f32.mrb[0].mxu0
          %v1182 = vadd.f32 %v689, %v1181
          %v1183 = vpop.f32.mrb[0].mxu0
          %v1184 = vpop.f32.mrb[0].mxu0
          %v1185 = vpop.f32.mrb[0].mxu0
          %1186 = vdwg.mxu0
          %v1191 = vunpack.c.l.b16 %v578
          %v1192 = vunpack.c.l.b16 %v579
          %v1193 = vunpack.c.l.b16 %v580
          %v1194 = vunpack.c.l.b16 %v581
          %v1195 = vpack.c.b16 %v1192, %v1191
          %v1196 = vpack.c.b16 %v1194, %v1193
          %1199 = vmatprep.subr.bf16.mxu0 0
          %1200 = vmatpush1.bf16.msra.mxu0 %v1195
          %1201 = vmatprep.subr.bf16.mxu0 0
          %1202 = vmatpush1.bf16.msra.mxu0 %v1196
          %1203 = vmatprep.subr.bf16.mxu0 0
          %1204 = vmatpush1.bf16.msra.mxu0 0
          %1205 = vmatprep.subr.bf16.mxu0 0
          %1206 = vmatpush1.bf16.msra.mxu0 0
          %1207 = vmatprep.subr.bf16.mxu0 0
          %1208 = vmatpush1.bf16.msra.mxu0 0
          %1209 = vmatprep.subr.bf16.mxu0 0
          %1210 = vmatpush1.bf16.msra.mxu0 0
          %1211 = vmatprep.subr.bf16.mxu0 0
          %1212 = vmatpush1.bf16.msra.mxu0 0
          %1213 = vmatprep.subr.bf16.mxu0 0
          %1214 = vmatpush1.bf16.msra.mxu0 0
          %1215 = vmatprep.subr.bf16.mxu0 0
          %1216 = vmatpush1.bf16.msra.mxu0 0
          %1217 = vmatprep.subr.bf16.mxu0 0
          %1218 = vmatpush1.bf16.msra.mxu0 0
          %1219 = vmatprep.subr.bf16.mxu0 0
          %1220 = vmatpush1.bf16.msra.mxu0 0
          %1221 = vmatprep.subr.bf16.mxu0 0
          %1222 = vmatpush1.bf16.msra.mxu0 0
          %1223 = vmatprep.subr.bf16.mxu0 0
          %1224 = vmatpush1.bf16.msra.mxu0 0
          %1225 = vmatprep.subr.bf16.mxu0 0
          %1226 = vmatpush1.bf16.msra.mxu0 0
          %1227 = vmatprep.subr.bf16.mxu0 0
          %1228 = vmatpush1.bf16.msra.mxu0 0
          %1229 = vmatprep.subr.bf16.mxu0 0
          %1230 = vmatpush1.bf16.msra.mxu0 0
          %1231 = vmatprep.mubr.bf16.mxu0 0
          %1232 = vmatmul.mubr.bf16.gmra.mrb[0].mxu0 %v781
          %v1233 = vpop.f32.mrb[0].mxu0
          %v1234 = vadd.f32 %v705, %v1233
          %v1235 = vpop.f32.mrb[0].mxu0
          %v1236 = vpop.f32.mrb[0].mxu0
          %v1237 = vpop.f32.mrb[0].mxu0
          %1238 = vdwg.mxu0
          %v1243 = vunpack.c.l.b16 %v582
          %v1244 = vunpack.c.l.b16 %v583
          %v1245 = vunpack.c.l.b16 %v584
          %v1246 = vunpack.c.l.b16 %v585
          %v1247 = vpack.c.b16 %v1244, %v1243
          %v1248 = vpack.c.b16 %v1246, %v1245
          %1251 = vmatprep.subr.bf16.mxu0 0
          %1252 = vmatpush1.bf16.msra.mxu0 %v1247
          %1253 = vmatprep.subr.bf16.mxu0 0
          %1254 = vmatpush1.bf16.msra.mxu0 %v1248
          %1255 = vmatprep.subr.bf16.mxu0 0
          %1256 = vmatpush1.bf16.msra.mxu0 0
          %1257 = vmatprep.subr.bf16.mxu0 0
          %1258 = vmatpush1.bf16.msra.mxu0 0
          %1259 = vmatprep.subr.bf16.mxu0 0
          %1260 = vmatpush1.bf16.msra.mxu0 0
          %1261 = vmatprep.subr.bf16.mxu0 0
          %1262 = vmatpush1.bf16.msra.mxu0 0
          %1263 = vmatprep.subr.bf16.mxu0 0
          %1264 = vmatpush1.bf16.msra.mxu0 0
          %1265 = vmatprep.subr.bf16.mxu0 0
          %1266 = vmatpush1.bf16.msra.mxu0 0
          %1267 = vmatprep.subr.bf16.mxu0 0
          %1268 = vmatpush1.bf16.msra.mxu0 0
          %1269 = vmatprep.subr.bf16.mxu0 0
          %1270 = vmatpush1.bf16.msra.mxu0 0
          %1271 = vmatprep.subr.bf16.mxu0 0
          %1272 = vmatpush1.bf16.msra.mxu0 0
          %1273 = vmatprep.subr.bf16.mxu0 0
          %1274 = vmatpush1.bf16.msra.mxu0 0
          %1275 = vmatprep.subr.bf16.mxu0 0
          %1276 = vmatpush1.bf16.msra.mxu0 0
          %1277 = vmatprep.subr.bf16.mxu0 0
          %1278 = vmatpush1.bf16.msra.mxu0 0
          %1279 = vmatprep.subr.bf16.mxu0 0
          %1280 = vmatpush1.bf16.msra.mxu0 0
          %1281 = vmatprep.subr.bf16.mxu0 0
          %1282 = vmatpush1.bf16.msra.mxu0 0
          %1283 = vmatprep.mubr.bf16.mxu0 0
          %1284 = vmatmul.mubr.bf16.gmra.mrb[0].mxu0 %v781
          %v1285 = vpop.f32.mrb[0].mxu0
          %v1286 = vadd.f32 %v709, %v1285
          %v1287 = vpop.f32.mrb[0].mxu0
          %v1288 = vpop.f32.mrb[0].mxu0
          %v1289 = vpop.f32.mrb[0].mxu0
          %1290 = vdwg.mxu0
          %v1295 = vunpack.c.l.b16 %v586
          %v1296 = vunpack.c.l.b16 %v587
          %v1297 = vunpack.c.l.b16 %v588
          %v1298 = vunpack.c.l.b16 %v589
          %v1299 = vpack.c.b16 %v1296, %v1295
          %v1300 = vpack.c.b16 %v1298, %v1297
          %1303 = vmatprep.subr.bf16.mxu0 0
          %1304 = vmatpush1.bf16.msra.mxu0 %v1299
          %1305 = vmatprep.subr.bf16.mxu0 0
          %1306 = vmatpush1.bf16.msra.mxu0 %v1300
          %1307 = vmatprep.subr.bf16.mxu0 0
          %1308 = vmatpush1.bf16.msra.mxu0 0
          %1309 = vmatprep.subr.bf16.mxu0 0
          %1310 = vmatpush1.bf16.msra.mxu0 0
          %1311 = vmatprep.subr.bf16.mxu0 0
          %1312 = vmatpush1.bf16.msra.mxu0 0
          %1313 = vmatprep.subr.bf16.mxu0 0
          %1314 = vmatpush1.bf16.msra.mxu0 0
          %1315 = vmatprep.subr.bf16.mxu0 0
          %1316 = vmatpush1.bf16.msra.mxu0 0
          %1317 = vmatprep.subr.bf16.mxu0 0
          %1318 = vmatpush1.bf16.msra.mxu0 0
          %1319 = vmatprep.subr.bf16.mxu0 0
          %1320 = vmatpush1.bf16.msra.mxu0 0
          %1321 = vmatprep.subr.bf16.mxu0 0
          %1322 = vmatpush1.bf16.msra.mxu0 0
          %1323 = vmatprep.subr.bf16.mxu0 0
          %1324 = vmatpush1.bf16.msra.mxu0 0
          %1325 = vmatprep.subr.bf16.mxu0 0
          %1326 = vmatpush1.bf16.msra.mxu0 0
          %1327 = vmatprep.subr.bf16.mxu0 0
          %1328 = vmatpush1.bf16.msra.mxu0 0
          %1329 = vmatprep.subr.bf16.mxu0 0
          %1330 = vmatpush1.bf16.msra.mxu0 0
          %1331 = vmatprep.subr.bf16.mxu0 0
          %1332 = vmatpush1.bf16.msra.mxu0 0
          %1333 = vmatprep.subr.bf16.mxu0 0
          %1334 = vmatpush1.bf16.msra.mxu0 0
          %1335 = vmatprep.mubr.bf16.mxu0 0
          %1336 = vmatmul.mubr.bf16.gmra.mrb[0].mxu0 %v781
          %v1337 = vpop.f32.mrb[0].mxu0
          %v1338 = vadd.f32 %v713, %v1337
          %v1339 = vpop.f32.mrb[0].mxu0
          %v1340 = vpop.f32.mrb[0].mxu0
          %v1341 = vpop.f32.mrb[0].mxu0
          %1342 = vdwg.mxu0
          %v1347 = vunpack.c.l.b16 %v590
          %v1348 = vunpack.c.l.b16 %v591
          %v1349 = vunpack.c.l.b16 %v592
          %v1350 = vunpack.c.l.b16 %v593
          %v1351 = vpack.c.b16 %v1348, %v1347
          %v1352 = vpack.c.b16 %v1350, %v1349
          %1355 = vmatprep.subr.bf16.mxu0 0
          %1356 = vmatpush1.bf16.msra.mxu0 %v1351
          %1357 = vmatprep.subr.bf16.mxu0 0
          %1358 = vmatpush1.bf16.msra.mxu0 %v1352
          %1359 = vmatprep.subr.bf16.mxu0 0
          %1360 = vmatpush1.bf16.msra.mxu0 0
          %1361 = vmatprep.subr.bf16.mxu0 0
          %1362 = vmatpush1.bf16.msra.mxu0 0
          %1363 = vmatprep.subr.bf16.mxu0 0
          %1364 = vmatpush1.bf16.msra.mxu0 0
          %1365 = vmatprep.subr.bf16.mxu0 0
          %1366 = vmatpush1.bf16.msra.mxu0 0
          %1367 = vmatprep.subr.bf16.mxu0 0
          %1368 = vmatpush1.bf16.msra.mxu0 0
          %1369 = vmatprep.subr.bf16.mxu0 0
          %1370 = vmatpush1.bf16.msra.mxu0 0
          %1371 = vmatprep.subr.bf16.mxu0 0
          %1372 = vmatpush1.bf16.msra.mxu0 0
          %1373 = vmatprep.subr.bf16.mxu0 0
          %1374 = vmatpush1.bf16.msra.mxu0 0
          %1375 = vmatprep.subr.bf16.mxu0 0
          %1376 = vmatpush1.bf16.msra.mxu0 0
          %1377 = vmatprep.subr.bf16.mxu0 0
          %1378 = vmatpush1.bf16.msra.mxu0 0
          %1379 = vmatprep.subr.bf16.mxu0 0
          %1380 = vmatpush1.bf16.msra.mxu0 0
          %1381 = vmatprep.subr.bf16.mxu0 0
          %1382 = vmatpush1.bf16.msra.mxu0 0
          %1383 = vmatprep.subr.bf16.mxu0 0
          %1384 = vmatpush1.bf16.msra.mxu0 0
          %1385 = vmatprep.subr.bf16.mxu0 0
          %1386 = vmatpush1.bf16.msra.mxu0 0
          %1387 = vmatprep.mubr.bf16.mxu0 0
          %1388 = vmatmul.mubr.bf16.gmra.mrb[0].mxu0 %v781
          %v1389 = vpop.f32.mrb[0].mxu0
          %v1390 = vadd.f32 %v717, %v1389
          %v1391 = vpop.f32.mrb[0].mxu0
          %v1392 = vpop.f32.mrb[0].mxu0
          %v1393 = vpop.f32.mrb[0].mxu0
          %1394 = vdwg.mxu0
          %v1395 = vpack.c.bf16 %v818, %v818
          %v1396 = vpack.c.bf16 %v870, %v870
          %v1397 = vpack.c.bf16 %v922, %v922
          %v1398 = vpack.c.bf16 %v974, %v974
          %v1399 = vpack.c.bf16 %v1026, %v1026
          %v1400 = vpack.c.bf16 %v1078, %v1078
          %v1401 = vpack.c.bf16 %v1130, %v1130
          %v1402 = vpack.c.bf16 %v1182, %v1182
          %vm1403 = vcmask 64512
          %v1405 = vsel %vm1403, %v1395, 0
          %v1408 = vsel %vm1403, %v1399, 0
          %1410 = vmatprep.subr.bf16.mxu0 0
          %1411 = vmatpush1.bf16.xpose.msra.mxu0 %v1408
          %1412 = vmatprep.subr.bf16.mxu0 0
          %1413 = vmatpush1.bf16.xpose.msra.mxu0 0
          %1414 = vmatprep.subr.bf16.mxu0 0
          %1415 = vmatpush1.bf16.xpose.msra.mxu0 0
          %1416 = vmatprep.subr.bf16.mxu0 0
          %1417 = vmatpush1.bf16.xpose.msra.mxu0 0
          %1418 = vmatprep.subr.bf16.mxu0 0
          %1419 = vmatpush1.bf16.xpose.msra.mxu0 0
          %1420 = vmatprep.subr.bf16.mxu0 0
          %1421 = vmatpush1.bf16.xpose.msra.mxu0 0
          %1422 = vmatprep.subr.bf16.mxu0 0
          %1423 = vmatpush1.bf16.xpose.msra.mxu0 0
          %1424 = vmatprep.subr.bf16.mxu0 0
          %1425 = vmatpush1.bf16.xpose.msra.mxu0 0
          %1426 = vmatprep.subr.bf16.mxu0 0
          %1427 = vmatpush1.bf16.xpose.msra.mxu0 0
          %1428 = vmatprep.subr.bf16.mxu0 0
          %1429 = vmatpush1.bf16.xpose.msra.mxu0 0
          %1430 = vmatprep.subr.bf16.mxu0 0
          %1431 = vmatpush1.bf16.xpose.msra.mxu0 0
          %1432 = vmatprep.subr.bf16.mxu0 0
          %1433 = vmatpush1.bf16.xpose.msra.mxu0 0
          %1434 = vmatprep.subr.bf16.mxu0 0
          %1435 = vmatpush1.bf16.xpose.msra.mxu0 0
          %1436 = vmatprep.subr.bf16.mxu0 0
          %1437 = vmatpush1.bf16.xpose.msra.mxu0 0
          %1438 = vmatprep.subr.bf16.mxu0 0
          %1439 = vmatpush1.bf16.xpose.msra.mxu0 0
          %1440 = vmatprep.subr.bf16.mxu0 0
          %1441 = vmatpush1.bf16.xpose.msra.mxu0 0
          %1442 = vmatprep.mubr.bf16.mxu0 0
          %1443 = vmatmul.mubr.bf16.gmra.mrb[0].mxu0 %v1405
          %v1444 = vpop.f32.mrb[0].mxu0
          %v1445 = vadd.f32 0.0, %v1444
          %v1446 = vpop.f32.mrb[0].mxu0
          %v1447 = vpop.f32.mrb[0].mxu0
          %v1448 = vpop.f32.mrb[0].mxu0
          %1449 = vdwg.mxu0
          %v1451 = vsel %vm1403, %v1396, 0
          %v1454 = vsel %vm1403, %v1400, 0
          %1456 = vmatprep.subr.bf16.mxu0 0
          %1457 = vmatpush1.bf16.xpose.msra.mxu0 %v1454
          %1458 = vmatprep.subr.bf16.mxu0 0
          %1459 = vmatpush1.bf16.xpose.msra.mxu0 0
          %1460 = vmatprep.subr.bf16.mxu0 0
          %1461 = vmatpush1.bf16.xpose.msra.mxu0 0
          %1462 = vmatprep.subr.bf16.mxu0 0
          %1463 = vmatpush1.bf16.xpose.msra.mxu0 0
          %1464 = vmatprep.subr.bf16.mxu0 0
          %1465 = vmatpush1.bf16.xpose.msra.mxu0 0
          %1466 = vmatprep.subr.bf16.mxu0 0
          %1467 = vmatpush1.bf16.xpose.msra.mxu0 0
          %1468 = vmatprep.subr.bf16.mxu0 0
          %1469 = vmatpush1.bf16.xpose.msra.mxu0 0
          %1470 = vmatprep.subr.bf16.mxu0 0
          %1471 = vmatpush1.bf16.xpose.msra.mxu0 0
          %1472 = vmatprep.subr.bf16.mxu0 0
          %1473 = vmatpush1.bf16.xpose.msra.mxu0 0
          %1474 = vmatprep.subr.bf16.mxu0 0
          %1475 = vmatpush1.bf16.xpose.msra.mxu0 0
          %1476 = vmatprep.subr.bf16.mxu0 0
          %1477 = vmatpush1.bf16.xpose.msra.mxu0 0
          %1478 = vmatprep.subr.bf16.mxu0 0
          %1479 = vmatpush1.bf16.xpose.msra.mxu0 0
          %1480 = vmatprep.subr.bf16.mxu0 0
          %1481 = vmatpush1.bf16.xpose.msra.mxu0 0
          %1482 = vmatprep.subr.bf16.mxu0 0
          %1483 = vmatpush1.bf16.xpose.msra.mxu0 0
          %1484 = vmatprep.subr.bf16.mxu0 0
          %1485 = vmatpush1.bf16.xpose.msra.mxu0 0
          %1486 = vmatprep.subr.bf16.mxu0 0
          %1487 = vmatpush1.bf16.xpose.msra.mxu0 0
          %1488 = vmatprep.mubr.bf16.mxu0 0
          %1489 = vmatmul.mubr.bf16.gmra.mrb[0].mxu0 %v1451
          %v1490 = vpop.f32.mrb[0].mxu0
          %v1491 = vadd.f32 0.0, %v1490
          %v1492 = vpop.f32.mrb[0].mxu0
          %v1493 = vpop.f32.mrb[0].mxu0
          %v1494 = vpop.f32.mrb[0].mxu0
          %1495 = vdwg.mxu0
          %v1497 = vsel %vm1403, %v1397, 0
          %v1500 = vsel %vm1403, %v1401, 0
          %1502 = vmatprep.subr.bf16.mxu0 0
          %1503 = vmatpush1.bf16.xpose.msra.mxu0 %v1500
          %1504 = vmatprep.subr.bf16.mxu0 0
          %1505 = vmatpush1.bf16.xpose.msra.mxu0 0
          %1506 = vmatprep.subr.bf16.mxu0 0
          %1507 = vmatpush1.bf16.xpose.msra.mxu0 0
          %1508 = vmatprep.subr.bf16.mxu0 0
          %1509 = vmatpush1.bf16.xpose.msra.mxu0 0
          %1510 = vmatprep.subr.bf16.mxu0 0
          %1511 = vmatpush1.bf16.xpose.msra.mxu0 0
          %1512 = vmatprep.subr.bf16.mxu0 0
          %1513 = vmatpush1.bf16.xpose.msra.mxu0 0
          %1514 = vmatprep.subr.bf16.mxu0 0
          %1515 = vmatpush1.bf16.xpose.msra.mxu0 0
          %1516 = vmatprep.subr.bf16.mxu0 0
          %1517 = vmatpush1.bf16.xpose.msra.mxu0 0
          %1518 = vmatprep.subr.bf16.mxu0 0
          %1519 = vmatpush1.bf16.xpose.msra.mxu0 0
          %1520 = vmatprep.subr.bf16.mxu0 0
          %1521 = vmatpush1.bf16.xpose.msra.mxu0 0
          %1522 = vmatprep.subr.bf16.mxu0 0
          %1523 = vmatpush1.bf16.xpose.msra.mxu0 0
          %1524 = vmatprep.subr.bf16.mxu0 0
          %1525 = vmatpush1.bf16.xpose.msra.mxu0 0
          %1526 = vmatprep.subr.bf16.mxu0 0
          %1527 = vmatpush1.bf16.xpose.msra.mxu0 0
          %1528 = vmatprep.subr.bf16.mxu0 0
          %1529 = vmatpush1.bf16.xpose.msra.mxu0 0
          %1530 = vmatprep.subr.bf16.mxu0 0
          %1531 = vmatpush1.bf16.xpose.msra.mxu0 0
          %1532 = vmatprep.subr.bf16.mxu0 0
          %1533 = vmatpush1.bf16.xpose.msra.mxu0 0
          %1534 = vmatprep.mubr.bf16.mxu0 0
          %1535 = vmatmul.mubr.bf16.gmra.mrb[0].mxu0 %v1497
          %v1536 = vpop.f32.mrb[0].mxu0
          %v1537 = vadd.f32 0.0, %v1536
          %v1538 = vpop.f32.mrb[0].mxu0
          %v1539 = vpop.f32.mrb[0].mxu0
          %v1540 = vpop.f32.mrb[0].mxu0
          %1541 = vdwg.mxu0
          %v1543 = vsel %vm1403, %v1398, 0
          %v1546 = vsel %vm1403, %v1402, 0
          %1548 = vmatprep.subr.bf16.mxu0 0
          %1549 = vmatpush1.bf16.xpose.msra.mxu0 %v1546
          %1550 = vmatprep.subr.bf16.mxu0 0
          %1551 = vmatpush1.bf16.xpose.msra.mxu0 0
          %1552 = vmatprep.subr.bf16.mxu0 0
          %1553 = vmatpush1.bf16.xpose.msra.mxu0 0
          %1554 = vmatprep.subr.bf16.mxu0 0
          %1555 = vmatpush1.bf16.xpose.msra.mxu0 0
          %1556 = vmatprep.subr.bf16.mxu0 0
          %1557 = vmatpush1.bf16.xpose.msra.mxu0 0
          %1558 = vmatprep.subr.bf16.mxu0 0
          %1559 = vmatpush1.bf16.xpose.msra.mxu0 0
          %1560 = vmatprep.subr.bf16.mxu0 0
          %1561 = vmatpush1.bf16.xpose.msra.mxu0 0
          %1562 = vmatprep.subr.bf16.mxu0 0
          %1563 = vmatpush1.bf16.xpose.msra.mxu0 0
          %1564 = vmatprep.subr.bf16.mxu0 0
          %1565 = vmatpush1.bf16.xpose.msra.mxu0 0
          %1566 = vmatprep.subr.bf16.mxu0 0
          %1567 = vmatpush1.bf16.xpose.msra.mxu0 0
          %1568 = vmatprep.subr.bf16.mxu0 0
          %1569 = vmatpush1.bf16.xpose.msra.mxu0 0
          %1570 = vmatprep.subr.bf16.mxu0 0
          %1571 = vmatpush1.bf16.xpose.msra.mxu0 0
          %1572 = vmatprep.subr.bf16.mxu0 0
          %1573 = vmatpush1.bf16.xpose.msra.mxu0 0
          %1574 = vmatprep.subr.bf16.mxu0 0
          %1575 = vmatpush1.bf16.xpose.msra.mxu0 0
          %1576 = vmatprep.subr.bf16.mxu0 0
          %1577 = vmatpush1.bf16.xpose.msra.mxu0 0
          %1578 = vmatprep.subr.bf16.mxu0 0
          %1579 = vmatpush1.bf16.xpose.msra.mxu0 0
          %1580 = vmatprep.mubr.bf16.mxu0 0
          %1581 = vmatmul.mubr.bf16.gmra.mrb[0].mxu0 %v1543
          %v1582 = vpop.f32.mrb[0].mxu0
          %v1583 = vadd.f32 0.0, %v1582
          %v1584 = vpop.f32.mrb[0].mxu0
          %v1585 = vpop.f32.mrb[0].mxu0
          %v1586 = vpop.f32.mrb[0].mxu0
          %1587 = vdwg.mxu0
          %v1588 = vsel %vm1403, %v1445, -inf
          %1589 = vmax.xlane.f32.xlu0 %v1588
          %v1590 = vpop.xlane.xlu0 %1589
          %v1591 = vsel %vm1403, %v1491, -inf
          %1592 = vmax.xlane.f32.xlu0 %v1591
          %v1593 = vpop.xlane.xlu0 %1592
          %v1594 = vsel %vm1403, %v1537, -inf
          %1595 = vmax.xlane.f32.xlu0 %v1594
          %v1596 = vpop.xlane.xlu0 %1595
          %v1597 = vsel %vm1403, %v1583, -inf
          %1598 = vmax.xlane.f32.xlu0 %v1597
          %v1599 = vpop.xlane.xlu0 %1598
          %v1600 = vsub.f32 %v1445, %v1590
          %v1601 = vsub.f32 %v1491, %v1593
          %v1602 = vsub.f32 %v1537, %v1596
          %v1603 = vsub.f32 %v1583, %v1599
          %v1604 = vmul.f32 %v1600, 1.442695
          %v1605 = vpow.pop %v1604
          %v1606 = vmul.f32 %v1601, 1.442695
          %v1607 = vpow.pop %v1606
          %v1608 = vmul.f32 %v1602, 1.442695
          %v1609 = vpow.pop %v1608
          %v1610 = vmul.f32 %v1603, 1.442695
          %v1611 = vpow.pop %v1610
          %v1612 = vsel %vm1403, %v1605, 0.0
          %1613 = vadd.xlane.f32.xlu0 %v1612
          %v1614 = vpop.xlane.xlu0 %1613
          %v1615 = vsel %vm1403, %v1607, 0.0
          %1616 = vadd.xlane.f32.xlu0 %v1615
          %v1617 = vpop.xlane.xlu0 %1616
          %v1618 = vsel %vm1403, %v1609, 0.0
          %1619 = vadd.xlane.f32.xlu0 %v1618
          %v1620 = vpop.xlane.xlu0 %1619
          %v1621 = vsel %vm1403, %v1611, 0.0
          %1622 = vadd.xlane.f32.xlu0 %v1621
          %v1623 = vpop.xlane.xlu0 %1622
          %v1624 = vrcp.pop %v1614
          %v1625 = vrcp.pop %v1617
          %v1626 = vrcp.pop %v1620
          %v1627 = vrcp.pop %v1623
          %v1628 = vmul.f32 %v1605, %v1624
          %v1629 = vmul.f32 %v1607, %v1625
          %v1630 = vmul.f32 %v1609, %v1626
          %v1631 = vmul.f32 %v1611, %v1627
          %v1632 = vpack.c.bf16 %v1628, %v1628
          %v1633 = vpack.c.bf16 %v1629, %v1629
          %v1634 = vpack.c.bf16 %v1630, %v1630
          %v1635 = vpack.c.bf16 %v1631, %v1631
          %v1636 = vpack.c.bf16 %v1234, %v1234
          %v1637 = vpack.c.bf16 %v1286, %v1286
          %v1638 = vpack.c.bf16 %v1338, %v1338
          %v1639 = vpack.c.bf16 %v1390, %v1390
          %v1641 = vsel %vm1403, %v1632, 0
          %vm1643 = vcmask 1043456
          %v1645 = vsel %vm1643, %v1636, 0
          %1647 = vmatprep.subr.bf16.mxu0 0
          %1648 = vmatpush1.bf16.msra.mxu0 %v1645
          %1649 = vmatprep.subr.bf16.mxu0 0
          %1650 = vmatpush1.bf16.msra.mxu0 0
          %1651 = vmatprep.subr.bf16.mxu0 0
          %1652 = vmatpush1.bf16.msra.mxu0 0
          %1653 = vmatprep.subr.bf16.mxu0 0
          %1654 = vmatpush1.bf16.msra.mxu0 0
          %1655 = vmatprep.subr.bf16.mxu0 0
          %1656 = vmatpush1.bf16.msra.mxu0 0
          %1657 = vmatprep.subr.bf16.mxu0 0
          %1658 = vmatpush1.bf16.msra.mxu0 0
          %1659 = vmatprep.subr.bf16.mxu0 0
          %1660 = vmatpush1.bf16.msra.mxu0 0
          %1661 = vmatprep.subr.bf16.mxu0 0
          %1662 = vmatpush1.bf16.msra.mxu0 0
          %1663 = vmatprep.subr.bf16.mxu0 0
          %1664 = vmatpush1.bf16.msra.mxu0 0
          %1665 = vmatprep.subr.bf16.mxu0 0
          %1666 = vmatpush1.bf16.msra.mxu0 0
          %1667 = vmatprep.subr.bf16.mxu0 0
          %1668 = vmatpush1.bf16.msra.mxu0 0
          %1669 = vmatprep.subr.bf16.mxu0 0
          %1670 = vmatpush1.bf16.msra.mxu0 0
          %1671 = vmatprep.subr.bf16.mxu0 0
          %1672 = vmatpush1.bf16.msra.mxu0 0
          %1673 = vmatprep.subr.bf16.mxu0 0
          %1674 = vmatpush1.bf16.msra.mxu0 0
          %1675 = vmatprep.subr.bf16.mxu0 0
          %1676 = vmatpush1.bf16.msra.mxu0 0
          %1677 = vmatprep.subr.bf16.mxu0 0
          %1678 = vmatpush1.bf16.msra.mxu0 0
          %1679 = vmatprep.mubr.bf16.mxu0 0
          %1680 = vmatmul.mubr.bf16.gmra.mrb[0].mxu0 %v1641
          %v1681 = vpop.f32.mrb[0].mxu0
          %v1682 = vadd.f32 0.0, %v1681
          %v1683 = vpop.f32.mrb[0].mxu0
          %v1684 = vpop.f32.mrb[0].mxu0
          %v1685 = vpop.f32.mrb[0].mxu0
          %1686 = vdwg.mxu0
          %v1688 = vsel %vm1403, %v1633, 0
          %v1691 = vsel %vm1643, %v1637, 0
          %1693 = vmatprep.subr.bf16.mxu0 0
          %1694 = vmatpush1.bf16.msra.mxu0 %v1691
          %1695 = vmatprep.subr.bf16.mxu0 0
          %1696 = vmatpush1.bf16.msra.mxu0 0
          %1697 = vmatprep.subr.bf16.mxu0 0
          %1698 = vmatpush1.bf16.msra.mxu0 0
          %1699 = vmatprep.subr.bf16.mxu0 0
          %1700 = vmatpush1.bf16.msra.mxu0 0
          %1701 = vmatprep.subr.bf16.mxu0 0
          %1702 = vmatpush1.bf16.msra.mxu0 0
          %1703 = vmatprep.subr.bf16.mxu0 0
          %1704 = vmatpush1.bf16.msra.mxu0 0
          %1705 = vmatprep.subr.bf16.mxu0 0
          %1706 = vmatpush1.bf16.msra.mxu0 0
          %1707 = vmatprep.subr.bf16.mxu0 0
          %1708 = vmatpush1.bf16.msra.mxu0 0
          %1709 = vmatprep.subr.bf16.mxu0 0
          %1710 = vmatpush1.bf16.msra.mxu0 0
          %1711 = vmatprep.subr.bf16.mxu0 0
          %1712 = vmatpush1.bf16.msra.mxu0 0
          %1713 = vmatprep.subr.bf16.mxu0 0
          %1714 = vmatpush1.bf16.msra.mxu0 0
          %1715 = vmatprep.subr.bf16.mxu0 0
          %1716 = vmatpush1.bf16.msra.mxu0 0
          %1717 = vmatprep.subr.bf16.mxu0 0
          %1718 = vmatpush1.bf16.msra.mxu0 0
          %1719 = vmatprep.subr.bf16.mxu0 0
          %1720 = vmatpush1.bf16.msra.mxu0 0
          %1721 = vmatprep.subr.bf16.mxu0 0
          %1722 = vmatpush1.bf16.msra.mxu0 0
          %1723 = vmatprep.subr.bf16.mxu0 0
          %1724 = vmatpush1.bf16.msra.mxu0 0
          %1725 = vmatprep.mubr.bf16.mxu0 0
          %1726 = vmatmul.mubr.bf16.gmra.mrb[0].mxu0 %v1688
          %v1727 = vpop.f32.mrb[0].mxu0
          %v1728 = vadd.f32 0.0, %v1727
          %v1729 = vpop.f32.mrb[0].mxu0
          %v1730 = vpop.f32.mrb[0].mxu0
          %v1731 = vpop.f32.mrb[0].mxu0
          %1732 = vdwg.mxu0
          %v1734 = vsel %vm1403, %v1634, 0
          %v1737 = vsel %vm1643, %v1638, 0
          %1739 = vmatprep.subr.bf16.mxu0 0
          %1740 = vmatpush1.bf16.msra.mxu0 %v1737
          %1741 = vmatprep.subr.bf16.mxu0 0
          %1742 = vmatpush1.bf16.msra.mxu0 0
          %1743 = vmatprep.subr.bf16.mxu0 0
          %1744 = vmatpush1.bf16.msra.mxu0 0
          %1745 = vmatprep.subr.bf16.mxu0 0
          %1746 = vmatpush1.bf16.msra.mxu0 0
          %1747 = vmatprep.subr.bf16.mxu0 0
          %1748 = vmatpush1.bf16.msra.mxu0 0
          %1749 = vmatprep.subr.bf16.mxu0 0
          %1750 = vmatpush1.bf16.msra.mxu0 0
          %1751 = vmatprep.subr.bf16.mxu0 0
          %1752 = vmatpush1.bf16.msra.mxu0 0
          %1753 = vmatprep.subr.bf16.mxu0 0
          %1754 = vmatpush1.bf16.msra.mxu0 0
          %1755 = vmatprep.subr.bf16.mxu0 0
          %1756 = vmatpush1.bf16.msra.mxu0 0
          %1757 = vmatprep.subr.bf16.mxu0 0
          %1758 = vmatpush1.bf16.msra.mxu0 0
          %1759 = vmatprep.subr.bf16.mxu0 0
          %1760 = vmatpush1.bf16.msra.mxu0 0
          %1761 = vmatprep.subr.bf16.mxu0 0
          %1762 = vmatpush1.bf16.msra.mxu0 0
          %1763 = vmatprep.subr.bf16.mxu0 0
          %1764 = vmatpush1.bf16.msra.mxu0 0
          %1765 = vmatprep.subr.bf16.mxu0 0
          %1766 = vmatpush1.bf16.msra.mxu0 0
          %1767 = vmatprep.subr.bf16.mxu0 0
          %1768 = vmatpush1.bf16.msra.mxu0 0
          %1769 = vmatprep.subr.bf16.mxu0 0
          %1770 = vmatpush1.bf16.msra.mxu0 0
          %1771 = vmatprep.mubr.bf16.mxu0 0
          %1772 = vmatmul.mubr.bf16.gmra.mrb[0].mxu0 %v1734
          %v1773 = vpop.f32.mrb[0].mxu0
          %v1774 = vadd.f32 0.0, %v1773
          %v1775 = vpop.f32.mrb[0].mxu0
          %v1776 = vpop.f32.mrb[0].mxu0
          %v1777 = vpop.f32.mrb[0].mxu0
          %1778 = vdwg.mxu0
          %v1780 = vsel %vm1403, %v1635, 0
          %v1783 = vsel %vm1643, %v1639, 0
          %1785 = vmatprep.subr.bf16.mxu0 0
          %1786 = vmatpush1.bf16.msra.mxu0 %v1783
          %1787 = vmatprep.subr.bf16.mxu0 0
          %1788 = vmatpush1.bf16.msra.mxu0 0
          %1789 = vmatprep.subr.bf16.mxu0 0
          %1790 = vmatpush1.bf16.msra.mxu0 0
          %1791 = vmatprep.subr.bf16.mxu0 0
          %1792 = vmatpush1.bf16.msra.mxu0 0
          %1793 = vmatprep.subr.bf16.mxu0 0
          %1794 = vmatpush1.bf16.msra.mxu0 0
          %1795 = vmatprep.subr.bf16.mxu0 0
          %1796 = vmatpush1.bf16.msra.mxu0 0
          %1797 = vmatprep.subr.bf16.mxu0 0
          %1798 = vmatpush1.bf16.msra.mxu0 0
          %1799 = vmatprep.subr.bf16.mxu0 0
          %1800 = vmatpush1.bf16.msra.mxu0 0
          %1801 = vmatprep.subr.bf16.mxu0 0
          %1802 = vmatpush1.bf16.msra.mxu0 0
          %1803 = vmatprep.subr.bf16.mxu0 0
          %1804 = vmatpush1.bf16.msra.mxu0 0
          %1805 = vmatprep.subr.bf16.mxu0 0
          %1806 = vmatpush1.bf16.msra.mxu0 0
          %1807 = vmatprep.subr.bf16.mxu0 0
          %1808 = vmatpush1.bf16.msra.mxu0 0
          %1809 = vmatprep.subr.bf16.mxu0 0
          %1810 = vmatpush1.bf16.msra.mxu0 0
          %1811 = vmatprep.subr.bf16.mxu0 0
          %1812 = vmatpush1.bf16.msra.mxu0 0
          %1813 = vmatprep.subr.bf16.mxu0 0
          %1814 = vmatpush1.bf16.msra.mxu0 0
          %1815 = vmatprep.subr.bf16.mxu0 0
          %1816 = vmatpush1.bf16.msra.mxu0 0
          %1817 = vmatprep.mubr.bf16.mxu0 0
          %1818 = vmatmul.mubr.bf16.gmra.mrb[0].mxu0 %v1780
          %v1819 = vpop.f32.mrb[0].mxu0
          %v1820 = vadd.f32 0.0, %v1819
          %v1821 = vpop.f32.mrb[0].mxu0
          %v1822 = vpop.f32.mrb[0].mxu0
          %v1823 = vpop.f32.mrb[0].mxu0
          %1824 = vdwg.mxu0
          %v1825 = vpack.c.bf16 %v1682, %v1682
          %v1826 = vpack.c.bf16 %v1728, %v1728
          %v1827 = vpack.c.bf16 %v1774, %v1774
          %v1828 = vpack.c.bf16 %v1820, %v1820
          %v1830 = vsel %vm1403, %v1825, 0
          %v1833 = vsel %vm1643, %v594, 0
          %1835 = vmatprep.subr.bf16.mxu0 0
          %1836 = vmatpush1.bf16.msra.mxu0 %v1833
          %1837 = vmatprep.subr.bf16.mxu0 0
          %1838 = vmatpush1.bf16.msra.mxu0 0
          %1839 = vmatprep.subr.bf16.mxu0 0
          %1840 = vmatpush1.bf16.msra.mxu0 0
          %1841 = vmatprep.subr.bf16.mxu0 0
          %1842 = vmatpush1.bf16.msra.mxu0 0
          %1843 = vmatprep.subr.bf16.mxu0 0
          %1844 = vmatpush1.bf16.msra.mxu0 0
          %1845 = vmatprep.subr.bf16.mxu0 0
          %1846 = vmatpush1.bf16.msra.mxu0 0
          %1847 = vmatprep.subr.bf16.mxu0 0
          %1848 = vmatpush1.bf16.msra.mxu0 0
          %1849 = vmatprep.subr.bf16.mxu0 0
          %1850 = vmatpush1.bf16.msra.mxu0 0
          %1851 = vmatprep.subr.bf16.mxu0 0
          %1852 = vmatpush1.bf16.msra.mxu0 0
          %1853 = vmatprep.subr.bf16.mxu0 0
          %1854 = vmatpush1.bf16.msra.mxu0 0
          %1855 = vmatprep.subr.bf16.mxu0 0
          %1856 = vmatpush1.bf16.msra.mxu0 0
          %1857 = vmatprep.subr.bf16.mxu0 0
          %1858 = vmatpush1.bf16.msra.mxu0 0
          %1859 = vmatprep.subr.bf16.mxu0 0
          %1860 = vmatpush1.bf16.msra.mxu0 0
          %1861 = vmatprep.subr.bf16.mxu0 0
          %1862 = vmatpush1.bf16.msra.mxu0 0
          %1863 = vmatprep.subr.bf16.mxu0 0
          %1864 = vmatpush1.bf16.msra.mxu0 0
          %1865 = vmatprep.subr.bf16.mxu0 0
          %1866 = vmatpush1.bf16.msra.mxu0 0
          %1867 = vmatprep.mubr.bf16.mxu0 0
          %1868 = vmatmul.mubr.bf16.gmra.mrb[0].mxu0 %v1830
          %v1869 = vpop.f32.mrb[0].mxu0
          %v1870 = vadd.f32 0.0, %v1869
          %v1871 = vpop.f32.mrb[0].mxu0
          %v1872 = vpop.f32.mrb[0].mxu0
          %v1873 = vpop.f32.mrb[0].mxu0
          %1874 = vdwg.mxu0
          %v1876 = vsel %vm1403, %v1826, 0
          %v1879 = vsel %vm1643, %v595, 0
          %1881 = vmatprep.subr.bf16.mxu0 0
          %1882 = vmatpush1.bf16.msra.mxu0 %v1879
          %1883 = vmatprep.subr.bf16.mxu0 0
          %1884 = vmatpush1.bf16.msra.mxu0 0
          %1885 = vmatprep.subr.bf16.mxu0 0
          %1886 = vmatpush1.bf16.msra.mxu0 0
          %1887 = vmatprep.subr.bf16.mxu0 0
          %1888 = vmatpush1.bf16.msra.mxu0 0
          %1889 = vmatprep.subr.bf16.mxu0 0
          %1890 = vmatpush1.bf16.msra.mxu0 0
          %1891 = vmatprep.subr.bf16.mxu0 0
          %1892 = vmatpush1.bf16.msra.mxu0 0
          %1893 = vmatprep.subr.bf16.mxu0 0
          %1894 = vmatpush1.bf16.msra.mxu0 0
          %1895 = vmatprep.subr.bf16.mxu0 0
          %1896 = vmatpush1.bf16.msra.mxu0 0
          %1897 = vmatprep.subr.bf16.mxu0 0
          %1898 = vmatpush1.bf16.msra.mxu0 0
          %1899 = vmatprep.subr.bf16.mxu0 0
          %1900 = vmatpush1.bf16.msra.mxu0 0
          %1901 = vmatprep.subr.bf16.mxu0 0
          %1902 = vmatpush1.bf16.msra.mxu0 0
          %1903 = vmatprep.subr.bf16.mxu0 0
          %1904 = vmatpush1.bf16.msra.mxu0 0
          %1905 = vmatprep.subr.bf16.mxu0 0
          %1906 = vmatpush1.bf16.msra.mxu0 0
          %1907 = vmatprep.subr.bf16.mxu0 0
          %1908 = vmatpush1.bf16.msra.mxu0 0
          %1909 = vmatprep.subr.bf16.mxu0 0
          %1910 = vmatpush1.bf16.msra.mxu0 0
          %1911 = vmatprep.subr.bf16.mxu0 0
          %1912 = vmatpush1.bf16.msra.mxu0 0
          %1913 = vmatprep.mubr.bf16.mxu0 0
          %1914 = vmatmul.mubr.bf16.gmra.mrb[0].mxu0 %v1876
          %v1915 = vpop.f32.mrb[0].mxu0
          %v1916 = vadd.f32 0.0, %v1915
          %v1917 = vpop.f32.mrb[0].mxu0
          %v1918 = vpop.f32.mrb[0].mxu0
          %v1919 = vpop.f32.mrb[0].mxu0
          %1920 = vdwg.mxu0
          %v1922 = vsel %vm1403, %v1827, 0
          %v1925 = vsel %vm1643, %v596, 0
          %1927 = vmatprep.subr.bf16.mxu0 0
          %1928 = vmatpush1.bf16.msra.mxu0 %v1925
          %1929 = vmatprep.subr.bf16.mxu0 0
          %1930 = vmatpush1.bf16.msra.mxu0 0
          %1931 = vmatprep.subr.bf16.mxu0 0
          %1932 = vmatpush1.bf16.msra.mxu0 0
          %1933 = vmatprep.subr.bf16.mxu0 0
          %1934 = vmatpush1.bf16.msra.mxu0 0
          %1935 = vmatprep.subr.bf16.mxu0 0
          %1936 = vmatpush1.bf16.msra.mxu0 0
          %1937 = vmatprep.subr.bf16.mxu0 0
          %1938 = vmatpush1.bf16.msra.mxu0 0
          %1939 = vmatprep.subr.bf16.mxu0 0
          %1940 = vmatpush1.bf16.msra.mxu0 0
          %1941 = vmatprep.subr.bf16.mxu0 0
          %1942 = vmatpush1.bf16.msra.mxu0 0
          %1943 = vmatprep.subr.bf16.mxu0 0
          %1944 = vmatpush1.bf16.msra.mxu0 0
          %1945 = vmatprep.subr.bf16.mxu0 0
          %1946 = vmatpush1.bf16.msra.mxu0 0
          %1947 = vmatprep.subr.bf16.mxu0 0
          %1948 = vmatpush1.bf16.msra.mxu0 0
          %1949 = vmatprep.subr.bf16.mxu0 0
          %1950 = vmatpush1.bf16.msra.mxu0 0
          %1951 = vmatprep.subr.bf16.mxu0 0
          %1952 = vmatpush1.bf16.msra.mxu0 0
          %1953 = vmatprep.subr.bf16.mxu0 0
          %1954 = vmatpush1.bf16.msra.mxu0 0
          %1955 = vmatprep.subr.bf16.mxu0 0
          %1956 = vmatpush1.bf16.msra.mxu0 0
          %1957 = vmatprep.subr.bf16.mxu0 0
          %1958 = vmatpush1.bf16.msra.mxu0 0
          %1959 = vmatprep.mubr.bf16.mxu0 0
          %1960 = vmatmul.mubr.bf16.gmra.mrb[0].mxu0 %v1922
          %v1961 = vpop.f32.mrb[0].mxu0
          %v1962 = vadd.f32 0.0, %v1961
          %v1963 = vpop.f32.mrb[0].mxu0
          %v1964 = vpop.f32.mrb[0].mxu0
          %v1965 = vpop.f32.mrb[0].mxu0
          %1966 = vdwg.mxu0
          %v1968 = vsel %vm1403, %v1828, 0
          %v1971 = vsel %vm1643, %v597, 0
          %1973 = vmatprep.subr.bf16.mxu0 0
          %1974 = vmatpush1.bf16.msra.mxu0 %v1971
          %1975 = vmatprep.subr.bf16.mxu0 0
          %1976 = vmatpush1.bf16.msra.mxu0 0
          %1977 = vmatprep.subr.bf16.mxu0 0
          %1978 = vmatpush1.bf16.msra.mxu0 0
          %1979 = vmatprep.subr.bf16.mxu0 0
          %1980 = vmatpush1.bf16.msra.mxu0 0
          %1981 = vmatprep.subr.bf16.mxu0 0
          %1982 = vmatpush1.bf16.msra.mxu0 0
          %1983 = vmatprep.subr.bf16.mxu0 0
          %1984 = vmatpush1.bf16.msra.mxu0 0
          %1985 = vmatprep.subr.bf16.mxu0 0
          %1986 = vmatpush1.bf16.msra.mxu0 0
          %1987 = vmatprep.subr.bf16.mxu0 0
          %1988 = vmatpush1.bf16.msra.mxu0 0
          %1989 = vmatprep.subr.bf16.mxu0 0
          %1990 = vmatpush1.bf16.msra.mxu0 0
          %1991 = vmatprep.subr.bf16.mxu0 0
          %1992 = vmatpush1.bf16.msra.mxu0 0
          %1993 = vmatprep.subr.bf16.mxu0 0
          %1994 = vmatpush1.bf16.msra.mxu0 0
          %1995 = vmatprep.subr.bf16.mxu0 0
          %1996 = vmatpush1.bf16.msra.mxu0 0
          %1997 = vmatprep.subr.bf16.mxu0 0
          %1998 = vmatpush1.bf16.msra.mxu0 0
          %1999 = vmatprep.subr.bf16.mxu0 0
          %2000 = vmatpush1.bf16.msra.mxu0 0
          %2001 = vmatprep.subr.bf16.mxu0 0
          %2002 = vmatpush1.bf16.msra.mxu0 0
          %2003 = vmatprep.subr.bf16.mxu0 0
          %2004 = vmatpush1.bf16.msra.mxu0 0
          %2005 = vmatprep.mubr.bf16.mxu0 0
          %2006 = vmatmul.mubr.bf16.gmra.mrb[0].mxu0 %v1968
          %v2007 = vpop.f32.mrb[0].mxu0
          %v2008 = vadd.f32 0.0, %v2007
          %v2009 = vpop.f32.mrb[0].mxu0
          %v2010 = vpop.f32.mrb[0].mxu0
          %v2011 = vpop.f32.mrb[0].mxu0
          %2012 = vdwg.mxu0
          %v2013 = vsel %vm750, %v1870, 0.0
          %v2014 = vsel %vm750, %v1916, 0.0
          %v2015 = vadd.f32 %v2013, %v2014
          %v2016 = vsel %vm750, %v1962, 0.0
          %v2017 = vadd.f32 %v2015, %v2016
          %v2018 = vsel %vm750, %v2008, 0.0
          %v2019 = vadd.f32 %v2017, %v2018
          %v2020 = vadd.f32 %v2019, %v727
          %v2021 = vadd.f32 %v749, %v2020
          %v2022 = vsel %vm750, %v2021, 0.0
          %2023 = vadd.xlane.f32.xlu0 %v2022
          %v2024 = vpop.xlane.xlu0 %2023
          %v2025 = vmul.f32 %v2024, %v754
          %v2026 = vsub.f32 %v2021, %v2025
          %v2027 = vmul.f32 %v2026, %v2026
          %v2028 = vsel %vm750, %v2027, 0.0
          %2029 = vadd.xlane.f32.xlu0 %v2028
          %v2030 = vpop.xlane.xlu0 %2029
          %v2031 = vmul.f32 %v2030, %v754
          %v2032 = vadd.f32 %v2031, 1e-05
          %v2033 = vrsqrt.pop %v2032
          %v2034 = vmul.f32 %v2026, %v2033
          %v2035 = vmul.f32 %v2034, %v629
          %v2036 = vadd.f32 %v2035, %v636
          %v2037 = vpack.c.bf16 %v2036, %v2036
          %v2042 = vunpack.c.l.b16 %v598
          %v2043 = vunpack.c.l.b16 %v599
          %v2044 = vunpack.c.l.b16 %v600
          %v2045 = vunpack.c.l.b16 %v601
          %v2046 = vpack.c.b16 %v2043, %v2042
          %v2047 = vpack.c.b16 %v2045, %v2044
          %v2051 = vsel %vm750, %v2037, 0
          %2053 = vmatprep.subr.bf16.mxu0 0
          %2054 = vmatpush1.bf16.msra.mxu0 %v2046
          %2055 = vmatprep.subr.bf16.mxu0 0
          %2056 = vmatpush1.bf16.msra.mxu0 %v2047
          %2057 = vmatprep.subr.bf16.mxu0 0
          %2058 = vmatpush1.bf16.msra.mxu0 0
          %2059 = vmatprep.subr.bf16.mxu0 0
          %2060 = vmatpush1.bf16.msra.mxu0 0
          %2061 = vmatprep.subr.bf16.mxu0 0
          %2062 = vmatpush1.bf16.msra.mxu0 0
          %2063 = vmatprep.subr.bf16.mxu0 0
          %2064 = vmatpush1.bf16.msra.mxu0 0
          %2065 = vmatprep.subr.bf16.mxu0 0
          %2066 = vmatpush1.bf16.msra.mxu0 0
          %2067 = vmatprep.subr.bf16.mxu0 0
          %2068 = vmatpush1.bf16.msra.mxu0 0
          %2069 = vmatprep.subr.bf16.mxu0 0
          %2070 = vmatpush1.bf16.msra.mxu0 0
          %2071 = vmatprep.subr.bf16.mxu0 0
          %2072 = vmatpush1.bf16.msra.mxu0 0
          %2073 = vmatprep.subr.bf16.mxu0 0
          %2074 = vmatpush1.bf16.msra.mxu0 0
          %2075 = vmatprep.subr.bf16.mxu0 0
          %2076 = vmatpush1.bf16.msra.mxu0 0
          %2077 = vmatprep.subr.bf16.mxu0 0
          %2078 = vmatpush1.bf16.msra.mxu0 0
          %2079 = vmatprep.subr.bf16.mxu0 0
          %2080 = vmatpush1.bf16.msra.mxu0 0
          %2081 = vmatprep.subr.bf16.mxu0 0
          %2082 = vmatpush1.bf16.msra.mxu0 0
          %2083 = vmatprep.subr.bf16.mxu0 0
          %2084 = vmatpush1.bf16.msra.mxu0 0
          %2085 = vmatprep.mubr.bf16.mxu0 0
          %2086 = vmatmul.mubr.bf16.gmra.mrb[0].mxu0 %v2051
          %v2087 = vpop.f32.mrb[0].mxu0
          %v2088 = vadd.f32 %v734, %v2087
          %v2089 = vpop.f32.mrb[0].mxu0
          %v2090 = vpop.f32.mrb[0].mxu0
          %v2091 = vpop.f32.mrb[0].mxu0
          %2092 = vdwg.mxu0
          %v2093 = vmax.f32 %v2088, 0.0
          %v2094 = vpack.c.bf16 %v2093, %v2093
          %v2103 = vunpack.c.l.b16 %v602
          %v2104 = vunpack.c.l.b16 %v603
          %v2105 = vunpack.c.l.b16 %v604
          %v2106 = vunpack.c.l.b16 %v605
          %v2107 = vunpack.c.l.b16 %v606
          %v2108 = vunpack.c.l.b16 %v607
          %v2109 = vunpack.c.l.b16 %v608
          %v2110 = vunpack.c.l.b16 %v609
          %v2111 = vpack.c.b16 %v2104, %v2103
          %v2112 = vpack.c.b16 %v2106, %v2105
          %v2113 = vpack.c.b16 %v2108, %v2107
          %v2114 = vpack.c.b16 %v2110, %v2109
          %vm2119 = vcmask 523264
          %v2121 = vsel %vm2119, %v2094, 0
          %2123 = vmatprep.subr.bf16.mxu0 0
          %2124 = vmatpush1.bf16.msra.mxu0 %v2111
          %2125 = vmatprep.subr.bf16.mxu0 0
          %2126 = vmatpush1.bf16.msra.mxu0 %v2112
          %2127 = vmatprep.subr.bf16.mxu0 0
          %2128 = vmatpush1.bf16.msra.mxu0 %v2113
          %2129 = vmatprep.subr.bf16.mxu0 0
          %2130 = vmatpush1.bf16.msra.mxu0 %v2114
          %2131 = vmatprep.subr.bf16.mxu0 0
          %2132 = vmatpush1.bf16.msra.mxu0 0
          %2133 = vmatprep.subr.bf16.mxu0 0
          %2134 = vmatpush1.bf16.msra.mxu0 0
          %2135 = vmatprep.subr.bf16.mxu0 0
          %2136 = vmatpush1.bf16.msra.mxu0 0
          %2137 = vmatprep.subr.bf16.mxu0 0
          %2138 = vmatpush1.bf16.msra.mxu0 0
          %2139 = vmatprep.subr.bf16.mxu0 0
          %2140 = vmatpush1.bf16.msra.mxu0 0
          %2141 = vmatprep.subr.bf16.mxu0 0
          %2142 = vmatpush1.bf16.msra.mxu0 0
          %2143 = vmatprep.subr.bf16.mxu0 0
          %2144 = vmatpush1.bf16.msra.mxu0 0
          %2145 = vmatprep.subr.bf16.mxu0 0
          %2146 = vmatpush1.bf16.msra.mxu0 0
          %2147 = vmatprep.subr.bf16.mxu0 0
          %2148 = vmatpush1.bf16.msra.mxu0 0
          %2149 = vmatprep.subr.bf16.mxu0 0
          %2150 = vmatpush1.bf16.msra.mxu0 0
          %2151 = vmatprep.subr.bf16.mxu0 0
          %2152 = vmatpush1.bf16.msra.mxu0 0
          %2153 = vmatprep.subr.bf16.mxu0 0
          %2154 = vmatpush1.bf16.msra.mxu0 0
          %2155 = vmatprep.mubr.bf16.mxu0 0
          %2156 = vmatmul.mubr.bf16.gmra.mrb[0].mxu0 %v2121
          %v2157 = vpop.f32.mrb[0].mxu0
          %v2158 = vadd.f32 %v741, %v2157
          %v2159 = vpop.f32.mrb[0].mxu0
          %v2160 = vpop.f32.mrb[0].mxu0
          %v2161 = vpop.f32.mrb[0].mxu0
          %2162 = vdwg.mxu0
          %v2163 = vadd.f32 %v2021, %v2158
        $region93: #{tpu_custom_call.1} parent=87 // loop_footer
          %s748 = sadd.s32 1, %s744
        $region94: #{tpu_custom_call.1} parent=87 // loop_footer_branch
          %743 = sbr.rel target = $region90
        $region95: #{tpu_custom_call.1} parent=87 // loop_exit
          _
        %v2164 = vpack.c.bf16 %v749, %v749
        %vm2165 = vcmask 257024
        %2166 = vst.msk [vmem:[%s539] sm:$0xf] %vm2165, %v2164
        %s2167 = sand.u32 %s401, 1
        %s2168 = scalar_lea.sflag [#allocation3], %s2167
        %s2169 = sand.u32 %s401, 1
        %s2170 = smul.addr %s2169, 4
        %s2171 = scalar_lea.vmem [#allocation2], %s2170
        // Predicated region
        $region96: #{tpu_custom_call.1} parent=87 // pred_check
          %p2172 = pneg %p411
        $region97: #{tpu_custom_call.1} parent=87 // pred_check_branch
          %2174 = sbr.rel (%p2172) target = $region99
        $region98: #{tpu_custom_call.1} parent=87 // pred_region
          %s2176 = ssub.s32 64, 64
          %2177 = vsyncadd %s2168, %s2176
          %s2178 = smul.addr %s31, 64
          %s2179 = scalar_lea.hbm %s17, %s2178
          %s2181 = sshll.u32 %s2171, 4
          %s2182 = int_to_ptr.vmem [resolvable:$true] %s2181
          %2184 = dma.vmem_to_hbm [thread:$0]  %s2182, 64, %s2179, %s2168
        $region99: #{tpu_custom_call.1} parent=87 // pred_fallthru
          _
      $region88: #{tpu_custom_call.1} parent=5 // pred_fallthru
        _
      %p2185 = scmp.le.s32.totalorder 2, %s26
      // Predicated region
      $region100: #{tpu_custom_call.1} parent=5 // pred_check
        %p2186 = pneg %p2185
      $region101: #{tpu_custom_call.1} parent=5 // pred_check_branch
        %2188 = sbr.rel (%p2186) target = $region103
      $region102: #{tpu_custom_call.1} parent=5 // pred_region
        %s2189 = ssub.s32 %s26, 2
        // Predicated region
        $region104: #{tpu_custom_call.1} parent=102 // pred_check
          %p2190 = pneg %p417
        $region105: #{tpu_custom_call.1} parent=102 // pred_check_branch
          %2192 = sbr.rel (%p2190) target = $region107
        $region106: #{tpu_custom_call.1} parent=102 // pred_region
          %s2193 = sand.u32 %s402, 1
          %s2194 = scalar_lea.sflag [#allocation3], %s2193
          %s2195 = sand.u32 %s402, 1
          %s2196 = smul.addr %s2195, 4
          %s2197 = scalar_lea.vmem [#allocation2], %s2196
          %2198 = dma.done %s2194, 64
        $region107: #{tpu_custom_call.1} parent=102 // pred_fallthru
          _
      $region103: #{tpu_custom_call.1} parent=5 // pred_fallthru
        _
    $region6: #{tpu_custom_call.1} parent=1 // loop_footer
      %s30 = sadd.s32 1, %s26
    $region7: #{tpu_custom_call.1} parent=1 // loop_footer_branch
      %25 = sbr.rel target = $region3
    $region8: #{tpu_custom_call.1} parent=1 // loop_exit
      _
    %2199 = vsyncpa [#allocation3], 1
    %s2200 = scalar_lea.sflag [#allocation3], 1
    %2201 = vsyncpa %s2200, 1

</llo_original>
